<compile_context>
chip_gen: v6e
topology: v6e:2x2x1
jax: 0.10.0
libtpu: 0.0.40
codegen_flags: <defaults>
</compile_context>

<pallas_src>
import functools

import jax
import jax.numpy as jnp
import numpy as np
from jax.experimental import pallas as pl
from jax.experimental.pallas import tpu as pltpu


def _round_up(a: int, m: int) -> int:
    return ((a + m - 1) // m) * m


def _bilstm_kernel(xf_ref, xb_ref, wihf_ref, whhf_ref, bf_ref,
                   wihb_ref, whhb_ref, bb_ref,
                   outf_ref, outb_ref,
                   gxf_ref, gxb_ref, h_ref, c_ref,
                   *, TC, Bp, Hp, N, T):
    n = pl.program_id(0)

    # Reset the recurrent state at the start of the sweep (both directions start at n==0:
    # forward at t=0, backward at t=Tp-1).
    @pl.when(n == 0)
    def _():
        h_ref[...] = jnp.zeros_like(h_ref)
        c_ref[...] = jnp.zeros_like(c_ref)

    # ---- Phase 1: one flattened GEMM per direction for the whole chunk ---------------
    # x blocks arrive time-major and pre-flattened: (TC*Bp, D).
    xf = xf_ref[...].astype(jnp.bfloat16)
    xb = xb_ref[...].astype(jnp.bfloat16)
    gxf_ref[...] = jnp.dot(xf, wihf_ref[...], preferred_element_type=jnp.float32) + bf_ref[...]
    gxb_ref[...] = jnp.dot(xb, wihb_ref[...], preferred_element_type=jnp.float32) + bb_ref[...]

    # ---- Phase 2: serial recurrence, both directions interleaved per timestep --------
    # TODO-perf (v7x): hold whh resident in the MXU via pltpu.matmul_push_rhs once per
    # chunk + pltpu.matmul_acc_lhs per step instead of re-pushing RHS every timestep.
    whhf = whhf_ref[...]                       # (Hp, 4Hp) bf16
    whhb = whhb_ref[...]
    h_f = h_ref[0]
    c_f = c_ref[0]
    h_b = h_ref[1]
    c_b = c_ref[1]

    needs_mask = (N * TC) > T                  # static: only emit masking if T was padded

    def cell(gates, c_prev):
        i_g = jax.nn.sigmoid(gates[:, 0 * Hp:1 * Hp])
        f_g = jax.nn.sigmoid(gates[:, 1 * Hp:2 * Hp])
        g_g = jnp.tanh(gates[:, 2 * Hp:3 * Hp])
        o_g = jax.nn.sigmoid(gates[:, 3 * Hp:4 * Hp])
        c_new = f_g * c_prev + i_g * g_g
        h_new = o_g * jnp.tanh(c_new)
        return h_new, c_new

    for i in range(TC):                        # static unroll over the (bounded) chunk
        j = TC - 1 - i                         # backward's in-chunk timestep

        # forward cell
        g_f = gxf_ref[pl.ds(i * Bp, Bp), :] + jnp.dot(
            h_f.astype(jnp.bfloat16), whhf, preferred_element_type=jnp.float32)
        hf_new, cf_new = cell(g_f, c_f)

        # backward cell (independent chain; compiler interleaves the two)
        g_b = gxb_ref[pl.ds(j * Bp, Bp), :] + jnp.dot(
            h_b.astype(jnp.bfloat16), whhb, preferred_element_type=jnp.float32)
        hb_new, cb_new = cell(g_b, c_b)

        if needs_mask:
            t_f = n * TC + i                   # absolute forward timestep
            t_b = (N - 1 - n) * TC + j         # absolute backward timestep
            m_f = (t_f < T).astype(jnp.float32)
            m_b = (t_b < T).astype(jnp.float32)
            h_f = m_f * hf_new + (1.0 - m_f) * h_f
            c_f = m_f * cf_new + (1.0 - m_f) * c_f
            h_b = m_b * hb_new + (1.0 - m_b) * h_b
            c_b = m_b * cb_new + (1.0 - m_b) * c_b
        else:
            h_f, c_f = hf_new, cf_new
            h_b, c_b = hb_new, cb_new

        # Lane-dense, sublane-aligned stores: one (Bp=8, Hp=128k) slab per step.
        outf_ref[pl.ds(i * Bp, Bp), :] = h_f
        outb_ref[pl.ds(j * Bp, Bp), :] = h_b

    h_ref[0] = h_f
    c_ref[0] = c_f
    h_ref[1] = h_b
    c_ref[1] = c_b


def _pad_gate_param(p, H, Hp):
    """PyTorch gate-stacked param with leading dim 4H -> 4Hp, each gate block at g*Hp."""
    out = jnp.zeros((4 * Hp,) + p.shape[1:], p.dtype)
    for g in range(4):
        out = out.at[g * Hp: g * Hp + H].set(p[g * H:(g + 1) * H])
    return out


@jax.jit
def bilstm_forward(x, w_ih_f, w_hh_f, b_ih_f, b_hh_f, w_ih_b, w_hh_b, b_ih_b, b_hh_b):
    """x: (B, T, D) f32. Weights in PyTorch nn.LSTM layout: w_ih (4H, D), w_hh (4H, H), b (4H,)."""
    B, T, D = x.shape
    H = w_hh_f.shape[1]

    Bp = _round_up(B, 8)                # sublane multiple
    Hp = _round_up(H, 128)              # lane multiple -> lane-dense gates/stores
    TC = min(32, _round_up(T, 8))       # chunk of timesteps per grid step
    Tp = _round_up(T, TC)
    N = Tp // TC

    f32, bf16 = jnp.float32, jnp.bfloat16

    def prep(w_ih, w_hh, b_ih, b_hh):
        wih = _pad_gate_param(w_ih.astype(f32), H, Hp)                 # (4Hp, D)
        whh = _pad_gate_param(w_hh.astype(f32), H, Hp)                 # (4Hp, H)
        whh = jnp.pad(whh, ((0, 0), (0, Hp - H)))                      # (4Hp, Hp)
        bias = _pad_gate_param((b_ih + b_hh).astype(f32), H, Hp)       # (4Hp,)
        # bf16 weight storage (halves VMEM/DMA, MXU-native); bias kept f32.
        return wih.T.astype(bf16), whh.T.astype(bf16), bias.reshape(1, 4 * Hp)

    wih_f, whh_f, bias_f = prep(w_ih_f, w_hh_f, b_ih_f, b_hh_f)
    wih_b, whh_b, bias_b = prep(w_ih_b, w_hh_b, b_ih_b, b_hh_b)

    # Time-major, batch/time zero-padded, flattened rows ordered (t, b).
    x_tm = jnp.transpose(x.astype(f32), (1, 0, 2))                     # (T, B, D)
    x_tm = jnp.pad(x_tm, ((0, Tp - T), (0, Bp - B), (0, 0)))           # (Tp, Bp, D)
    x2d = x_tm.reshape(Tp * Bp, D)

    rows = TC * Bp
    kernel = functools.partial(_bilstm_kernel, TC=TC, Bp=Bp, Hp=Hp, N=N, T=T)

    def blk_f(n):  # forward walks chunks 0..N-1
        return (n, 0)

    def blk_b(n):  # backward walks chunks N-1..0
        return (N - 1 - n, 0)

    # VMEM budget from actual buffer footprint (pipeline buffers double-buffered).
    def nbytes(shape, dt):
        return int(np.prod(shape)) * jnp.dtype(dt).itemsize

    vmem = (
        2 * 2 * nbytes((rows, D), f32)                                       # x blocks (x passed twice)
        + 2 * 2 * (nbytes((D, 4 * Hp), bf16) + nbytes((Hp, 4 * Hp), bf16)
                   + nbytes((1, 4 * Hp), f32))                               # weights/bias, both dirs
        + 2 * 2 * nbytes((rows, Hp), f32)                                    # output blocks
        + 2 * nbytes((rows, 4 * Hp), f32)                                    # gx scratch
        + 2 * nbytes((2, Bp, Hp), f32)                                       # h/c state
    )
    vmem_limit = int(min(56 * 1024 * 1024, max(2 * vmem, 4 * 1024 * 1024)))

    cost = pl.CostEstimate(
        flops=2 * 2 * Tp * Bp * 4 * Hp * (D + Hp),                           # both dirs, MAC*2
        transcendentals=2 * Tp * Bp * 5 * Hp,                                # 3 sigmoid + 2 tanh / cell
        bytes_accessed=4 * (2 * Tp * Bp * D + 2 * Tp * Bp * Hp)
        + 2 * 2 * (D * 4 * Hp + Hp * 4 * Hp) + 2 * 4 * 4 * Hp,
    )

    out_f, out_b = pl.pallas_call(
        kernel,
        out_shape=(jax.ShapeDtypeStruct((Tp * Bp, Hp), f32),
                   jax.ShapeDtypeStruct((Tp * Bp, Hp), f32)),
        grid_spec=pltpu.PrefetchScalarGridSpec(
            num_scalar_prefetch=0,
            grid=(N,),
            in_specs=[
                pl.BlockSpec((rows, D), blk_f),          # x chunk, forward time order
                pl.BlockSpec((rows, D), blk_b),          # x chunk, backward time order
                # Weights/bias are grid-invariant.
                # TODO-perf (v7x): add pipeline_mode=pl.Buffered(1) on these specs so the
                # (Hp,4Hp) weights are not double-buffered in the 64 MiB/TC VMEM.
                pl.BlockSpec((D, 4 * Hp), lambda n: (0, 0)),
                pl.BlockSpec((Hp, 4 * Hp), lambda n: (0, 0)),
                pl.BlockSpec((1, 4 * Hp), lambda n: (0, 0)),
                pl.BlockSpec((D, 4 * Hp), lambda n: (0, 0)),
                pl.BlockSpec((Hp, 4 * Hp), lambda n: (0, 0)),
                pl.BlockSpec((1, 4 * Hp), lambda n: (0, 0)),
            ],
            out_specs=(pl.BlockSpec((rows, Hp), blk_f),
                       pl.BlockSpec((rows, Hp), blk_b)),
            scratch_shapes=[
                pltpu.VMEM((rows, 4 * Hp), jnp.float32),  # gx fwd: contiguous (Bp,4Hp) per step
                pltpu.VMEM((rows, 4 * Hp), jnp.float32),  # gx bwd
                pltpu.VMEM((2, Bp, Hp), jnp.float32),     # h state (dir, B, H)
                pltpu.VMEM((2, Bp, Hp), jnp.float32),     # c state
            ],
        ),
        compiler_params=pltpu.CompilerParams(
            dimension_semantics=("arbitrary",),           # recurrent state carried across chunks
            vmem_limit_bytes=vmem_limit,
        ),
        cost_estimate=cost,
    )(x2d, x2d, wih_f, whh_f, bias_f, wih_b, whh_b, bias_b)

    # Strip padding and assemble PyTorch's (B, T, 2H) output (forward features first).
    out_f = out_f.reshape(Tp, Bp, Hp)[:T, :B, :H]
    out_b = out_b.reshape(Tp, Bp, Hp)[:T, :B, :H]
    return jnp.transpose(jnp.concatenate([out_f, out_b], axis=-1), (1, 0, 2))


# ------------------------------ pure-JAX f32 reference --------------------------------
def _lstm_ref_dir(x_tm, w_ih, w_hh, b_ih, b_hh, reverse):
    H = w_hh.shape[1]
    B = x_tm.shape[1]
    wih, whh = w_ih.T, w_hh.T
    b = (b_ih + b_hh)[None, :]
    xs = x_tm[::-1] if reverse else x_tm

    def step(carry, x_t):
        h, c = carry
        gates = x_t @ wih + h @ whh + b
        i = jax.nn.sigmoid(gates[:, 0 * H:1 * H])
        f = jax.nn.sigmoid(gates[:, 1 * H:2 * H])
        g = jnp.tanh(gates[:, 2 * H:3 * H])
        o = jax.nn.sigmoid(gates[:, 3 * H:4 * H])
        c = f * c + i * g
        h = o * jnp.tanh(c)
        return (h, c), h

    init = (jnp.zeros((B, H), jnp.float32), jnp.zeros((B, H), jnp.float32))
    _, hs = jax.lax.scan(step, init, xs)
    return hs[::-1] if reverse else hs


def bilstm_reference(x, w_ih_f, w_hh_f, b_ih_f, b_hh_f, w_ih_b, w_hh_b, b_ih_b, b_hh_b):
    x_tm = jnp.transpose(x, (1, 0, 2))
    out_f = _lstm_ref_dir(x_tm, w_ih_f, w_hh_f, b_ih_f, b_hh_f, False)
    out_b = _lstm_ref_dir(x_tm, w_ih_b, w_hh_b, b_ih_b, b_hh_b, True)
    return jnp.transpose(jnp.concatenate([out_f, out_b], axis=-1), (1, 0, 2))


if __name__ == "__main__":
    # Small shapes: batch=2, seq=8, input_features=16, recurrent_features=32.
    B, T, D, H = 2, 8, 16, 32

    key = jax.random.PRNGKey(0)
    keys = jax.random.split(key, 9)
    bound = 1.0 / np.sqrt(H)  # PyTorch nn.LSTM init range (deterministic synthetic init)

    def u(k, shape):
        return jax.random.uniform(k, shape, jnp.float32, -bound, bound)

    # PyTorch parameter shapes: weight_ih (4H, D), weight_hh (4H, H), biases (4H,).
    w_ih_f = u(keys[0], (4 * H, D))
    w_hh_f = u(keys[1], (4 * H, H))
    b_ih_f = u(keys[2], (4 * H,))
    b_hh_f = u(keys[3], (4 * H,))
    w_ih_b = u(keys[4], (4 * H, D))
    w_hh_b = u(keys[5], (4 * H, H))
    b_ih_b = u(keys[6], (4 * H,))
    b_hh_b = u(keys[7], (4 * H,))

    x = jax.random.normal(keys[8], (B, T, D), jnp.float32)

    out = bilstm_forward(x, w_ih_f, w_hh_f, b_ih_f, b_hh_f,
                         w_ih_b, w_hh_b, b_ih_b, b_hh_b)
    out = jax.block_until_ready(out)

    ref = bilstm_reference(x, w_ih_f, w_hh_f, b_ih_f, b_hh_f,
                           w_ih_b, w_hh_b, b_ih_b, b_hh_b)
    assert out.shape == (B, T, 2 * H), out.shape
    # bf16 matmul operands with f32 accumulation -> loosened tolerance vs the f32 reference.
    np.testing.assert_allclose(np.asarray(out), np.asarray(ref), atol=2e-2, rtol=2e-2)

    print("KERNEL_OK")
</pallas_src>

<mosaic_0001>
module attributes {stable_mosaic.version = 11 : i64} {
  func.func @_bilstm_kernel(%arg0: i32, %arg1: memref<64x16xf32, #tpu.memory_space<vmem>>, %arg2: memref<64x16xf32, #tpu.memory_space<vmem>>, %arg3: memref<16x512xbf16, #tpu.memory_space<vmem>>, %arg4: memref<128x512xbf16, #tpu.memory_space<vmem>>, %arg5: memref<1x512xf32, #tpu.memory_space<vmem>>, %arg6: memref<16x512xbf16, #tpu.memory_space<vmem>>, %arg7: memref<128x512xbf16, #tpu.memory_space<vmem>>, %arg8: memref<1x512xf32, #tpu.memory_space<vmem>>, %arg9: memref<64x128xf32, #tpu.memory_space<vmem>>, %arg10: memref<64x128xf32, #tpu.memory_space<vmem>>, %arg11: memref<64x512xf32, #tpu.memory_space<vmem>>, %arg12: memref<64x512xf32, #tpu.memory_space<vmem>>, %arg13: memref<2x8x128xf32, #tpu.memory_space<vmem>>, %arg14: memref<2x8x128xf32, #tpu.memory_space<vmem>>) attributes {dimension_semantics = [#tpu.dimension_semantics<arbitrary>], iteration_bounds = array<i64: 1>, scalar_prefetch = 0 : i64, scratch_operands = 4 : i64, tpu.core_type = #tpu.core_type<tc>, window_params = [{transform_indices = @transform_0, window_bounds = array<i64: 64, 16>}, {transform_indices = @transform_1, window_bounds = array<i64: 64, 16>}, {pipeline_mode = #tpu.pipeline_mode<synchronous>, transform_indices = @transform_2, window_bounds = array<i64: 16, 512>}, {pipeline_mode = #tpu.pipeline_mode<synchronous>, transform_indices = @transform_3, window_bounds = array<i64: 128, 512>}, {pipeline_mode = #tpu.pipeline_mode<synchronous>, transform_indices = @transform_4, window_bounds = array<i64: 1, 512>}, {pipeline_mode = #tpu.pipeline_mode<synchronous>, transform_indices = @transform_5, window_bounds = array<i64: 16, 512>}, {pipeline_mode = #tpu.pipeline_mode<synchronous>, transform_indices = @transform_6, window_bounds = array<i64: 128, 512>}, {pipeline_mode = #tpu.pipeline_mode<synchronous>, transform_indices = @transform_7, window_bounds = array<i64: 1, 512>}, {transform_indices = @transform_8, window_bounds = array<i64: 64, 128>}, {transform_indices = @transform_9, window_bounds = array<i64: 64, 128>}]} {
    %c0_i32 = arith.constant 0 : i32
    %0 = arith.cmpi eq, %arg0, %c0_i32 : i32
    %1 = arith.extui %0 : i1 to i32
    %c0_i32_0 = arith.constant 0 : i32
    %2 = arith.cmpi ne, %1, %c0_i32_0 : i32
    scf.if %2 {
      %cst_165 = arith.constant 0.000000e+00 : f32
      %521 = vector.broadcast %cst_165 : f32 to vector<2x8x128xf32>
      %c0_166 = arith.constant 0 : index
      %c0_167 = arith.constant 0 : index
      %c0_168 = arith.constant 0 : index
      %522 = vector.load %arg13[%c0_166, %c0_167, %c0_168] : memref<2x8x128xf32, #tpu.memory_space<vmem>>, vector<2x8x128xf32>
      tpu.vector_store %arg13[%c0_166, %c0_167, %c0_168], %521 {strides = array<i32>} : memref<2x8x128xf32, #tpu.memory_space<vmem>>, vector<2x8x128xf32>,
      %cst_169 = arith.constant 0.000000e+00 : f32
      %523 = vector.broadcast %cst_169 : f32 to vector<2x8x128xf32>
      %c0_170 = arith.constant 0 : index
      %c0_171 = arith.constant 0 : index
      %c0_172 = arith.constant 0 : index
      %524 = vector.load %arg14[%c0_170, %c0_171, %c0_172] : memref<2x8x128xf32, #tpu.memory_space<vmem>>, vector<2x8x128xf32>
      tpu.vector_store %arg14[%c0_170, %c0_171, %c0_172], %523 {strides = array<i32>} : memref<2x8x128xf32, #tpu.memory_space<vmem>>, vector<2x8x128xf32>,
    } else {
    }
    %c0 = arith.constant 0 : index
    %c0_1 = arith.constant 0 : index
    %3 = vector.load %arg1[%c0, %c0_1] : memref<64x16xf32, #tpu.memory_space<vmem>>, vector<64x16xf32>
    %4 = arith.truncf %3 : vector<64x16xf32> to vector<64x16xbf16>
    %c0_2 = arith.constant 0 : index
    %c0_3 = arith.constant 0 : index
    %5 = vector.load %arg2[%c0_2, %c0_3] : memref<64x16xf32, #tpu.memory_space<vmem>>, vector<64x16xf32>
    %6 = arith.truncf %5 : vector<64x16xf32> to vector<64x16xbf16>
    %c0_4 = arith.constant 0 : index
    %c0_5 = arith.constant 0 : index
    %7 = vector.load %arg3[%c0_4, %c0_5] : memref<16x512xbf16, #tpu.memory_space<vmem>>, vector<16x512xbf16>
    %cst = arith.constant dense<0.000000e+00> : vector<64x512xf32>
    %8 = tpu.matmul %4, %7, %cst {dimension_numbers = #tpu.dot_dimension_numbers<[1], [0], [0], [1], [0, 0, 1, 1], [], []>} : vector<64x16xbf16>, vector<16x512xbf16>, vector<64x512xf32> -> vector<64x512xf32>
    %c0_6 = arith.constant 0 : index
    %c0_7 = arith.constant 0 : index
    %9 = vector.load %arg5[%c0_6, %c0_7] : memref<1x512xf32, #tpu.memory_space<vmem>>, vector<1x512xf32>
    %10 = vector.broadcast %9 : vector<1x512xf32> to vector<64x512xf32>
    %11 = arith.addf %8, %10 : vector<64x512xf32>
    %c0_8 = arith.constant 0 : index
    %c0_9 = arith.constant 0 : index
    %12 = vector.load %arg11[%c0_8, %c0_9] : memref<64x512xf32, #tpu.memory_space<vmem>>, vector<64x512xf32>
    tpu.vector_store %arg11[%c0_8, %c0_9], %11 {strides = array<i32>} : memref<64x512xf32, #tpu.memory_space<vmem>>, vector<64x512xf32>,
    %c0_10 = arith.constant 0 : index
    %c0_11 = arith.constant 0 : index
    %13 = vector.load %arg6[%c0_10, %c0_11] : memref<16x512xbf16, #tpu.memory_space<vmem>>, vector<16x512xbf16>
    %cst_12 = arith.constant dense<0.000000e+00> : vector<64x512xf32>
    %14 = tpu.matmul %6, %13, %cst_12 {dimension_numbers = #tpu.dot_dimension_numbers<[1], [0], [0], [1], [0, 0, 1, 1], [], []>} : vector<64x16xbf16>, vector<16x512xbf16>, vector<64x512xf32> -> vector<64x512xf32>
    %c0_13 = arith.constant 0 : index
    %c0_14 = arith.constant 0 : index
    %15 = vector.load %arg8[%c0_13, %c0_14] : memref<1x512xf32, #tpu.memory_space<vmem>>, vector<1x512xf32>
    %16 = vector.broadcast %15 : vector<1x512xf32> to vector<64x512xf32>
    %17 = arith.addf %14, %16 : vector<64x512xf32>
    %c0_15 = arith.constant 0 : index
    %c0_16 = arith.constant 0 : index
    %18 = vector.load %arg12[%c0_15, %c0_16] : memref<64x512xf32, #tpu.memory_space<vmem>>, vector<64x512xf32>
    tpu.vector_store %arg12[%c0_15, %c0_16], %17 {strides = array<i32>} : memref<64x512xf32, #tpu.memory_space<vmem>>, vector<64x512xf32>,
    %c0_17 = arith.constant 0 : index
    %c0_18 = arith.constant 0 : index
    %19 = vector.load %arg4[%c0_17, %c0_18] : memref<128x512xbf16, #tpu.memory_space<vmem>>, vector<128x512xbf16>
    %c0_19 = arith.constant 0 : index
    %c0_20 = arith.constant 0 : index
    %20 = vector.load %arg7[%c0_19, %c0_20] : memref<128x512xbf16, #tpu.memory_space<vmem>>, vector<128x512xbf16>
    %c0_21 = arith.constant 0 : index
    %c0_22 = arith.constant 0 : index
    %c0_23 = arith.constant 0 : index
    %21 = vector.load %arg13[%c0_21, %c0_22, %c0_23] : memref<2x8x128xf32, #tpu.memory_space<vmem>>, vector<1x8x128xf32>
    %22 = vector.shape_cast %21 : vector<1x8x128xf32> to vector<8x128xf32>
    %c0_24 = arith.constant 0 : index
    %c0_25 = arith.constant 0 : index
    %c0_26 = arith.constant 0 : index
    %23 = vector.load %arg14[%c0_24, %c0_25, %c0_26] : memref<2x8x128xf32, #tpu.memory_space<vmem>>, vector<1x8x128xf32>
    %24 = vector.shape_cast %23 : vector<1x8x128xf32> to vector<8x128xf32>
    %c1 = arith.constant 1 : index
    %c0_27 = arith.constant 0 : index
    %c0_28 = arith.constant 0 : index
    %25 = vector.load %arg13[%c1, %c0_27, %c0_28] : memref<2x8x128xf32, #tpu.memory_space<vmem>>, vector<1x8x128xf32>
    %26 = vector.shape_cast %25 : vector<1x8x128xf32> to vector<8x128xf32>
    %c1_29 = arith.constant 1 : index
    %c0_30 = arith.constant 0 : index
    %c0_31 = arith.constant 0 : index
    %27 = vector.load %arg14[%c1_29, %c0_30, %c0_31] : memref<2x8x128xf32, #tpu.memory_space<vmem>>, vector<1x8x128xf32>
    %28 = vector.shape_cast %27 : vector<1x8x128xf32> to vector<8x128xf32>
    %c0_32 = arith.constant 0 : index
    %c0_33 = arith.constant 0 : index
    %29 = vector.load %arg11[%c0_32, %c0_33] : memref<64x512xf32, #tpu.memory_space<vmem>>, vector<8x512xf32>
    %30 = arith.truncf %22 : vector<8x128xf32> to vector<8x128xbf16>
    %cst_34 = arith.constant dense<0.000000e+00> : vector<8x512xf32>
    %31 = tpu.matmul %30, %19, %cst_34 {dimension_numbers = #tpu.dot_dimension_numbers<[1], [0], [0], [1], [0, 0, 1, 1], [], []>} : vector<8x128xbf16>, vector<128x512xbf16>, vector<8x512xf32> -> vector<8x512xf32>
    %32 = arith.addf %29, %31 : vector<8x512xf32>
    %33 = vector.extract_strided_slice %32 {offsets = [0, 0], sizes = [8, 128], strides = [1, 1]} : vector<8x512xf32> to vector<8x128xf32>
    %34 = arith.negf %33 : vector<8x128xf32>
    %35 = math.exp %34 : vector<8x128xf32>
    %cst_35 = arith.constant 1.000000e+00 : f32
    %36 = vector.broadcast %cst_35 : f32 to vector<8x128xf32>
    %37 = arith.addf %36, %35 : vector<8x128xf32>
    %38 = arith.divf %36, %37 : vector<8x128xf32>
    %39 = vector.extract_strided_slice %32 {offsets = [0, 128], sizes = [8, 128], strides = [1, 1]} : vector<8x512xf32> to vector<8x128xf32>
    %40 = arith.negf %39 : vector<8x128xf32>
    %41 = math.exp %40 : vector<8x128xf32>
    %cst_36 = arith.constant 1.000000e+00 : f32
    %42 = vector.broadcast %cst_36 : f32 to vector<8x128xf32>
    %43 = arith.addf %42, %41 : vector<8x128xf32>
    %44 = arith.divf %42, %43 : vector<8x128xf32>
    %45 = vector.extract_strided_slice %32 {offsets = [0, 256], sizes = [8, 128], strides = [1, 1]} : vector<8x512xf32> to vector<8x128xf32>
    %46 = math.tanh %45 : vector<8x128xf32>
    %47 = vector.extract_strided_slice %32 {offsets = [0, 384], sizes = [8, 128], strides = [1, 1]} : vector<8x512xf32> to vector<8x128xf32>
    %48 = arith.negf %47 : vector<8x128xf32>
    %49 = math.exp %48 : vector<8x128xf32>
    %cst_37 = arith.constant 1.000000e+00 : f32
    %50 = vector.broadcast %cst_37 : f32 to vector<8x128xf32>
    %51 = arith.addf %50, %49 : vector<8x128xf32>
    %52 = arith.divf %50, %51 : vector<8x128xf32>
    %53 = arith.mulf %44, %24 : vector<8x128xf32>
    %54 = arith.mulf %38, %46 : vector<8x128xf32>
    %55 = arith.addf %53, %54 : vector<8x128xf32>
    %56 = math.tanh %55 : vector<8x128xf32>
    %57 = arith.mulf %52, %56 : vector<8x128xf32>
    %c56 = arith.constant 56 : index
    %c0_38 = arith.constant 0 : index
    %58 = vector.load %arg12[%c56, %c0_38] : memref<64x512xf32, #tpu.memory_space<vmem>>, vector<8x512xf32>
    %59 = arith.truncf %26 : vector<8x128xf32> to vector<8x128xbf16>
    %cst_39 = arith.constant dense<0.000000e+00> : vector<8x512xf32>
    %60 = tpu.matmul %59, %20, %cst_39 {dimension_numbers = #tpu.dot_dimension_numbers<[1], [0], [0], [1], [0, 0, 1, 1], [], []>} : vector<8x128xbf16>, vector<128x512xbf16>, vector<8x512xf32> -> vector<8x512xf32>
    %61 = arith.addf %58, %60 : vector<8x512xf32>
    %62 = vector.extract_strided_slice %61 {offsets = [0, 0], sizes = [8, 128], strides = [1, 1]} : vector<8x512xf32> to vector<8x128xf32>
    %63 = arith.negf %62 : vector<8x128xf32>
    %64 = math.exp %63 : vector<8x128xf32>
    %cst_40 = arith.constant 1.000000e+00 : f32
    %65 = vector.broadcast %cst_40 : f32 to vector<8x128xf32>
    %66 = arith.addf %65, %64 : vector<8x128xf32>
    %67 = arith.divf %65, %66 : vector<8x128xf32>
    %68 = vector.extract_strided_slice %61 {offsets = [0, 128], sizes = [8, 128], strides = [1, 1]} : vector<8x512xf32> to vector<8x128xf32>
    %69 = arith.negf %68 : vector<8x128xf32>
    %70 = math.exp %69 : vector<8x128xf32>
    %cst_41 = arith.constant 1.000000e+00 : f32
    %71 = vector.broadcast %cst_41 : f32 to vector<8x128xf32>
    %72 = arith.addf %71, %70 : vector<8x128xf32>
    %73 = arith.divf %71, %72 : vector<8x128xf32>
    %74 = vector.extract_strided_slice %61 {offsets = [0, 256], sizes = [8, 128], strides = [1, 1]} : vector<8x512xf32> to vector<8x128xf32>
    %75 = math.tanh %74 : vector<8x128xf32>
    %76 = vector.extract_strided_slice %61 {offsets = [0, 384], sizes = [8, 128], strides = [1, 1]} : vector<8x512xf32> to vector<8x128xf32>
    %77 = arith.negf %76 : vector<8x128xf32>
    %78 = math.exp %77 : vector<8x128xf32>
    %cst_42 = arith.constant 1.000000e+00 : f32
    %79 = vector.broadcast %cst_42 : f32 to vector<8x128xf32>
    %80 = arith.addf %79, %78 : vector<8x128xf32>
    %81 = arith.divf %79, %80 : vector<8x128xf32>
    %82 = arith.mulf %73, %28 : vector<8x128xf32>
    %83 = arith.mulf %67, %75 : vector<8x128xf32>
    %84 = arith.addf %82, %83 : vector<8x128xf32>
    %85 = math.tanh %84 : vector<8x128xf32>
    %86 = arith.mulf %81, %85 : vector<8x128xf32>
    %c0_43 = arith.constant 0 : index
    %c0_44 = arith.constant 0 : index
    %87 = vector.load %arg9[%c0_43, %c0_44] : memref<64x128xf32, #tpu.memory_space<vmem>>, vector<8x128xf32>
    tpu.vector_store %arg9[%c0_43, %c0_44], %57 {strides = array<i32>} : memref<64x128xf32, #tpu.memory_space<vmem>>, vector<8x128xf32>,
    %c56_45 = arith.constant 56 : index
    %c0_46 = arith.constant 0 : index
    %88 = vector.load %arg10[%c56_45, %c0_46] : memref<64x128xf32, #tpu.memory_space<vmem>>, vector<8x128xf32>
    tpu.vector_store %arg10[%c56_45, %c0_46], %86 {strides = array<i32>} : memref<64x128xf32, #tpu.memory_space<vmem>>, vector<8x128xf32>,
    %c8 = arith.constant 8 : index
    %c0_47 = arith.constant 0 : index
    %89 = vector.load %arg11[%c8, %c0_47] : memref<64x512xf32, #tpu.memory_space<vmem>>, vector<8x512xf32>
    %90 = arith.truncf %57 : vector<8x128xf32> to vector<8x128xbf16>
    %cst_48 = arith.constant dense<0.000000e+00> : vector<8x512xf32>
    %91 = tpu.matmul %90, %19, %cst_48 {dimension_numbers = #tpu.dot_dimension_numbers<[1], [0], [0], [1], [0, 0, 1, 1], [], []>} : vector<8x128xbf16>, vector<128x512xbf16>, vector<8x512xf32> -> vector<8x512xf32>
    %92 = arith.addf %89, %91 : vector<8x512xf32>
    %93 = vector.extract_strided_slice %92 {offsets = [0, 0], sizes = [8, 128], strides = [1, 1]} : vector<8x512xf32> to vector<8x128xf32>
    %94 = arith.negf %93 : vector<8x128xf32>
    %95 = math.exp %94 : vector<8x128xf32>
    %cst_49 = arith.constant 1.000000e+00 : f32
    %96 = vector.broadcast %cst_49 : f32 to vector<8x128xf32>
    %97 = arith.addf %96, %95 : vector<8x128xf32>
    %98 = arith.divf %96, %97 : vector<8x128xf32>
    %99 = vector.extract_strided_slice %92 {offsets = [0, 128], sizes = [8, 128], strides = [1, 1]} : vector<8x512xf32> to vector<8x128xf32>
    %100 = arith.negf %99 : vector<8x128xf32>
    %101 = math.exp %100 : vector<8x128xf32>
    %cst_50 = arith.constant 1.000000e+00 : f32
    %102 = vector.broadcast %cst_50 : f32 to vector<8x128xf32>
    %103 = arith.addf %102, %101 : vector<8x128xf32>
    %104 = arith.divf %102, %103 : vector<8x128xf32>
    %105 = vector.extract_strided_slice %92 {offsets = [0, 256], sizes = [8, 128], strides = [1, 1]} : vector<8x512xf32> to vector<8x128xf32>
    %106 = math.tanh %105 : vector<8x128xf32>
    %107 = vector.extract_strided_slice %92 {offsets = [0, 384], sizes = [8, 128], strides = [1, 1]} : vector<8x512xf32> to vector<8x128xf32>
    %108 = arith.negf %107 : vector<8x128xf32>
    %109 = math.exp %108 : vector<8x128xf32>
    %cst_51 = arith.constant 1.000000e+00 : f32
    %110 = vector.broadcast %cst_51 : f32 to vector<8x128xf32>
    %111 = arith.addf %110, %109 : vector<8x128xf32>
    %112 = arith.divf %110, %111 : vector<8x128xf32>
    %113 = arith.mulf %104, %55 : vector<8x128xf32>
    %114 = arith.mulf %98, %106 : vector<8x128xf32>
    %115 = arith.addf %113, %114 : vector<8x128xf32>
    %116 = math.tanh %115 : vector<8x128xf32>
    %117 = arith.mulf %112, %116 : vector<8x128xf32>
    %c48 = arith.constant 48 : index
    %c0_52 = arith.constant 0 : index
    %118 = vector.load %arg12[%c48, %c0_52] : memref<64x512xf32, #tpu.memory_space<vmem>>, vector<8x512xf32>
    %119 = arith.truncf %86 : vector<8x128xf32> to vector<8x128xbf16>
    %cst_53 = arith.constant dense<0.000000e+00> : vector<8x512xf32>
    %120 = tpu.matmul %119, %20, %cst_53 {dimension_numbers = #tpu.dot_dimension_numbers<[1], [0], [0], [1], [0, 0, 1, 1], [], []>} : vector<8x128xbf16>, vector<128x512xbf16>, vector<8x512xf32> -> vector<8x512xf32>
    %121 = arith.addf %118, %120 : vector<8x512xf32>
    %122 = vector.extract_strided_slice %121 {offsets = [0, 0], sizes = [8, 128], strides = [1, 1]} : vector<8x512xf32> to vector<8x128xf32>
    %123 = arith.negf %122 : vector<8x128xf32>
    %124 = math.exp %123 : vector<8x128xf32>
    %cst_54 = arith.constant 1.000000e+00 : f32
    %125 = vector.broadcast %cst_54 : f32 to vector<8x128xf32>
    %126 = arith.addf %125, %124 : vector<8x128xf32>
    %127 = arith.divf %125, %126 : vector<8x128xf32>
    %128 = vector.extract_strided_slice %121 {offsets = [0, 128], sizes = [8, 128], strides = [1, 1]} : vector<8x512xf32> to vector<8x128xf32>
    %129 = arith.negf %128 : vector<8x128xf32>
    %130 = math.exp %129 : vector<8x128xf32>
    %cst_55 = arith.constant 1.000000e+00 : f32
    %131 = vector.broadcast %cst_55 : f32 to vector<8x128xf32>
    %132 = arith.addf %131, %130 : vector<8x128xf32>
    %133 = arith.divf %131, %132 : vector<8x128xf32>
    %134 = vector.extract_strided_slice %121 {offsets = [0, 256], sizes = [8, 128], strides = [1, 1]} : vector<8x512xf32> to vector<8x128xf32>
    %135 = math.tanh %134 : vector<8x128xf32>
    %136 = vector.extract_strided_slice %121 {offsets = [0, 384], sizes = [8, 128], strides = [1, 1]} : vector<8x512xf32> to vector<8x128xf32>
    %137 = arith.negf %136 : vector<8x128xf32>
    %138 = math.exp %137 : vector<8x128xf32>
    %cst_56 = arith.constant 1.000000e+00 : f32
    %139 = vector.broadcast %cst_56 : f32 to vector<8x128xf32>
    %140 = arith.addf %139, %138 : vector<8x128xf32>
    %141 = arith.divf %139, %140 : vector<8x128xf32>
    %142 = arith.mulf %133, %84 : vector<8x128xf32>
    %143 = arith.mulf %127, %135 : vector<8x128xf32>
    %144 = arith.addf %142, %143 : vector<8x128xf32>
    %145 = math.tanh %144 : vector<8x128xf32>
    %146 = arith.mulf %141, %145 : vector<8x128xf32>
    %c8_57 = arith.constant 8 : index
    %c0_58 = arith.constant 0 : index
    %147 = vector.load %arg9[%c8_57, %c0_58] : memref<64x128xf32, #tpu.memory_space<vmem>>, vector<8x128xf32>
    tpu.vector_store %arg9[%c8_57, %c0_58], %117 {strides = array<i32>} : memref<64x128xf32, #tpu.memory_space<vmem>>, vector<8x128xf32>,
    %c48_59 = arith.constant 48 : index
    %c0_60 = arith.constant 0 : index
    %148 = vector.load %arg10[%c48_59, %c0_60] : memref<64x128xf32, #tpu.memory_space<vmem>>, vector<8x128xf32>
    tpu.vector_store %arg10[%c48_59, %c0_60], %146 {strides = array<i32>} : memref<64x128xf32, #tpu.memory_space<vmem>>, vector<8x128xf32>,
    %c16 = arith.constant 16 : index
    %c0_61 = arith.constant 0 : index
    %149 = vector.load %arg11[%c16, %c0_61] : memref<64x512xf32, #tpu.memory_space<vmem>>, vector<8x512xf32>
    %150 = arith.truncf %117 : vector<8x128xf32> to vector<8x128xbf16>
    %cst_62 = arith.constant dense<0.000000e+00> : vector<8x512xf32>
    %151 = tpu.matmul %150, %19, %cst_62 {dimension_numbers = #tpu.dot_dimension_numbers<[1], [0], [0], [1], [0, 0, 1, 1], [], []>} : vector<8x128xbf16>, vector<128x512xbf16>, vector<8x512xf32> -> vector<8x512xf32>
    %152 = arith.addf %149, %151 : vector<8x512xf32>
    %153 = vector.extract_strided_slice %152 {offsets = [0, 0], sizes = [8, 128], strides = [1, 1]} : vector<8x512xf32> to vector<8x128xf32>
    %154 = arith.negf %153 : vector<8x128xf32>
    %155 = math.exp %154 : vector<8x128xf32>
    %cst_63 = arith.constant 1.000000e+00 : f32
    %156 = vector.broadcast %cst_63 : f32 to vector<8x128xf32>
    %157 = arith.addf %156, %155 : vector<8x128xf32>
    %158 = arith.divf %156, %157 : vector<8x128xf32>
    %159 = vector.extract_strided_slice %152 {offsets = [0, 128], sizes = [8, 128], strides = [1, 1]} : vector<8x512xf32> to vector<8x128xf32>
    %160 = arith.negf %159 : vector<8x128xf32>
    %161 = math.exp %160 : vector<8x128xf32>
    %cst_64 = arith.constant 1.000000e+00 : f32
    %162 = vector.broadcast %cst_64 : f32 to vector<8x128xf32>
    %163 = arith.addf %162, %161 : vector<8x128xf32>
    %164 = arith.divf %162, %163 : vector<8x128xf32>
    %165 = vector.extract_strided_slice %152 {offsets = [0, 256], sizes = [8, 128], strides = [1, 1]} : vector<8x512xf32> to vector<8x128xf32>
    %166 = math.tanh %165 : vector<8x128xf32>
    %167 = vector.extract_strided_slice %152 {offsets = [0, 384], sizes = [8, 128], strides = [1, 1]} : vector<8x512xf32> to vector<8x128xf32>
    %168 = arith.negf %167 : vector<8x128xf32>
    %169 = math.exp %168 : vector<8x128xf32>
    %cst_65 = arith.constant 1.000000e+00 : f32
    %170 = vector.broadcast %cst_65 : f32 to vector<8x128xf32>
    %171 = arith.addf %170, %169 : vector<8x128xf32>
    %172 = arith.divf %170, %171 : vector<8x128xf32>
    %173 = arith.mulf %164, %115 : vector<8x128xf32>
    %174 = arith.mulf %158, %166 : vector<8x128xf32>
    %175 = arith.addf %173, %174 : vector<8x128xf32>
    %176 = math.tanh %175 : vector<8x128xf32>
    %177 = arith.mulf %172, %176 : vector<8x128xf32>
    %c40 = arith.constant 40 : index
    %c0_66 = arith.constant 0 : index
    %178 = vector.load %arg12[%c40, %c0_66] : memref<64x512xf32, #tpu.memory_space<vmem>>, vector<8x512xf32>
    %179 = arith.truncf %146 : vector<8x128xf32> to vector<8x128xbf16>
    %cst_67 = arith.constant dense<0.000000e+00> : vector<8x512xf32>
    %180 = tpu.matmul %179, %20, %cst_67 {dimension_numbers = #tpu.dot_dimension_numbers<[1], [0], [0], [1], [0, 0, 1, 1], [], []>} : vector<8x128xbf16>, vector<128x512xbf16>, vector<8x512xf32> -> vector<8x512xf32>
    %181 = arith.addf %178, %180 : vector<8x512xf32>
    %182 = vector.extract_strided_slice %181 {offsets = [0, 0], sizes = [8, 128], strides = [1, 1]} : vector<8x512xf32> to vector<8x128xf32>
    %183 = arith.negf %182 : vector<8x128xf32>
    %184 = math.exp %183 : vector<8x128xf32>
    %cst_68 = arith.constant 1.000000e+00 : f32
    %185 = vector.broadcast %cst_68 : f32 to vector<8x128xf32>
    %186 = arith.addf %185, %184 : vector<8x128xf32>
    %187 = arith.divf %185, %186 : vector<8x128xf32>
    %188 = vector.extract_strided_slice %181 {offsets = [0, 128], sizes = [8, 128], strides = [1, 1]} : vector<8x512xf32> to vector<8x128xf32>
    %189 = arith.negf %188 : vector<8x128xf32>
    %190 = math.exp %189 : vector<8x128xf32>
    %cst_69 = arith.constant 1.000000e+00 : f32
    %191 = vector.broadcast %cst_69 : f32 to vector<8x128xf32>
    %192 = arith.addf %191, %190 : vector<8x128xf32>
    %193 = arith.divf %191, %192 : vector<8x128xf32>
    %194 = vector.extract_strided_slice %181 {offsets = [0, 256], sizes = [8, 128], strides = [1, 1]} : vector<8x512xf32> to vector<8x128xf32>
    %195 = math.tanh %194 : vector<8x128xf32>
    %196 = vector.extract_strided_slice %181 {offsets = [0, 384], sizes = [8, 128], strides = [1, 1]} : vector<8x512xf32> to vector<8x128xf32>
    %197 = arith.negf %196 : vector<8x128xf32>
    %198 = math.exp %197 : vector<8x128xf32>
    %cst_70 = arith.constant 1.000000e+00 : f32
    %199 = vector.broadcast %cst_70 : f32 to vector<8x128xf32>
    %200 = arith.addf %199, %198 : vector<8x128xf32>
    %201 = arith.divf %199, %200 : vector<8x128xf32>
    %202 = arith.mulf %193, %144 : vector<8x128xf32>
    %203 = arith.mulf %187, %195 : vector<8x128xf32>
    %204 = arith.addf %202, %203 : vector<8x128xf32>
    %205 = math.tanh %204 : vector<8x128xf32>
    %206 = arith.mulf %201, %205 : vector<8x128xf32>
    %c16_71 = arith.constant 16 : index
    %c0_72 = arith.constant 0 : index
    %207 = vector.load %arg9[%c16_71, %c0_72] : memref<64x128xf32, #tpu.memory_space<vmem>>, vector<8x128xf32>
    tpu.vector_store %arg9[%c16_71, %c0_72], %177 {strides = array<i32>} : memref<64x128xf32, #tpu.memory_space<vmem>>, vector<8x128xf32>,
    %c40_73 = arith.constant 40 : index
    %c0_74 = arith.constant 0 : index
    %208 = vector.load %arg10[%c40_73, %c0_74] : memref<64x128xf32, #tpu.memory_space<vmem>>, vector<8x128xf32>
    tpu.vector_store %arg10[%c40_73, %c0_74], %206 {strides = array<i32>} : memref<64x128xf32, #tpu.memory_space<vmem>>, vector<8x128xf32>,
    %c24 = arith.constant 24 : index
    %c0_75 = arith.constant 0 : index
    %209 = vector.load %arg11[%c24, %c0_75] : memref<64x512xf32, #tpu.memory_space<vmem>>, vector<8x512xf32>
    %210 = arith.truncf %177 : vector<8x128xf32> to vector<8x128xbf16>
    %cst_76 = arith.constant dense<0.000000e+00> : vector<8x512xf32>
    %211 = tpu.matmul %210, %19, %cst_76 {dimension_numbers = #tpu.dot_dimension_numbers<[1], [0], [0], [1], [0, 0, 1, 1], [], []>} : vector<8x128xbf16>, vector<128x512xbf16>, vector<8x512xf32> -> vector<8x512xf32>
    %212 = arith.addf %209, %211 : vector<8x512xf32>
    %213 = vector.extract_strided_slice %212 {offsets = [0, 0], sizes = [8, 128], strides = [1, 1]} : vector<8x512xf32> to vector<8x128xf32>
    %214 = arith.negf %213 : vector<8x128xf32>
    %215 = math.exp %214 : vector<8x128xf32>
    %cst_77 = arith.constant 1.000000e+00 : f32
    %216 = vector.broadcast %cst_77 : f32 to vector<8x128xf32>
    %217 = arith.addf %216, %215 : vector<8x128xf32>
    %218 = arith.divf %216, %217 : vector<8x128xf32>
    %219 = vector.extract_strided_slice %212 {offsets = [0, 128], sizes = [8, 128], strides = [1, 1]} : vector<8x512xf32> to vector<8x128xf32>
    %220 = arith.negf %219 : vector<8x128xf32>
    %221 = math.exp %220 : vector<8x128xf32>
    %cst_78 = arith.constant 1.000000e+00 : f32
    %222 = vector.broadcast %cst_78 : f32 to vector<8x128xf32>
    %223 = arith.addf %222, %221 : vector<8x128xf32>
    %224 = arith.divf %222, %223 : vector<8x128xf32>
    %225 = vector.extract_strided_slice %212 {offsets = [0, 256], sizes = [8, 128], strides = [1, 1]} : vector<8x512xf32> to vector<8x128xf32>
    %226 = math.tanh %225 : vector<8x128xf32>
    %227 = vector.extract_strided_slice %212 {offsets = [0, 384], sizes = [8, 128], strides = [1, 1]} : vector<8x512xf32> to vector<8x128xf32>
    %228 = arith.negf %227 : vector<8x128xf32>
    %229 = math.exp %228 : vector<8x128xf32>
    %cst_79 = arith.constant 1.000000e+00 : f32
    %230 = vector.broadcast %cst_79 : f32 to vector<8x128xf32>
    %231 = arith.addf %230, %229 : vector<8x128xf32>
    %232 = arith.divf %230, %231 : vector<8x128xf32>
    %233 = arith.mulf %224, %175 : vector<8x128xf32>
    %234 = arith.mulf %218, %226 : vector<8x128xf32>
    %235 = arith.addf %233, %234 : vector<8x128xf32>
    %236 = math.tanh %235 : vector<8x128xf32>
    %237 = arith.mulf %232, %236 : vector<8x128xf32>
    %c32 = arith.constant 32 : index
    %c0_80 = arith.constant 0 : index
    %238 = vector.load %arg12[%c32, %c0_80] : memref<64x512xf32, #tpu.memory_space<vmem>>, vector<8x512xf32>
    %239 = arith.truncf %206 : vector<8x128xf32> to vector<8x128xbf16>
    %cst_81 = arith.constant dense<0.000000e+00> : vector<8x512xf32>
    %240 = tpu.matmul %239, %20, %cst_81 {dimension_numbers = #tpu.dot_dimension_numbers<[1], [0], [0], [1], [0, 0, 1, 1], [], []>} : vector<8x128xbf16>, vector<128x512xbf16>, vector<8x512xf32> -> vector<8x512xf32>
    %241 = arith.addf %238, %240 : vector<8x512xf32>
    %242 = vector.extract_strided_slice %241 {offsets = [0, 0], sizes = [8, 128], strides = [1, 1]} : vector<8x512xf32> to vector<8x128xf32>
    %243 = arith.negf %242 : vector<8x128xf32>
    %244 = math.exp %243 : vector<8x128xf32>
    %cst_82 = arith.constant 1.000000e+00 : f32
    %245 = vector.broadcast %cst_82 : f32 to vector<8x128xf32>
    %246 = arith.addf %245, %244 : vector<8x128xf32>
    %247 = arith.divf %245, %246 : vector<8x128xf32>
    %248 = vector.extract_strided_slice %241 {offsets = [0, 128], sizes = [8, 128], strides = [1, 1]} : vector<8x512xf32> to vector<8x128xf32>
    %249 = arith.negf %248 : vector<8x128xf32>
    %250 = math.exp %249 : vector<8x128xf32>
    %cst_83 = arith.constant 1.000000e+00 : f32
    %251 = vector.broadcast %cst_83 : f32 to vector<8x128xf32>
    %252 = arith.addf %251, %250 : vector<8x128xf32>
    %253 = arith.divf %251, %252 : vector<8x128xf32>
    %254 = vector.extract_strided_slice %241 {offsets = [0, 256], sizes = [8, 128], strides = [1, 1]} : vector<8x512xf32> to vector<8x128xf32>
    %255 = math.tanh %254 : vector<8x128xf32>
    %256 = vector.extract_strided_slice %241 {offsets = [0, 384], sizes = [8, 128], strides = [1, 1]} : vector<8x512xf32> to vector<8x128xf32>
    %257 = arith.negf %256 : vector<8x128xf32>
    %258 = math.exp %257 : vector<8x128xf32>
    %cst_84 = arith.constant 1.000000e+00 : f32
    %259 = vector.broadcast %cst_84 : f32 to vector<8x128xf32>
    %260 = arith.addf %259, %258 : vector<8x128xf32>
    %261 = arith.divf %259, %260 : vector<8x128xf32>
    %262 = arith.mulf %253, %204 : vector<8x128xf32>
    %263 = arith.mulf %247, %255 : vector<8x128xf32>
    %264 = arith.addf %262, %263 : vector<8x128xf32>
    %265 = math.tanh %264 : vector<8x128xf32>
    %266 = arith.mulf %261, %265 : vector<8x128xf32>
    %c24_85 = arith.constant 24 : index
    %c0_86 = arith.constant 0 : index
    %267 = vector.load %arg9[%c24_85, %c0_86] : memref<64x128xf32, #tpu.memory_space<vmem>>, vector<8x128xf32>
    tpu.vector_store %arg9[%c24_85, %c0_86], %237 {strides = array<i32>} : memref<64x128xf32, #tpu.memory_space<vmem>>, vector<8x128xf32>,
    %c32_87 = arith.constant 32 : index
    %c0_88 = arith.constant 0 : index
    %268 = vector.load %arg10[%c32_87, %c0_88] : memref<64x128xf32, #tpu.memory_space<vmem>>, vector<8x128xf32>
    tpu.vector_store %arg10[%c32_87, %c0_88], %266 {strides = array<i32>} : memref<64x128xf32, #tpu.memory_space<vmem>>, vector<8x128xf32>,
    %c32_89 = arith.constant 32 : index
    %c0_90 = arith.constant 0 : index
    %269 = vector.load %arg11[%c32_89, %c0_90] : memref<64x512xf32, #tpu.memory_space<vmem>>, vector<8x512xf32>
    %270 = arith.truncf %237 : vector<8x128xf32> to vector<8x128xbf16>
    %cst_91 = arith.constant dense<0.000000e+00> : vector<8x512xf32>
    %271 = tpu.matmul %270, %19, %cst_91 {dimension_numbers = #tpu.dot_dimension_numbers<[1], [0], [0], [1], [0, 0, 1, 1], [], []>} : vector<8x128xbf16>, vector<128x512xbf16>, vector<8x512xf32> -> vector<8x512xf32>
    %272 = arith.addf %269, %271 : vector<8x512xf32>
    %273 = vector.extract_strided_slice %272 {offsets = [0, 0], sizes = [8, 128], strides = [1, 1]} : vector<8x512xf32> to vector<8x128xf32>
    %274 = arith.negf %273 : vector<8x128xf32>
    %275 = math.exp %274 : vector<8x128xf32>
    %cst_92 = arith.constant 1.000000e+00 : f32
    %276 = vector.broadcast %cst_92 : f32 to vector<8x128xf32>
    %277 = arith.addf %276, %275 : vector<8x128xf32>
    %278 = arith.divf %276, %277 : vector<8x128xf32>
    %279 = vector.extract_strided_slice %272 {offsets = [0, 128], sizes = [8, 128], strides = [1, 1]} : vector<8x512xf32> to vector<8x128xf32>
    %280 = arith.negf %279 : vector<8x128xf32>
    %281 = math.exp %280 : vector<8x128xf32>
    %cst_93 = arith.constant 1.000000e+00 : f32
    %282 = vector.broadcast %cst_93 : f32 to vector<8x128xf32>
    %283 = arith.addf %282, %281 : vector<8x128xf32>
    %284 = arith.divf %282, %283 : vector<8x128xf32>
    %285 = vector.extract_strided_slice %272 {offsets = [0, 256], sizes = [8, 128], strides = [1, 1]} : vector<8x512xf32> to vector<8x128xf32>
    %286 = math.tanh %285 : vector<8x128xf32>
    %287 = vector.extract_strided_slice %272 {offsets = [0, 384], sizes = [8, 128], strides = [1, 1]} : vector<8x512xf32> to vector<8x128xf32>
    %288 = arith.negf %287 : vector<8x128xf32>
    %289 = math.exp %288 : vector<8x128xf32>
    %cst_94 = arith.constant 1.000000e+00 : f32
    %290 = vector.broadcast %cst_94 : f32 to vector<8x128xf32>
    %291 = arith.addf %290, %289 : vector<8x128xf32>
    %292 = arith.divf %290, %291 : vector<8x128xf32>
    %293 = arith.mulf %284, %235 : vector<8x128xf32>
    %294 = arith.mulf %278, %286 : vector<8x128xf32>
    %295 = arith.addf %293, %294 : vector<8x128xf32>
    %296 = math.tanh %295 : vector<8x128xf32>
    %297 = arith.mulf %292, %296 : vector<8x128xf32>
    %c24_95 = arith.constant 24 : index
    %c0_96 = arith.constant 0 : index
    %298 = vector.load %arg12[%c24_95, %c0_96] : memref<64x512xf32, #tpu.memory_space<vmem>>, vector<8x512xf32>
    %299 = arith.truncf %266 : vector<8x128xf32> to vector<8x128xbf16>
    %cst_97 = arith.constant dense<0.000000e+00> : vector<8x512xf32>
    %300 = tpu.matmul %299, %20, %cst_97 {dimension_numbers = #tpu.dot_dimension_numbers<[1], [0], [0], [1], [0, 0, 1, 1], [], []>} : vector<8x128xbf16>, vector<128x512xbf16>, vector<8x512xf32> -> vector<8x512xf32>
    %301 = arith.addf %298, %300 : vector<8x512xf32>
    %302 = vector.extract_strided_slice %301 {offsets = [0, 0], sizes = [8, 128], strides = [1, 1]} : vector<8x512xf32> to vector<8x128xf32>
    %303 = arith.negf %302 : vector<8x128xf32>
    %304 = math.exp %303 : vector<8x128xf32>
    %cst_98 = arith.constant 1.000000e+00 : f32
    %305 = vector.broadcast %cst_98 : f32 to vector<8x128xf32>
    %306 = arith.addf %305, %304 : vector<8x128xf32>
    %307 = arith.divf %305, %306 : vector<8x128xf32>
    %308 = vector.extract_strided_slice %301 {offsets = [0, 128], sizes = [8, 128], strides = [1, 1]} : vector<8x512xf32> to vector<8x128xf32>
    %309 = arith.negf %308 : vector<8x128xf32>
    %310 = math.exp %309 : vector<8x128xf32>
    %cst_99 = arith.constant 1.000000e+00 : f32
    %311 = vector.broadcast %cst_99 : f32 to vector<8x128xf32>
    %312 = arith.addf %311, %310 : vector<8x128xf32>
    %313 = arith.divf %311, %312 : vector<8x128xf32>
    %314 = vector.extract_strided_slice %301 {offsets = [0, 256], sizes = [8, 128], strides = [1, 1]} : vector<8x512xf32> to vector<8x128xf32>
    %315 = math.tanh %314 : vector<8x128xf32>
    %316 = vector.extract_strided_slice %301 {offsets = [0, 384], sizes = [8, 128], strides = [1, 1]} : vector<8x512xf32> to vector<8x128xf32>
    %317 = arith.negf %316 : vector<8x128xf32>
    %318 = math.exp %317 : vector<8x128xf32>
    %cst_100 = arith.constant 1.000000e+00 : f32
    %319 = vector.broadcast %cst_100 : f32 to vector<8x128xf32>
    %320 = arith.addf %319, %318 : vector<8x128xf32>
    %321 = arith.divf %319, %320 : vector<8x128xf32>
    %322 = arith.mulf %313, %264 : vector<8x128xf32>
    %323 = arith.mulf %307, %315 : vector<8x128xf32>
    %324 = arith.addf %322, %323 : vector<8x128xf32>
    %325 = math.tanh %324 : vector<8x128xf32>
    %326 = arith.mulf %321, %325 : vector<8x128xf32>
    %c32_101 = arith.constant 32 : index
    %c0_102 = arith.constant 0 : index
    %327 = vector.load %arg9[%c32_101, %c0_102] : memref<64x128xf32, #tpu.memory_space<vmem>>, vector<8x128xf32>
    tpu.vector_store %arg9[%c32_101, %c0_102], %297 {strides = array<i32>} : memref<64x128xf32, #tpu.memory_space<vmem>>, vector<8x128xf32>,
    %c24_103 = arith.constant 24 : index
    %c0_104 = arith.constant 0 : index
    %328 = vector.load %arg10[%c24_103, %c0_104] : memref<64x128xf32, #tpu.memory_space<vmem>>, vector<8x128xf32>
    tpu.vector_store %arg10[%c24_103, %c0_104], %326 {strides = array<i32>} : memref<64x128xf32, #tpu.memory_space<vmem>>, vector<8x128xf32>,
    %c40_105 = arith.constant 40 : index
    %c0_106 = arith.constant 0 : index
    %329 = vector.load %arg11[%c40_105, %c0_106] : memref<64x512xf32, #tpu.memory_space<vmem>>, vector<8x512xf32>
    %330 = arith.truncf %297 : vector<8x128xf32> to vector<8x128xbf16>
    %cst_107 = arith.constant dense<0.000000e+00> : vector<8x512xf32>
    %331 = tpu.matmul %330, %19, %cst_107 {dimension_numbers = #tpu.dot_dimension_numbers<[1], [0], [0], [1], [0, 0, 1, 1], [], []>} : vector<8x128xbf16>, vector<128x512xbf16>, vector<8x512xf32> -> vector<8x512xf32>
    %332 = arith.addf %329, %331 : vector<8x512xf32>
    %333 = vector.extract_strided_slice %332 {offsets = [0, 0], sizes = [8, 128], strides = [1, 1]} : vector<8x512xf32> to vector<8x128xf32>
    %334 = arith.negf %333 : vector<8x128xf32>
    %335 = math.exp %334 : vector<8x128xf32>
    %cst_108 = arith.constant 1.000000e+00 : f32
    %336 = vector.broadcast %cst_108 : f32 to vector<8x128xf32>
    %337 = arith.addf %336, %335 : vector<8x128xf32>
    %338 = arith.divf %336, %337 : vector<8x128xf32>
    %339 = vector.extract_strided_slice %332 {offsets = [0, 128], sizes = [8, 128], strides = [1, 1]} : vector<8x512xf32> to vector<8x128xf32>
    %340 = arith.negf %339 : vector<8x128xf32>
    %341 = math.exp %340 : vector<8x128xf32>
    %cst_109 = arith.constant 1.000000e+00 : f32
    %342 = vector.broadcast %cst_109 : f32 to vector<8x128xf32>
    %343 = arith.addf %342, %341 : vector<8x128xf32>
    %344 = arith.divf %342, %343 : vector<8x128xf32>
    %345 = vector.extract_strided_slice %332 {offsets = [0, 256], sizes = [8, 128], strides = [1, 1]} : vector<8x512xf32> to vector<8x128xf32>
    %346 = math.tanh %345 : vector<8x128xf32>
    %347 = vector.extract_strided_slice %332 {offsets = [0, 384], sizes = [8, 128], strides = [1, 1]} : vector<8x512xf32> to vector<8x128xf32>
    %348 = arith.negf %347 : vector<8x128xf32>
    %349 = math.exp %348 : vector<8x128xf32>
    %cst_110 = arith.constant 1.000000e+00 : f32
    %350 = vector.broadcast %cst_110 : f32 to vector<8x128xf32>
    %351 = arith.addf %350, %349 : vector<8x128xf32>
    %352 = arith.divf %350, %351 : vector<8x128xf32>
    %353 = arith.mulf %344, %295 : vector<8x128xf32>
    %354 = arith.mulf %338, %346 : vector<8x128xf32>
    %355 = arith.addf %353, %354 : vector<8x128xf32>
    %356 = math.tanh %355 : vector<8x128xf32>
    %357 = arith.mulf %352, %356 : vector<8x128xf32>
    %c16_111 = arith.constant 16 : index
    %c0_112 = arith.constant 0 : index
    %358 = vector.load %arg12[%c16_111, %c0_112] : memref<64x512xf32, #tpu.memory_space<vmem>>, vector<8x512xf32>
    %359 = arith.truncf %326 : vector<8x128xf32> to vector<8x128xbf16>
    %cst_113 = arith.constant dense<0.000000e+00> : vector<8x512xf32>
    %360 = tpu.matmul %359, %20, %cst_113 {dimension_numbers = #tpu.dot_dimension_numbers<[1], [0], [0], [1], [0, 0, 1, 1], [], []>} : vector<8x128xbf16>, vector<128x512xbf16>, vector<8x512xf32> -> vector<8x512xf32>
    %361 = arith.addf %358, %360 : vector<8x512xf32>
    %362 = vector.extract_strided_slice %361 {offsets = [0, 0], sizes = [8, 128], strides = [1, 1]} : vector<8x512xf32> to vector<8x128xf32>
    %363 = arith.negf %362 : vector<8x128xf32>
    %364 = math.exp %363 : vector<8x128xf32>
    %cst_114 = arith.constant 1.000000e+00 : f32
    %365 = vector.broadcast %cst_114 : f32 to vector<8x128xf32>
    %366 = arith.addf %365, %364 : vector<8x128xf32>
    %367 = arith.divf %365, %366 : vector<8x128xf32>
    %368 = vector.extract_strided_slice %361 {offsets = [0, 128], sizes = [8, 128], strides = [1, 1]} : vector<8x512xf32> to vector<8x128xf32>
    %369 = arith.negf %368 : vector<8x128xf32>
    %370 = math.exp %369 : vector<8x128xf32>
    %cst_115 = arith.constant 1.000000e+00 : f32
    %371 = vector.broadcast %cst_115 : f32 to vector<8x128xf32>
    %372 = arith.addf %371, %370 : vector<8x128xf32>
    %373 = arith.divf %371, %372 : vector<8x128xf32>
    %374 = vector.extract_strided_slice %361 {offsets = [0, 256], sizes = [8, 128], strides = [1, 1]} : vector<8x512xf32> to vector<8x128xf32>
    %375 = math.tanh %374 : vector<8x128xf32>
    %376 = vector.extract_strided_slice %361 {offsets = [0, 384], sizes = [8, 128], strides = [1, 1]} : vector<8x512xf32> to vector<8x128xf32>
    %377 = arith.negf %376 : vector<8x128xf32>
    %378 = math.exp %377 : vector<8x128xf32>
    %cst_116 = arith.constant 1.000000e+00 : f32
    %379 = vector.broadcast %cst_116 : f32 to vector<8x128xf32>
    %380 = arith.addf %379, %378 : vector<8x128xf32>
    %381 = arith.divf %379, %380 : vector<8x128xf32>
    %382 = arith.mulf %373, %324 : vector<8x128xf32>
    %383 = arith.mulf %367, %375 : vector<8x128xf32>
    %384 = arith.addf %382, %383 : vector<8x128xf32>
    %385 = math.tanh %384 : vector<8x128xf32>
    %386 = arith.mulf %381, %385 : vector<8x128xf32>
    %c40_117 = arith.constant 40 : index
    %c0_118 = arith.constant 0 : index
    %387 = vector.load %arg9[%c40_117, %c0_118] : memref<64x128xf32, #tpu.memory_space<vmem>>, vector<8x128xf32>
    tpu.vector_store %arg9[%c40_117, %c0_118], %357 {strides = array<i32>} : memref<64x128xf32, #tpu.memory_space<vmem>>, vector<8x128xf32>,
    %c16_119 = arith.constant 16 : index
    %c0_120 = arith.constant 0 : index
    %388 = vector.load %arg10[%c16_119, %c0_120] : memref<64x128xf32, #tpu.memory_space<vmem>>, vector<8x128xf32>
    tpu.vector_store %arg10[%c16_119, %c0_120], %386 {strides = array<i32>} : memref<64x128xf32, #tpu.memory_space<vmem>>, vector<8x128xf32>,
    %c48_121 = arith.constant 48 : index
    %c0_122 = arith.constant 0 : index
    %389 = vector.load %arg11[%c48_121, %c0_122] : memref<64x512xf32, #tpu.memory_space<vmem>>, vector<8x512xf32>
    %390 = arith.truncf %357 : vector<8x128xf32> to vector<8x128xbf16>
    %cst_123 = arith.constant dense<0.000000e+00> : vector<8x512xf32>
    %391 = tpu.matmul %390, %19, %cst_123 {dimension_numbers = #tpu.dot_dimension_numbers<[1], [0], [0], [1], [0, 0, 1, 1], [], []>} : vector<8x128xbf16>, vector<128x512xbf16>, vector<8x512xf32> -> vector<8x512xf32>
    %392 = arith.addf %389, %391 : vector<8x512xf32>
    %393 = vector.extract_strided_slice %392 {offsets = [0, 0], sizes = [8, 128], strides = [1, 1]} : vector<8x512xf32> to vector<8x128xf32>
    %394 = arith.negf %393 : vector<8x128xf32>
    %395 = math.exp %394 : vector<8x128xf32>
    %cst_124 = arith.constant 1.000000e+00 : f32
    %396 = vector.broadcast %cst_124 : f32 to vector<8x128xf32>
    %397 = arith.addf %396, %395 : vector<8x128xf32>
    %398 = arith.divf %396, %397 : vector<8x128xf32>
    %399 = vector.extract_strided_slice %392 {offsets = [0, 128], sizes = [8, 128], strides = [1, 1]} : vector<8x512xf32> to vector<8x128xf32>
    %400 = arith.negf %399 : vector<8x128xf32>
    %401 = math.exp %400 : vector<8x128xf32>
    %cst_125 = arith.constant 1.000000e+00 : f32
    %402 = vector.broadcast %cst_125 : f32 to vector<8x128xf32>
    %403 = arith.addf %402, %401 : vector<8x128xf32>
    %404 = arith.divf %402, %403 : vector<8x128xf32>
    %405 = vector.extract_strided_slice %392 {offsets = [0, 256], sizes = [8, 128], strides = [1, 1]} : vector<8x512xf32> to vector<8x128xf32>
    %406 = math.tanh %405 : vector<8x128xf32>
    %407 = vector.extract_strided_slice %392 {offsets = [0, 384], sizes = [8, 128], strides = [1, 1]} : vector<8x512xf32> to vector<8x128xf32>
    %408 = arith.negf %407 : vector<8x128xf32>
    %409 = math.exp %408 : vector<8x128xf32>
    %cst_126 = arith.constant 1.000000e+00 : f32
    %410 = vector.broadcast %cst_126 : f32 to vector<8x128xf32>
    %411 = arith.addf %410, %409 : vector<8x128xf32>
    %412 = arith.divf %410, %411 : vector<8x128xf32>
    %413 = arith.mulf %404, %355 : vector<8x128xf32>
    %414 = arith.mulf %398, %406 : vector<8x128xf32>
    %415 = arith.addf %413, %414 : vector<8x128xf32>
    %416 = math.tanh %415 : vector<8x128xf32>
    %417 = arith.mulf %412, %416 : vector<8x128xf32>
    %c8_127 = arith.constant 8 : index
    %c0_128 = arith.constant 0 : index
    %418 = vector.load %arg12[%c8_127, %c0_128] : memref<64x512xf32, #tpu.memory_space<vmem>>, vector<8x512xf32>
    %419 = arith.truncf %386 : vector<8x128xf32> to vector<8x128xbf16>
    %cst_129 = arith.constant dense<0.000000e+00> : vector<8x512xf32>
    %420 = tpu.matmul %419, %20, %cst_129 {dimension_numbers = #tpu.dot_dimension_numbers<[1], [0], [0], [1], [0, 0, 1, 1], [], []>} : vector<8x128xbf16>, vector<128x512xbf16>, vector<8x512xf32> -> vector<8x512xf32>
    %421 = arith.addf %418, %420 : vector<8x512xf32>
    %422 = vector.extract_strided_slice %421 {offsets = [0, 0], sizes = [8, 128], strides = [1, 1]} : vector<8x512xf32> to vector<8x128xf32>
    %423 = arith.negf %422 : vector<8x128xf32>
    %424 = math.exp %423 : vector<8x128xf32>
    %cst_130 = arith.constant 1.000000e+00 : f32
    %425 = vector.broadcast %cst_130 : f32 to vector<8x128xf32>
    %426 = arith.addf %425, %424 : vector<8x128xf32>
    %427 = arith.divf %425, %426 : vector<8x128xf32>
    %428 = vector.extract_strided_slice %421 {offsets = [0, 128], sizes = [8, 128], strides = [1, 1]} : vector<8x512xf32> to vector<8x128xf32>
    %429 = arith.negf %428 : vector<8x128xf32>
    %430 = math.exp %429 : vector<8x128xf32>
    %cst_131 = arith.constant 1.000000e+00 : f32
    %431 = vector.broadcast %cst_131 : f32 to vector<8x128xf32>
    %432 = arith.addf %431, %430 : vector<8x128xf32>
    %433 = arith.divf %431, %432 : vector<8x128xf32>
    %434 = vector.extract_strided_slice %421 {offsets = [0, 256], sizes = [8, 128], strides = [1, 1]} : vector<8x512xf32> to vector<8x128xf32>
    %435 = math.tanh %434 : vector<8x128xf32>
    %436 = vector.extract_strided_slice %421 {offsets = [0, 384], sizes = [8, 128], strides = [1, 1]} : vector<8x512xf32> to vector<8x128xf32>
    %437 = arith.negf %436 : vector<8x128xf32>
    %438 = math.exp %437 : vector<8x128xf32>
    %cst_132 = arith.constant 1.000000e+00 : f32
    %439 = vector.broadcast %cst_132 : f32 to vector<8x128xf32>
    %440 = arith.addf %439, %438 : vector<8x128xf32>
    %441 = arith.divf %439, %440 : vector<8x128xf32>
    %442 = arith.mulf %433, %384 : vector<8x128xf32>
    %443 = arith.mulf %427, %435 : vector<8x128xf32>
    %444 = arith.addf %442, %443 : vector<8x128xf32>
    %445 = math.tanh %444 : vector<8x128xf32>
    %446 = arith.mulf %441, %445 : vector<8x128xf32>
    %c48_133 = arith.constant 48 : index
    %c0_134 = arith.constant 0 : index
    %447 = vector.load %arg9[%c48_133, %c0_134] : memref<64x128xf32, #tpu.memory_space<vmem>>, vector<8x128xf32>
    tpu.vector_store %arg9[%c48_133, %c0_134], %417 {strides = array<i32>} : memref<64x128xf32, #tpu.memory_space<vmem>>, vector<8x128xf32>,
    %c8_135 = arith.constant 8 : index
    %c0_136 = arith.constant 0 : index
    %448 = vector.load %arg10[%c8_135, %c0_136] : memref<64x128xf32, #tpu.memory_space<vmem>>, vector<8x128xf32>
    tpu.vector_store %arg10[%c8_135, %c0_136], %446 {strides = array<i32>} : memref<64x128xf32, #tpu.memory_space<vmem>>, vector<8x128xf32>,
    %c56_137 = arith.constant 56 : index
    %c0_138 = arith.constant 0 : index
    %449 = vector.load %arg11[%c56_137, %c0_138] : memref<64x512xf32, #tpu.memory_space<vmem>>, vector<8x512xf32>
    %450 = arith.truncf %417 : vector<8x128xf32> to vector<8x128xbf16>
    %cst_139 = arith.constant dense<0.000000e+00> : vector<8x512xf32>
    %451 = tpu.matmul %450, %19, %cst_139 {dimension_numbers = #tpu.dot_dimension_numbers<[1], [0], [0], [1], [0, 0, 1, 1], [], []>} : vector<8x128xbf16>, vector<128x512xbf16>, vector<8x512xf32> -> vector<8x512xf32>
    %452 = arith.addf %449, %451 : vector<8x512xf32>
    %453 = vector.extract_strided_slice %452 {offsets = [0, 0], sizes = [8, 128], strides = [1, 1]} : vector<8x512xf32> to vector<8x128xf32>
    %454 = arith.negf %453 : vector<8x128xf32>
    %455 = math.exp %454 : vector<8x128xf32>
    %cst_140 = arith.constant 1.000000e+00 : f32
    %456 = vector.broadcast %cst_140 : f32 to vector<8x128xf32>
    %457 = arith.addf %456, %455 : vector<8x128xf32>
    %458 = arith.divf %456, %457 : vector<8x128xf32>
    %459 = vector.extract_strided_slice %452 {offsets = [0, 128], sizes = [8, 128], strides = [1, 1]} : vector<8x512xf32> to vector<8x128xf32>
    %460 = arith.negf %459 : vector<8x128xf32>
    %461 = math.exp %460 : vector<8x128xf32>
    %cst_141 = arith.constant 1.000000e+00 : f32
    %462 = vector.broadcast %cst_141 : f32 to vector<8x128xf32>
    %463 = arith.addf %462, %461 : vector<8x128xf32>
    %464 = arith.divf %462, %463 : vector<8x128xf32>
    %465 = vector.extract_strided_slice %452 {offsets = [0, 256], sizes = [8, 128], strides = [1, 1]} : vector<8x512xf32> to vector<8x128xf32>
    %466 = math.tanh %465 : vector<8x128xf32>
    %467 = vector.extract_strided_slice %452 {offsets = [0, 384], sizes = [8, 128], strides = [1, 1]} : vector<8x512xf32> to vector<8x128xf32>
    %468 = arith.negf %467 : vector<8x128xf32>
    %469 = math.exp %468 : vector<8x128xf32>
    %cst_142 = arith.constant 1.000000e+00 : f32
    %470 = vector.broadcast %cst_142 : f32 to vector<8x128xf32>
    %471 = arith.addf %470, %469 : vector<8x128xf32>
    %472 = arith.divf %470, %471 : vector<8x128xf32>
    %473 = arith.mulf %464, %415 : vector<8x128xf32>
    %474 = arith.mulf %458, %466 : vector<8x128xf32>
    %475 = arith.addf %473, %474 : vector<8x128xf32>
    %476 = math.tanh %475 : vector<8x128xf32>
    %477 = arith.mulf %472, %476 : vector<8x128xf32>
    %c0_143 = arith.constant 0 : index
    %c0_144 = arith.constant 0 : index
    %478 = vector.load %arg12[%c0_143, %c0_144] : memref<64x512xf32, #tpu.memory_space<vmem>>, vector<8x512xf32>
    %479 = arith.truncf %446 : vector<8x128xf32> to vector<8x128xbf16>
    %cst_145 = arith.constant dense<0.000000e+00> : vector<8x512xf32>
    %480 = tpu.matmul %479, %20, %cst_145 {dimension_numbers = #tpu.dot_dimension_numbers<[1], [0], [0], [1], [0, 0, 1, 1], [], []>} : vector<8x128xbf16>, vector<128x512xbf16>, vector<8x512xf32> -> vector<8x512xf32>
    %481 = arith.addf %478, %480 : vector<8x512xf32>
    %482 = vector.extract_strided_slice %481 {offsets = [0, 0], sizes = [8, 128], strides = [1, 1]} : vector<8x512xf32> to vector<8x128xf32>
    %483 = arith.negf %482 : vector<8x128xf32>
    %484 = math.exp %483 : vector<8x128xf32>
    %cst_146 = arith.constant 1.000000e+00 : f32
    %485 = vector.broadcast %cst_146 : f32 to vector<8x128xf32>
    %486 = arith.addf %485, %484 : vector<8x128xf32>
    %487 = arith.divf %485, %486 : vector<8x128xf32>
    %488 = vector.extract_strided_slice %481 {offsets = [0, 128], sizes = [8, 128], strides = [1, 1]} : vector<8x512xf32> to vector<8x128xf32>
    %489 = arith.negf %488 : vector<8x128xf32>
    %490 = math.exp %489 : vector<8x128xf32>
    %cst_147 = arith.constant 1.000000e+00 : f32
    %491 = vector.broadcast %cst_147 : f32 to vector<8x128xf32>
    %492 = arith.addf %491, %490 : vector<8x128xf32>
    %493 = arith.divf %491, %492 : vector<8x128xf32>
    %494 = vector.extract_strided_slice %481 {offsets = [0, 256], sizes = [8, 128], strides = [1, 1]} : vector<8x512xf32> to vector<8x128xf32>
    %495 = math.tanh %494 : vector<8x128xf32>
    %496 = vector.extract_strided_slice %481 {offsets = [0, 384], sizes = [8, 128], strides = [1, 1]} : vector<8x512xf32> to vector<8x128xf32>
    %497 = arith.negf %496 : vector<8x128xf32>
    %498 = math.exp %497 : vector<8x128xf32>
    %cst_148 = arith.constant 1.000000e+00 : f32
    %499 = vector.broadcast %cst_148 : f32 to vector<8x128xf32>
    %500 = arith.addf %499, %498 : vector<8x128xf32>
    %501 = arith.divf %499, %500 : vector<8x128xf32>
    %502 = arith.mulf %493, %444 : vector<8x128xf32>
    %503 = arith.mulf %487, %495 : vector<8x128xf32>
    %504 = arith.addf %502, %503 : vector<8x128xf32>
    %505 = math.tanh %504 : vector<8x128xf32>
    %506 = arith.mulf %501, %505 : vector<8x128xf32>
    %c56_149 = arith.constant 56 : index
    %c0_150 = arith.constant 0 : index
    %507 = vector.load %arg9[%c56_149, %c0_150] : memref<64x128xf32, #tpu.memory_space<vmem>>, vector<8x128xf32>
    tpu.vector_store %arg9[%c56_149, %c0_150], %477 {strides = array<i32>} : memref<64x128xf32, #tpu.memory_space<vmem>>, vector<8x128xf32>,
    %c0_151 = arith.constant 0 : index
    %c0_152 = arith.constant 0 : index
    %508 = vector.load %arg10[%c0_151, %c0_152] : memref<64x128xf32, #tpu.memory_space<vmem>>, vector<8x128xf32>
    tpu.vector_store %arg10[%c0_151, %c0_152], %506 {strides = array<i32>} : memref<64x128xf32, #tpu.memory_space<vmem>>, vector<8x128xf32>,
    %c0_153 = arith.constant 0 : index
    %c0_154 = arith.constant 0 : index
    %c0_155 = arith.constant 0 : index
    %509 = vector.load %arg13[%c0_153, %c0_154, %c0_155] : memref<2x8x128xf32, #tpu.memory_space<vmem>>, vector<1x8x128xf32>
    %510 = vector.shape_cast %509 : vector<1x8x128xf32> to vector<8x128xf32>
    %511 = vector.shape_cast %477 : vector<8x128xf32> to vector<1x8x128xf32>
    tpu.vector_store %arg13[%c0_153, %c0_154, %c0_155], %511 {strides = array<i32>} : memref<2x8x128xf32, #tpu.memory_space<vmem>>, vector<1x8x128xf32>,
    %c0_156 = arith.constant 0 : index
    %c0_157 = arith.constant 0 : index
    %c0_158 = arith.constant 0 : index
    %512 = vector.load %arg14[%c0_156, %c0_157, %c0_158] : memref<2x8x128xf32, #tpu.memory_space<vmem>>, vector<1x8x128xf32>
    %513 = vector.shape_cast %512 : vector<1x8x128xf32> to vector<8x128xf32>
    %514 = vector.shape_cast %475 : vector<8x128xf32> to vector<1x8x128xf32>
    tpu.vector_store %arg14[%c0_156, %c0_157, %c0_158], %514 {strides = array<i32>} : memref<2x8x128xf32, #tpu.memory_space<vmem>>, vector<1x8x128xf32>,
    %c1_159 = arith.constant 1 : index
    %c0_160 = arith.constant 0 : index
    %c0_161 = arith.constant 0 : index
    %515 = vector.load %arg13[%c1_159, %c0_160, %c0_161] : memref<2x8x128xf32, #tpu.memory_space<vmem>>, vector<1x8x128xf32>
    %516 = vector.shape_cast %515 : vector<1x8x128xf32> to vector<8x128xf32>
    %517 = vector.shape_cast %506 : vector<8x128xf32> to vector<1x8x128xf32>
    tpu.vector_store %arg13[%c1_159, %c0_160, %c0_161], %517 {strides = array<i32>} : memref<2x8x128xf32, #tpu.memory_space<vmem>>, vector<1x8x128xf32>,
    %c1_162 = arith.constant 1 : index
    %c0_163 = arith.constant 0 : index
    %c0_164 = arith.constant 0 : index
    %518 = vector.load %arg14[%c1_162, %c0_163, %c0_164] : memref<2x8x128xf32, #tpu.memory_space<vmem>>, vector<1x8x128xf32>
    %519 = vector.shape_cast %518 : vector<1x8x128xf32> to vector<8x128xf32>
    %520 = vector.shape_cast %504 : vector<8x128xf32> to vector<1x8x128xf32>
    tpu.vector_store %arg14[%c1_162, %c0_163, %c0_164], %520 {strides = array<i32>} : memref<2x8x128xf32, #tpu.memory_space<vmem>>, vector<1x8x128xf32>,
    return
  }
  func.func @transform_0(%arg0: i32) -> (i32, i32) {
    %c0_i32 = arith.constant 0 : i32
    %c0_i32_0 = arith.constant 0 : i32
    return %arg0, %c0_i32 : i32, i32
  }
  func.func @transform_1(%arg0: i32) -> (i32, i32) {
    %c0_i32 = arith.constant 0 : i32
    %0 = arith.subi %c0_i32, %arg0 : i32
    %c0_i32_0 = arith.constant 0 : i32
    %c0_i32_1 = arith.constant 0 : i32
    return %0, %c0_i32_0 : i32, i32
  }
  func.func @transform_2(%arg0: i32) -> (i32, i32) {
    %c0_i32 = arith.constant 0 : i32
    %c0_i32_0 = arith.constant 0 : i32
    %c0_i32_1 = arith.constant 0 : i32
    return %c0_i32, %c0_i32_0 : i32, i32
  }
  func.func @transform_3(%arg0: i32) -> (i32, i32) {
    %c0_i32 = arith.constant 0 : i32
    %c0_i32_0 = arith.constant 0 : i32
    %c0_i32_1 = arith.constant 0 : i32
    return %c0_i32, %c0_i32_0 : i32, i32
  }
  func.func @transform_4(%arg0: i32) -> (i32, i32) {
    %c0_i32 = arith.constant 0 : i32
    %c0_i32_0 = arith.constant 0 : i32
    %c0_i32_1 = arith.constant 0 : i32
    return %c0_i32, %c0_i32_0 : i32, i32
  }
  func.func @transform_5(%arg0: i32) -> (i32, i32) {
    %c0_i32 = arith.constant 0 : i32
    %c0_i32_0 = arith.constant 0 : i32
    %c0_i32_1 = arith.constant 0 : i32
    return %c0_i32, %c0_i32_0 : i32, i32
  }
  func.func @transform_6(%arg0: i32) -> (i32, i32) {
    %c0_i32 = arith.constant 0 : i32
    %c0_i32_0 = arith.constant 0 : i32
    %c0_i32_1 = arith.constant 0 : i32
    return %c0_i32, %c0_i32_0 : i32, i32
  }
  func.func @transform_7(%arg0: i32) -> (i32, i32) {
    %c0_i32 = arith.constant 0 : i32
    %c0_i32_0 = arith.constant 0 : i32
    %c0_i32_1 = arith.constant 0 : i32
    return %c0_i32, %c0_i32_0 : i32, i32
  }
  func.func @transform_8(%arg0: i32) -> (i32, i32) {
    %c0_i32 = arith.constant 0 : i32
    %c0_i32_0 = arith.constant 0 : i32
    return %arg0, %c0_i32 : i32, i32
  }
  func.func @transform_9(%arg0: i32) -> (i32, i32) {
    %c0_i32 = arith.constant 0 : i32
    %0 = arith.subi %c0_i32, %arg0 : i32
    %c0_i32_0 = arith.constant 0 : i32
    %c0_i32_1 = arith.constant 0 : i32
    return %0, %c0_i32_0 : i32, i32
  }
}

</mosaic_0001>

<llo_original>
// kernel: bilstm_forward.1
$region0: #{bilstm_forward.1}
  #allocation0 [shape = 'u32[]', space=smem, size = 0x4, offset = 0x4, fixed_abs, tag = 'smem constant byte address 0x4 - core index']
  #allocation1 [shape = 'u32[144,128]{1,0:T(1,128)}', space=vmem, size = 0x12000, scoped, tag = 'internal scratch']
  #allocation2 [shape = 'f32[64,512]{1,0:T(8,128)}', space=vmem, size = 0x20000, scoped, tag = 'scratch operand']
  #allocation3 [shape = 'f32[64,512]{1,0:T(8,128)}', space=vmem, size = 0x20000, scoped, tag = 'scratch operand']
  #allocation4 [shape = 'f32[2,8,128]{2,1,0:T(8,128)}', space=vmem, size = 0x2000, scoped, tag = 'scratch operand']
  #allocation5 [shape = 'f32[2,8,128]{2,1,0:T(8,128)}', space=vmem, size = 0x2000, scoped, tag = 'scratch operand']
  %s0 = inlined_call_operand.vmem [shape: f32[64,16], index: 0, kind: input, shape index: {}, may-alias: {0,1}]
  %s1 = inlined_call_operand.vmem [shape: f32[64,16], index: 1, kind: input, shape index: {}, may-alias: {0,1}]
  %s2 = inlined_call_operand.vmem [shape: bf16[16,512], index: 2, kind: input, shape index: {}]
  %s3 = inlined_call_operand.vmem [shape: bf16[128,512], index: 3, kind: input, shape index: {}]
  %s4 = inlined_call_operand.vmem [shape: f32[1,512], index: 4, kind: input, shape index: {}]
  %s5 = inlined_call_operand.vmem [shape: bf16[16,512], index: 5, kind: input, shape index: {}]
  %s6 = inlined_call_operand.vmem [shape: bf16[128,512], index: 6, kind: input, shape index: {}]
  %s7 = inlined_call_operand.vmem [shape: f32[1,512], index: 7, kind: input, shape index: {}]
  %s8 = inlined_call_operand.vmem [shape: f32[64,128], index: 8, kind: output, shape index: {0}]
  %s9 = inlined_call_operand.vmem [shape: f32[64,128], index: 9, kind: output, shape index: {1}]
  %10 = xla_tuple %s8, %s9
  %s11 = sld [smem:[#allocation0]]
  $region54: #{bilstm_forward.1} parent=0
    _
  %s13 = ssub.s32 1, %s11
  %s14 = scalar_select 0, %s13, %s11
  // Predicated region
  $region2: #{bilstm_forward.1} parent=0 // pred_check
    _
  $region3: #{bilstm_forward.1} parent=0 // pred_check_branch
    %16 = sbr.rel (0) target = $region5
  $region4: #{bilstm_forward.1} parent=0 // pred_region
    _
  $region5: #{bilstm_forward.1} parent=0 // pred_fallthru
    _
  // Predicated region
  $region6: #{bilstm_forward.1} parent=0 // pred_check
    _
  $region7: #{bilstm_forward.1} parent=0 // pred_check_branch
    %18 = sbr.rel (0) target = $region9
  $region8: #{bilstm_forward.1} parent=0 // pred_region
    %s19 = ssub.s32 0, 0
    %s20 = smul.u32 8, %s19
    %p21 = scmp.lt.s32.totalorder %s20, 7
    %s22 = scalar_select %p21, %s20, 7
    %s23 = smul.addr %s22, 8
    %s24 = scalar_lea.vmem %s1, %s23
    %s25 = ssub.s32 0, 0
    %s26 = smul.u32 8, %s25
  $region9: #{bilstm_forward.1} parent=0 // pred_fallthru
    _
  // Predicated region
  $region10: #{bilstm_forward.1} parent=0 // pred_check
    _
  $region11: #{bilstm_forward.1} parent=0 // pred_check_branch
    %28 = sbr.rel (0) target = $region13
  $region12: #{bilstm_forward.1} parent=0 // pred_region
    _
  $region13: #{bilstm_forward.1} parent=0 // pred_fallthru
    _
  // Predicated region
  $region14: #{bilstm_forward.1} parent=0 // pred_check
    _
  $region15: #{bilstm_forward.1} parent=0 // pred_check_branch
    %30 = sbr.rel (0) target = $region17
  $region16: #{bilstm_forward.1} parent=0 // pred_region
    _
  $region17: #{bilstm_forward.1} parent=0 // pred_fallthru
    _
  // Predicated region
  $region18: #{bilstm_forward.1} parent=0 // pred_check
    _
  $region19: #{bilstm_forward.1} parent=0 // pred_check_branch
    %32 = sbr.rel (0) target = $region21
  $region20: #{bilstm_forward.1} parent=0 // pred_region
    _
  $region21: #{bilstm_forward.1} parent=0 // pred_fallthru
    _
  // Predicated region
  $region22: #{bilstm_forward.1} parent=0 // pred_check
    _
  $region23: #{bilstm_forward.1} parent=0 // pred_check_branch
    %34 = sbr.rel (0) target = $region25
  $region24: #{bilstm_forward.1} parent=0 // pred_region
    _
  $region25: #{bilstm_forward.1} parent=0 // pred_fallthru
    _
  // Predicated region
  $region26: #{bilstm_forward.1} parent=0 // pred_check
    _
  $region27: #{bilstm_forward.1} parent=0 // pred_check_branch
    %36 = sbr.rel (0) target = $region29
  $region28: #{bilstm_forward.1} parent=0 // pred_region
    _
  $region29: #{bilstm_forward.1} parent=0 // pred_fallthru
    _
  // Predicated region
  $region30: #{bilstm_forward.1} parent=0 // pred_check
    _
  $region31: #{bilstm_forward.1} parent=0 // pred_check_branch
    %38 = sbr.rel (0) target = $region33
  $region32: #{bilstm_forward.1} parent=0 // pred_region
    _
  $region33: #{bilstm_forward.1} parent=0 // pred_fallthru
    _
  %s39 = ssub.s32 0, 0
  %s40 = smul.u32 8, %s39
  %p41 = scmp.lt.s32.totalorder %s40, 7
  %s42 = scalar_select %p41, %s40, 7
  %s43 = smul.addr %s42, 8
  %s44 = scalar_lea.vmem %s1, %s43
  %s45 = ssub.s32 0, 0
  %s46 = smul.u32 8, %s45
  %p47 = scmp.lt.s32.totalorder %s46, 7
  %s48 = scalar_select %p47, %s46, 7
  %s49 = smul.addr %s48, 8
  %s50 = scalar_lea.vmem %s9, %s49
  %s51 = ssub.s32 0, 0
  %s52 = smul.u32 8, %s51
  %p53 = scmp.lt.s32.totalorder %s52, 7
  %s54 = scalar_select %p53, %s52, 7
  %s55 = smul.addr %s54, 8
  %s56 = scalar_lea.vmem %s1, %s55
  %s57 = ssub.s32 0, 0
  %s58 = smul.u32 8, %s57
  %s59 = ssub.s32 0, 0
  %s60 = smul.u32 8, %s59
  %p61 = scmp.lt.s32.totalorder %s60, 7
  %s62 = scalar_select %p61, %s60, 7
  %s63 = smul.addr %s62, 8
  %s64 = scalar_lea.vmem %s9, %s63
  %s65 = ssub.s32 0, 0
  %s66 = smul.u32 8, %s65
  %p68 = scmp.eq.s32.totalorder 0, 0
  // Predicated region
  $region34: #{bilstm_forward.1} parent=0 // pred_check
    %p69 = pneg %p68
  $region35: #{bilstm_forward.1} parent=0 // pred_check_branch
    %71 = sbr.rel (%p69) target = $region37
  $region36: #{bilstm_forward.1} parent=0 // pred_region
    %72 = vst [vmem:[#allocation4] sm:$0xff] 0.0
    %73 = vst [vmem:[#allocation4 + $0x8] sm:$0xff] 0.0
    %74 = vst [vmem:[#allocation5] sm:$0xff] 0.0
    %75 = vst [vmem:[#allocation5 + $0x8] sm:$0xff] 0.0
  $region37: #{bilstm_forward.1} parent=0 // pred_fallthru
    _
  %v76 = vld [vmem:[%s0] sm:$0xff]
  %v77 = vld [vmem:[%s0 + $0x8] sm:$0xff]
  %v78 = vld [vmem:[%s0 + $0x10] sm:$0xff]
  %v79 = vld [vmem:[%s0 + $0x18] sm:$0xff]
  %v80 = vld [vmem:[%s0 + $0x20] sm:$0xff]
  %v81 = vld [vmem:[%s0 + $0x28] sm:$0xff]
  %v82 = vld [vmem:[%s0 + $0x30] sm:$0xff]
  %v83 = vld [vmem:[%s0 + $0x38] sm:$0xff]
  %v84 = vpack.c.bf16 %v77, %v76
  %v85 = vpack.c.bf16 %v79, %v78
  %v86 = vpack.c.bf16 %v81, %v80
  %v87 = vpack.c.bf16 %v83, %v82
  %v88 = vld [vmem:[%s56] sm:$0xff]
  %v89 = vld [vmem:[%s56 + $0x8] sm:$0xff]
  %v90 = vld [vmem:[%s56 + $0x10] sm:$0xff]
  %v91 = vld [vmem:[%s56 + $0x18] sm:$0xff]
  %v92 = vld [vmem:[%s56 + $0x20] sm:$0xff]
  %v93 = vld [vmem:[%s56 + $0x28] sm:$0xff]
  %v94 = vld [vmem:[%s56 + $0x30] sm:$0xff]
  %v95 = vld [vmem:[%s56 + $0x38] sm:$0xff]
  %v96 = vpack.c.bf16 %v89, %v88
  %v97 = vpack.c.bf16 %v91, %v90
  %v98 = vpack.c.bf16 %v93, %v92
  %v99 = vpack.c.bf16 %v95, %v94
  %v100 = vld [vmem:[%s2] sm:$0xff]
  %v101 = vld [vmem:[%s2 + $0x8] sm:$0xff]
  %v102 = vld [vmem:[%s2 + $0x10] sm:$0xff]
  %v103 = vld [vmem:[%s2 + $0x18] sm:$0xff]
  %v104 = vld [vmem:[%s4] sm:$0xf]
  %v106 = vlaneseq
  %v107 = vshrl.u32 %v106, 7
  %v108 = vsub.s32 0, %v107
  %v109 = vrot.slane %v104, %v108
  %v110 = vlaneseq
  %v111 = vshrl.u32 %v110, 7
  %v112 = vsub.s32 1, %v111
  %v113 = vrot.slane %v104, %v112
  %v114 = vlaneseq
  %v115 = vshrl.u32 %v114, 7
  %v116 = vsub.s32 2, %v115
  %v117 = vrot.slane %v104, %v116
  %v118 = vlaneseq
  %v119 = vshrl.u32 %v118, 7
  %v120 = vsub.s32 3, %v119
  %v121 = vrot.slane %v104, %v120
  %v130 = vunpack.c.l.b16 %v100
  %v131 = vunpack.c.h.b16 %v100
  %v132 = vunpack.c.l.b16 %v101
  %v133 = vunpack.c.h.b16 %v101
  %v134 = vunpack.c.l.b16 %v102
  %v135 = vunpack.c.h.b16 %v102
  %v136 = vunpack.c.l.b16 %v103
  %v137 = vunpack.c.h.b16 %v103
  %v138 = vpack.c.b16 %v134, %v130
  %v139 = vpack.c.b16 %v135, %v131
  %v140 = vpack.c.b16 %v136, %v132
  %v141 = vpack.c.b16 %v137, %v133
  %vm146 = vcmask 130048
  %v148 = vsel %vm146, %v84, 0
  %v151 = vsel %vm146, %v85, 0
  %v154 = vsel %vm146, %v86, 0
  %v157 = vsel %vm146, %v87, 0
  %159 = vmatprep.subr.bf16.mxu0 0
  %160 = vmatpush1.bf16.msra.mxu0 0
  %161 = vmatprep.subr.bf16.mxu0 0
  %162 = vmatpush1.bf16.msra.mxu0 0
  %163 = vmatprep.subr.bf16.mxu0 0
  %164 = vmatpush1.bf16.msra.mxu0 0
  %165 = vmatprep.subr.bf16.mxu0 0
  %166 = vmatpush1.bf16.msra.mxu0 0
  %167 = vmatprep.subr.bf16.mxu0 0
  %168 = vmatpush1.bf16.msra.mxu0 0
  %169 = vmatprep.subr.bf16.mxu0 0
  %170 = vmatpush1.bf16.msra.mxu0 0
  %171 = vmatprep.subr.bf16.mxu0 0
  %172 = vmatpush1.bf16.msra.mxu0 0
  %173 = vmatprep.subr.bf16.mxu0 %v139
  %174 = vmatpush1.bf16.msra.mxu0 %v138
  %175 = vmatprep.subr.bf16.mxu0 0
  %176 = vmatpush2.bf16.msra.mxu0 0
  %177 = vmatprep.subr.bf16.mxu0 0
  %178 = vmatpush2.bf16.msra.mxu0 0
  %179 = vmatprep.subr.bf16.mxu0 0
  %180 = vmatpush2.bf16.msra.mxu0 0
  %181 = vmatprep.subr.bf16.mxu0 0
  %182 = vmatpush2.bf16.msra.mxu0 0
  %183 = vmatprep.subr.bf16.mxu0 0
  %184 = vmatpush2.bf16.msra.mxu0 0
  %185 = vmatprep.subr.bf16.mxu0 0
  %186 = vmatpush2.bf16.msra.mxu0 0
  %187 = vmatprep.subr.bf16.mxu0 0
  %188 = vmatpush2.bf16.msra.mxu0 0
  %189 = vmatprep.subr.bf16.mxu0 0
  %190 = vmatpush2.bf16.msra.mxu0 0
  %191 = vmatprep.mubr.bf16.mxu0 0
  %192 = vmatmul.mubr.bf16.gmra.mxu0 %v148
  %v193 = vpop.f32.mrf.mxu0
  %v194 = vadd.f32 %v109, %v193
  %v195 = vpop.f32.mrf.mxu0
  %v196 = vadd.f32 %v113, %v195
  %v197 = vpop.f32.mrf.mxu0
  %v198 = vadd.f32 %v109, %v197
  %v199 = vpop.f32.mrf.mxu0
  %v200 = vadd.f32 %v113, %v199
  %201 = vmatprep.mubr.bf16.mxu0 0
  %202 = vmatmul.mubr.bf16.gmra.mxu0 %v151
  %v203 = vpop.f32.mrf.mxu0
  %v204 = vadd.f32 %v109, %v203
  %v205 = vpop.f32.mrf.mxu0
  %v206 = vadd.f32 %v113, %v205
  %v207 = vpop.f32.mrf.mxu0
  %v208 = vadd.f32 %v109, %v207
  %v209 = vpop.f32.mrf.mxu0
  %v210 = vadd.f32 %v113, %v209
  %211 = vmatprep.mubr.bf16.mxu0 0
  %212 = vmatmul.mubr.bf16.gmra.mxu0 %v154
  %v213 = vpop.f32.mrf.mxu0
  %v214 = vadd.f32 %v109, %v213
  %v215 = vpop.f32.mrf.mxu0
  %v216 = vadd.f32 %v113, %v215
  %v217 = vpop.f32.mrf.mxu0
  %v218 = vadd.f32 %v109, %v217
  %v219 = vpop.f32.mrf.mxu0
  %v220 = vadd.f32 %v113, %v219
  %221 = vmatprep.mubr.bf16.mxu0 0
  %222 = vmatmul.mubr.bf16.gmra.mxu0 %v157
  %v223 = vpop.f32.mrf.mxu0
  %v224 = vadd.f32 %v109, %v223
  %v225 = vpop.f32.mrf.mxu0
  %v226 = vadd.f32 %v113, %v225
  %v227 = vpop.f32.mrf.mxu0
  %v228 = vadd.f32 %v109, %v227
  %v229 = vpop.f32.mrf.mxu0
  %v230 = vadd.f32 %v113, %v229
  %231 = vdwg.mxu0
  %232 = vmatprep.subr.bf16.mxu0 0
  %233 = vmatpush1.bf16.msra.mxu0 0
  %234 = vmatprep.subr.bf16.mxu0 0
  %235 = vmatpush1.bf16.msra.mxu0 0
  %236 = vmatprep.subr.bf16.mxu0 0
  %237 = vmatpush1.bf16.msra.mxu0 0
  %238 = vmatprep.subr.bf16.mxu0 0
  %239 = vmatpush1.bf16.msra.mxu0 0
  %240 = vmatprep.subr.bf16.mxu0 0
  %241 = vmatpush1.bf16.msra.mxu0 0
  %242 = vmatprep.subr.bf16.mxu0 0
  %243 = vmatpush1.bf16.msra.mxu0 0
  %244 = vmatprep.subr.bf16.mxu0 0
  %245 = vmatpush1.bf16.msra.mxu0 0
  %246 = vmatprep.subr.bf16.mxu0 %v141
  %247 = vmatpush1.bf16.msra.mxu0 %v140
  %248 = vmatprep.subr.bf16.mxu0 0
  %249 = vmatpush2.bf16.msra.mxu0 0
  %250 = vmatprep.subr.bf16.mxu0 0
  %251 = vmatpush2.bf16.msra.mxu0 0
  %252 = vmatprep.subr.bf16.mxu0 0
  %253 = vmatpush2.bf16.msra.mxu0 0
  %254 = vmatprep.subr.bf16.mxu0 0
  %255 = vmatpush2.bf16.msra.mxu0 0
  %256 = vmatprep.subr.bf16.mxu0 0
  %257 = vmatpush2.bf16.msra.mxu0 0
  %258 = vmatprep.subr.bf16.mxu0 0
  %259 = vmatpush2.bf16.msra.mxu0 0
  %260 = vmatprep.subr.bf16.mxu0 0
  %261 = vmatpush2.bf16.msra.mxu0 0
  %262 = vmatprep.subr.bf16.mxu0 0
  %263 = vmatpush2.bf16.msra.mxu0 0
  %264 = vmatprep.mubr.bf16.mxu0 0
  %265 = vmatmul.mubr.bf16.gmra.mxu0 %v148
  %v266 = vpop.f32.mrf.mxu0
  %v267 = vadd.f32 %v117, %v266
  %v268 = vpop.f32.mrf.mxu0
  %v269 = vadd.f32 %v121, %v268
  %v270 = vpop.f32.mrf.mxu0
  %v271 = vadd.f32 %v117, %v270
  %v272 = vpop.f32.mrf.mxu0
  %v273 = vadd.f32 %v121, %v272
  %274 = vmatprep.mubr.bf16.mxu0 0
  %275 = vmatmul.mubr.bf16.gmra.mxu0 %v151
  %v276 = vpop.f32.mrf.mxu0
  %v277 = vadd.f32 %v117, %v276
  %v278 = vpop.f32.mrf.mxu0
  %v279 = vadd.f32 %v121, %v278
  %v280 = vpop.f32.mrf.mxu0
  %v281 = vadd.f32 %v117, %v280
  %v282 = vpop.f32.mrf.mxu0
  %v283 = vadd.f32 %v121, %v282
  %284 = vmatprep.mubr.bf16.mxu0 0
  %285 = vmatmul.mubr.bf16.gmra.mxu0 %v154
  %v286 = vpop.f32.mrf.mxu0
  %v287 = vadd.f32 %v117, %v286
  %v288 = vpop.f32.mrf.mxu0
  %v289 = vadd.f32 %v121, %v288
  %v290 = vpop.f32.mrf.mxu0
  %v291 = vadd.f32 %v117, %v290
  %v292 = vpop.f32.mrf.mxu0
  %v293 = vadd.f32 %v121, %v292
  %294 = vmatprep.mubr.bf16.mxu0 0
  %295 = vmatmul.mubr.bf16.gmra.mxu0 %v157
  %v296 = vpop.f32.mrf.mxu0
  %v297 = vadd.f32 %v117, %v296
  %v298 = vpop.f32.mrf.mxu0
  %v299 = vadd.f32 %v121, %v298
  %v300 = vpop.f32.mrf.mxu0
  %v301 = vadd.f32 %v117, %v300
  %v302 = vpop.f32.mrf.mxu0
  %v303 = vadd.f32 %v121, %v302
  %304 = vdwg.mxu0
  %305 = vst [vmem:[#allocation2] sm:$0xff] %v194
  %306 = vst [vmem:[#allocation2 + $0x8] sm:$0xff] %v196
  %307 = vst [vmem:[#allocation2 + $0x10] sm:$0xff] %v267
  %308 = vst [vmem:[#allocation2 + $0x18] sm:$0xff] %v269
  %309 = vst [vmem:[#allocation2 + $0x20] sm:$0xff] %v198
  %310 = vst [vmem:[#allocation2 + $0x28] sm:$0xff] %v200
  %311 = vst [vmem:[#allocation2 + $0x30] sm:$0xff] %v271
  %312 = vst [vmem:[#allocation2 + $0x38] sm:$0xff] %v273
  %313 = vst [vmem:[#allocation2 + $0x40] sm:$0xff] %v204
  %314 = vst [vmem:[#allocation2 + $0x48] sm:$0xff] %v206
  %315 = vst [vmem:[#allocation2 + $0x50] sm:$0xff] %v277
  %316 = vst [vmem:[#allocation2 + $0x58] sm:$0xff] %v279
  %317 = vst [vmem:[#allocation2 + $0x60] sm:$0xff] %v208
  %318 = vst [vmem:[#allocation2 + $0x68] sm:$0xff] %v210
  %319 = vst [vmem:[#allocation2 + $0x70] sm:$0xff] %v281
  %320 = vst [vmem:[#allocation2 + $0x78] sm:$0xff] %v283
  %321 = vst [vmem:[#allocation2 + $0x80] sm:$0xff] %v214
  %322 = vst [vmem:[#allocation2 + $0x88] sm:$0xff] %v216
  %323 = vst [vmem:[#allocation2 + $0x90] sm:$0xff] %v287
  %324 = vst [vmem:[#allocation2 + $0x98] sm:$0xff] %v289
  %325 = vst [vmem:[#allocation2 + $0xa0] sm:$0xff] %v218
  %326 = vst [vmem:[#allocation2 + $0xa8] sm:$0xff] %v220
  %327 = vst [vmem:[#allocation2 + $0xb0] sm:$0xff] %v291
  %328 = vst [vmem:[#allocation2 + $0xb8] sm:$0xff] %v293
  %329 = vst [vmem:[#allocation2 + $0xc0] sm:$0xff] %v224
  %330 = vst [vmem:[#allocation2 + $0xc8] sm:$0xff] %v226
  %331 = vst [vmem:[#allocation2 + $0xd0] sm:$0xff] %v297
  %332 = vst [vmem:[#allocation2 + $0xd8] sm:$0xff] %v299
  %333 = vst [vmem:[#allocation2 + $0xe0] sm:$0xff] %v228
  %334 = vst [vmem:[#allocation2 + $0xe8] sm:$0xff] %v230
  %335 = vst [vmem:[#allocation2 + $0xf0] sm:$0xff] %v301
  %336 = vst [vmem:[#allocation2 + $0xf8] sm:$0xff] %v303
  %v337 = vld [vmem:[%s5] sm:$0xff]
  %v338 = vld [vmem:[%s5 + $0x8] sm:$0xff]
  %v339 = vld [vmem:[%s5 + $0x10] sm:$0xff]
  %v340 = vld [vmem:[%s5 + $0x18] sm:$0xff]
  %v341 = vld [vmem:[%s7] sm:$0xf]
  %v343 = vlaneseq
  %v344 = vshrl.u32 %v343, 7
  %v345 = vsub.s32 0, %v344
  %v346 = vrot.slane %v341, %v345
  %v347 = vlaneseq
  %v348 = vshrl.u32 %v347, 7
  %v349 = vsub.s32 1, %v348
  %v350 = vrot.slane %v341, %v349
  %v351 = vlaneseq
  %v352 = vshrl.u32 %v351, 7
  %v353 = vsub.s32 2, %v352
  %v354 = vrot.slane %v341, %v353
  %v355 = vlaneseq
  %v356 = vshrl.u32 %v355, 7
  %v357 = vsub.s32 3, %v356
  %v358 = vrot.slane %v341, %v357
  %v367 = vunpack.c.l.b16 %v337
  %v368 = vunpack.c.h.b16 %v337
  %v369 = vunpack.c.l.b16 %v338
  %v370 = vunpack.c.h.b16 %v338
  %v371 = vunpack.c.l.b16 %v339
  %v372 = vunpack.c.h.b16 %v339
  %v373 = vunpack.c.l.b16 %v340
  %v374 = vunpack.c.h.b16 %v340
  %v375 = vpack.c.b16 %v371, %v367
  %v376 = vpack.c.b16 %v372, %v368
  %v377 = vpack.c.b16 %v373, %v369
  %v378 = vpack.c.b16 %v374, %v370
  %v384 = vsel %vm146, %v96, 0
  %v387 = vsel %vm146, %v97, 0
  %v390 = vsel %vm146, %v98, 0
  %v393 = vsel %vm146, %v99, 0
  %395 = vmatprep.subr.bf16.mxu0 0
  %396 = vmatpush1.bf16.msra.mxu0 0
  %397 = vmatprep.subr.bf16.mxu0 0
  %398 = vmatpush1.bf16.msra.mxu0 0
  %399 = vmatprep.subr.bf16.mxu0 0
  %400 = vmatpush1.bf16.msra.mxu0 0
  %401 = vmatprep.subr.bf16.mxu0 0
  %402 = vmatpush1.bf16.msra.mxu0 0
  %403 = vmatprep.subr.bf16.mxu0 0
  %404 = vmatpush1.bf16.msra.mxu0 0
  %405 = vmatprep.subr.bf16.mxu0 0
  %406 = vmatpush1.bf16.msra.mxu0 0
  %407 = vmatprep.subr.bf16.mxu0 0
  %408 = vmatpush1.bf16.msra.mxu0 0
  %409 = vmatprep.subr.bf16.mxu0 %v376
  %410 = vmatpush1.bf16.msra.mxu0 %v375
  %411 = vmatprep.subr.bf16.mxu0 0
  %412 = vmatpush2.bf16.msra.mxu0 0
  %413 = vmatprep.subr.bf16.mxu0 0
  %414 = vmatpush2.bf16.msra.mxu0 0
  %415 = vmatprep.subr.bf16.mxu0 0
  %416 = vmatpush2.bf16.msra.mxu0 0
  %417 = vmatprep.subr.bf16.mxu0 0
  %418 = vmatpush2.bf16.msra.mxu0 0
  %419 = vmatprep.subr.bf16.mxu0 0
  %420 = vmatpush2.bf16.msra.mxu0 0
  %421 = vmatprep.subr.bf16.mxu0 0
  %422 = vmatpush2.bf16.msra.mxu0 0
  %423 = vmatprep.subr.bf16.mxu0 0
  %424 = vmatpush2.bf16.msra.mxu0 0
  %425 = vmatprep.subr.bf16.mxu0 0
  %426 = vmatpush2.bf16.msra.mxu0 0
  %427 = vmatprep.mubr.bf16.mxu0 0
  %428 = vmatmul.mubr.bf16.gmra.mxu0 %v384
  %v429 = vpop.f32.mrf.mxu0
  %v430 = vadd.f32 %v346, %v429
  %v431 = vpop.f32.mrf.mxu0
  %v432 = vadd.f32 %v350, %v431
  %v433 = vpop.f32.mrf.mxu0
  %v434 = vadd.f32 %v346, %v433
  %v435 = vpop.f32.mrf.mxu0
  %v436 = vadd.f32 %v350, %v435
  %437 = vmatprep.mubr.bf16.mxu0 0
  %438 = vmatmul.mubr.bf16.gmra.mxu0 %v387
  %v439 = vpop.f32.mrf.mxu0
  %v440 = vadd.f32 %v346, %v439
  %v441 = vpop.f32.mrf.mxu0
  %v442 = vadd.f32 %v350, %v441
  %v443 = vpop.f32.mrf.mxu0
  %v444 = vadd.f32 %v346, %v443
  %v445 = vpop.f32.mrf.mxu0
  %v446 = vadd.f32 %v350, %v445
  %447 = vmatprep.mubr.bf16.mxu0 0
  %448 = vmatmul.mubr.bf16.gmra.mxu0 %v390
  %v449 = vpop.f32.mrf.mxu0
  %v450 = vadd.f32 %v346, %v449
  %v451 = vpop.f32.mrf.mxu0
  %v452 = vadd.f32 %v350, %v451
  %v453 = vpop.f32.mrf.mxu0
  %v454 = vadd.f32 %v346, %v453
  %v455 = vpop.f32.mrf.mxu0
  %v456 = vadd.f32 %v350, %v455
  %457 = vmatprep.mubr.bf16.mxu0 0
  %458 = vmatmul.mubr.bf16.gmra.mxu0 %v393
  %v459 = vpop.f32.mrf.mxu0
  %v460 = vadd.f32 %v346, %v459
  %v461 = vpop.f32.mrf.mxu0
  %v462 = vadd.f32 %v350, %v461
  %v463 = vpop.f32.mrf.mxu0
  %v464 = vadd.f32 %v346, %v463
  %v465 = vpop.f32.mrf.mxu0
  %v466 = vadd.f32 %v350, %v465
  %467 = vdwg.mxu0
  %468 = vmatprep.subr.bf16.mxu0 0
  %469 = vmatpush1.bf16.msra.mxu0 0
  %470 = vmatprep.subr.bf16.mxu0 0
  %471 = vmatpush1.bf16.msra.mxu0 0
  %472 = vmatprep.subr.bf16.mxu0 0
  %473 = vmatpush1.bf16.msra.mxu0 0
  %474 = vmatprep.subr.bf16.mxu0 0
  %475 = vmatpush1.bf16.msra.mxu0 0
  %476 = vmatprep.subr.bf16.mxu0 0
  %477 = vmatpush1.bf16.msra.mxu0 0
  %478 = vmatprep.subr.bf16.mxu0 0
  %479 = vmatpush1.bf16.msra.mxu0 0
  %480 = vmatprep.subr.bf16.mxu0 0
  %481 = vmatpush1.bf16.msra.mxu0 0
  %482 = vmatprep.subr.bf16.mxu0 %v378
  %483 = vmatpush1.bf16.msra.mxu0 %v377
  %484 = vmatprep.subr.bf16.mxu0 0
  %485 = vmatpush2.bf16.msra.mxu0 0
  %486 = vmatprep.subr.bf16.mxu0 0
  %487 = vmatpush2.bf16.msra.mxu0 0
  %488 = vmatprep.subr.bf16.mxu0 0
  %489 = vmatpush2.bf16.msra.mxu0 0
  %490 = vmatprep.subr.bf16.mxu0 0
  %491 = vmatpush2.bf16.msra.mxu0 0
  %492 = vmatprep.subr.bf16.mxu0 0
  %493 = vmatpush2.bf16.msra.mxu0 0
  %494 = vmatprep.subr.bf16.mxu0 0
  %495 = vmatpush2.bf16.msra.mxu0 0
  %496 = vmatprep.subr.bf16.mxu0 0
  %497 = vmatpush2.bf16.msra.mxu0 0
  %498 = vmatprep.subr.bf16.mxu0 0
  %499 = vmatpush2.bf16.msra.mxu0 0
  %500 = vmatprep.mubr.bf16.mxu0 0
  %501 = vmatmul.mubr.bf16.gmra.mxu0 %v384
  %v502 = vpop.f32.mrf.mxu0
  %v503 = vadd.f32 %v354, %v502
  %v504 = vpop.f32.mrf.mxu0
  %v505 = vadd.f32 %v358, %v504
  %v506 = vpop.f32.mrf.mxu0
  %v507 = vadd.f32 %v354, %v506
  %v508 = vpop.f32.mrf.mxu0
  %v509 = vadd.f32 %v358, %v508
  %510 = vmatprep.mubr.bf16.mxu0 0
  %511 = vmatmul.mubr.bf16.gmra.mxu0 %v387
  %v512 = vpop.f32.mrf.mxu0
  %v513 = vadd.f32 %v354, %v512
  %v514 = vpop.f32.mrf.mxu0
  %v515 = vadd.f32 %v358, %v514
  %v516 = vpop.f32.mrf.mxu0
  %v517 = vadd.f32 %v354, %v516
  %v518 = vpop.f32.mrf.mxu0
  %v519 = vadd.f32 %v358, %v518
  %520 = vmatprep.mubr.bf16.mxu0 0
  %521 = vmatmul.mubr.bf16.gmra.mxu0 %v390
  %v522 = vpop.f32.mrf.mxu0
  %v523 = vadd.f32 %v354, %v522
  %v524 = vpop.f32.mrf.mxu0
  %v525 = vadd.f32 %v358, %v524
  %v526 = vpop.f32.mrf.mxu0
  %v527 = vadd.f32 %v354, %v526
  %v528 = vpop.f32.mrf.mxu0
  %v529 = vadd.f32 %v358, %v528
  %530 = vmatprep.mubr.bf16.mxu0 0
  %531 = vmatmul.mubr.bf16.gmra.mxu0 %v393
  %v532 = vpop.f32.mrf.mxu0
  %v533 = vadd.f32 %v354, %v532
  %v534 = vpop.f32.mrf.mxu0
  %v535 = vadd.f32 %v358, %v534
  %v536 = vpop.f32.mrf.mxu0
  %v537 = vadd.f32 %v354, %v536
  %v538 = vpop.f32.mrf.mxu0
  %v539 = vadd.f32 %v358, %v538
  %540 = vdwg.mxu0
  %541 = vst [vmem:[#allocation3] sm:$0xff] %v430
  %542 = vst [vmem:[#allocation3 + $0x8] sm:$0xff] %v432
  %543 = vst [vmem:[#allocation3 + $0x10] sm:$0xff] %v503
  %544 = vst [vmem:[#allocation3 + $0x18] sm:$0xff] %v505
  %545 = vst [vmem:[#allocation3 + $0x20] sm:$0xff] %v434
  %546 = vst [vmem:[#allocation3 + $0x28] sm:$0xff] %v436
  %547 = vst [vmem:[#allocation3 + $0x30] sm:$0xff] %v507
  %548 = vst [vmem:[#allocation3 + $0x38] sm:$0xff] %v509
  %549 = vst [vmem:[#allocation3 + $0x40] sm:$0xff] %v440
  %550 = vst [vmem:[#allocation3 + $0x48] sm:$0xff] %v442
  %551 = vst [vmem:[#allocation3 + $0x50] sm:$0xff] %v513
  %552 = vst [vmem:[#allocation3 + $0x58] sm:$0xff] %v515
  %553 = vst [vmem:[#allocation3 + $0x60] sm:$0xff] %v444
  %554 = vst [vmem:[#allocation3 + $0x68] sm:$0xff] %v446
  %555 = vst [vmem:[#allocation3 + $0x70] sm:$0xff] %v517
  %556 = vst [vmem:[#allocation3 + $0x78] sm:$0xff] %v519
  %557 = vst [vmem:[#allocation3 + $0x80] sm:$0xff] %v450
  %558 = vst [vmem:[#allocation3 + $0x88] sm:$0xff] %v452
  %559 = vst [vmem:[#allocation3 + $0x90] sm:$0xff] %v523
  %560 = vst [vmem:[#allocation3 + $0x98] sm:$0xff] %v525
  %561 = vst [vmem:[#allocation3 + $0xa0] sm:$0xff] %v454
  %562 = vst [vmem:[#allocation3 + $0xa8] sm:$0xff] %v456
  %563 = vst [vmem:[#allocation3 + $0xb0] sm:$0xff] %v527
  %564 = vst [vmem:[#allocation3 + $0xb8] sm:$0xff] %v529
  %565 = vst [vmem:[#allocation3 + $0xc0] sm:$0xff] %v460
  %566 = vst [vmem:[#allocation3 + $0xc8] sm:$0xff] %v462
  %567 = vst [vmem:[#allocation3 + $0xd0] sm:$0xff] %v533
  %568 = vst [vmem:[#allocation3 + $0xd8] sm:$0xff] %v535
  %569 = vst [vmem:[#allocation3 + $0xe0] sm:$0xff] %v464
  %570 = vst [vmem:[#allocation3 + $0xe8] sm:$0xff] %v466
  %571 = vst [vmem:[#allocation3 + $0xf0] sm:$0xff] %v537
  %572 = vst [vmem:[#allocation3 + $0xf8] sm:$0xff] %v539
  %v573 = vld [vmem:[%s3] sm:$0xff]
  %v574 = vld [vmem:[%s3 + $0x8] sm:$0xff]
  %v575 = vld [vmem:[%s3 + $0x10] sm:$0xff]
  %v576 = vld [vmem:[%s3 + $0x18] sm:$0xff]
  %v577 = vld [vmem:[%s3 + $0x20] sm:$0xff]
  %v578 = vld [vmem:[%s3 + $0x28] sm:$0xff]
  %v579 = vld [vmem:[%s3 + $0x30] sm:$0xff]
  %v580 = vld [vmem:[%s3 + $0x38] sm:$0xff]
  %v581 = vld [vmem:[%s3 + $0x40] sm:$0xff]
  %v582 = vld [vmem:[%s3 + $0x48] sm:$0xff]
  %v583 = vld [vmem:[%s3 + $0x50] sm:$0xff]
  %v584 = vld [vmem:[%s3 + $0x58] sm:$0xff]
  %v585 = vld [vmem:[%s3 + $0x60] sm:$0xff]
  %v586 = vld [vmem:[%s3 + $0x68] sm:$0xff]
  %v587 = vld [vmem:[%s3 + $0x70] sm:$0xff]
  %v588 = vld [vmem:[%s3 + $0x78] sm:$0xff]
  %v589 = vld [vmem:[%s3 + $0x80] sm:$0xff]
  %v590 = vld [vmem:[%s3 + $0x88] sm:$0xff]
  %v591 = vld [vmem:[%s3 + $0x90] sm:$0xff]
  %v592 = vld [vmem:[%s3 + $0x98] sm:$0xff]
  %v593 = vld [vmem:[%s3 + $0xa0] sm:$0xff]
  %v594 = vld [vmem:[%s3 + $0xa8] sm:$0xff]
  %v595 = vld [vmem:[%s3 + $0xb0] sm:$0xff]
  %v596 = vld [vmem:[%s3 + $0xb8] sm:$0xff]
  %v597 = vld [vmem:[%s3 + $0xc0] sm:$0xff]
  %v598 = vld [vmem:[%s3 + $0xc8] sm:$0xff]
  %v599 = vld [vmem:[%s3 + $0xd0] sm:$0xff]
  %v600 = vld [vmem:[%s3 + $0xd8] sm:$0xff]
  %v601 = vld [vmem:[%s3 + $0xe0] sm:$0xff]
  %v602 = vld [vmem:[%s3 + $0xe8] sm:$0xff]
  %v603 = vld [vmem:[%s3 + $0xf0] sm:$0xff]
  %v604 = vld [vmem:[%s3 + $0xf8] sm:$0xff]
  %v605 = vld [vmem:[%s6] sm:$0xff]
  %v606 = vld [vmem:[%s6 + $0x8] sm:$0xff]
  %v607 = vld [vmem:[%s6 + $0x10] sm:$0xff]
  %v608 = vld [vmem:[%s6 + $0x18] sm:$0xff]
  %v609 = vld [vmem:[%s6 + $0x20] sm:$0xff]
  %v610 = vld [vmem:[%s6 + $0x28] sm:$0xff]
  %v611 = vld [vmem:[%s6 + $0x30] sm:$0xff]
  %v612 = vld [vmem:[%s6 + $0x38] sm:$0xff]
  %v613 = vld [vmem:[%s6 + $0x40] sm:$0xff]
  %v614 = vld [vmem:[%s6 + $0x48] sm:$0xff]
  %v615 = vld [vmem:[%s6 + $0x50] sm:$0xff]
  %v616 = vld [vmem:[%s6 + $0x58] sm:$0xff]
  %v617 = vld [vmem:[%s6 + $0x60] sm:$0xff]
  %v618 = vld [vmem:[%s6 + $0x68] sm:$0xff]
  %v619 = vld [vmem:[%s6 + $0x70] sm:$0xff]
  %v620 = vld [vmem:[%s6 + $0x78] sm:$0xff]
  %v621 = vld [vmem:[%s6 + $0x80] sm:$0xff]
  %v622 = vld [vmem:[%s6 + $0x88] sm:$0xff]
  %v623 = vld [vmem:[%s6 + $0x90] sm:$0xff]
  %v624 = vld [vmem:[%s6 + $0x98] sm:$0xff]
  %v625 = vld [vmem:[%s6 + $0xa0] sm:$0xff]
  %v626 = vld [vmem:[%s6 + $0xa8] sm:$0xff]
  %v627 = vld [vmem:[%s6 + $0xb0] sm:$0xff]
  %v628 = vld [vmem:[%s6 + $0xb8] sm:$0xff]
  %v629 = vld [vmem:[%s6 + $0xc0] sm:$0xff]
  %v630 = vld [vmem:[%s6 + $0xc8] sm:$0xff]
  %v631 = vld [vmem:[%s6 + $0xd0] sm:$0xff]
  %v632 = vld [vmem:[%s6 + $0xd8] sm:$0xff]
  %v633 = vld [vmem:[%s6 + $0xe0] sm:$0xff]
  %v634 = vld [vmem:[%s6 + $0xe8] sm:$0xff]
  %v635 = vld [vmem:[%s6 + $0xf0] sm:$0xff]
  %v636 = vld [vmem:[%s6 + $0xf8] sm:$0xff]
  %v637 = vld [vmem:[#allocation4] sm:$0xff]
  %v638 = vld [vmem:[#allocation5] sm:$0xff]
  %s639 = scalar_lea.vmem [#allocation4], 8
  %v640 = vld [vmem:[%s639] sm:$0xff]
  %s641 = scalar_lea.vmem [#allocation5], 8
  %v642 = vld [vmem:[%s641] sm:$0xff]
  %v643 = vld [vmem:[#allocation2] sm:$0xff]
  %v644 = vld [vmem:[#allocation2 + $0x8] sm:$0xff]
  %v645 = vld [vmem:[#allocation2 + $0x10] sm:$0xff]
  %v646 = vld [vmem:[#allocation2 + $0x18] sm:$0xff]
  %v647 = vpack.c.bf16 %v637, %v637
  %v680 = vunpack.c.l.b16 %v573
  %v681 = vunpack.c.h.b16 %v573
  %v682 = vunpack.c.l.b16 %v574
  %v683 = vunpack.c.h.b16 %v574
  %v684 = vunpack.c.l.b16 %v575
  %v685 = vunpack.c.h.b16 %v575
  %v686 = vunpack.c.l.b16 %v576
  %v687 = vunpack.c.h.b16 %v576
  %v688 = vunpack.c.l.b16 %v577
  %v689 = vunpack.c.h.b16 %v577
  %v690 = vunpack.c.l.b16 %v578
  %v691 = vunpack.c.h.b16 %v578
  %v692 = vunpack.c.l.b16 %v579
  %v693 = vunpack.c.h.b16 %v579
  %v694 = vunpack.c.l.b16 %v580
  %v695 = vunpack.c.h.b16 %v580
  %v696 = vunpack.c.l.b16 %v581
  %v697 = vunpack.c.h.b16 %v581
  %v698 = vunpack.c.l.b16 %v582
  %v699 = vunpack.c.h.b16 %v582
  %v700 = vunpack.c.l.b16 %v583
  %v701 = vunpack.c.h.b16 %v583
  %v702 = vunpack.c.l.b16 %v584
  %v703 = vunpack.c.h.b16 %v584
  %v704 = vunpack.c.l.b16 %v585
  %v705 = vunpack.c.h.b16 %v585
  %v706 = vunpack.c.l.b16 %v586
  %v707 = vunpack.c.h.b16 %v586
  %v708 = vunpack.c.l.b16 %v587
  %v709 = vunpack.c.h.b16 %v587
  %v710 = vunpack.c.l.b16 %v588
  %v711 = vunpack.c.h.b16 %v588
  %v712 = vunpack.c.l.b16 %v589
  %v713 = vunpack.c.h.b16 %v589
  %v714 = vunpack.c.l.b16 %v590
  %v715 = vunpack.c.h.b16 %v590
  %v716 = vunpack.c.l.b16 %v591
  %v717 = vunpack.c.h.b16 %v591
  %v718 = vunpack.c.l.b16 %v592
  %v719 = vunpack.c.h.b16 %v592
  %v720 = vunpack.c.l.b16 %v593
  %v721 = vunpack.c.h.b16 %v593
  %v722 = vunpack.c.l.b16 %v594
  %v723 = vunpack.c.h.b16 %v594
  %v724 = vunpack.c.l.b16 %v595
  %v725 = vunpack.c.h.b16 %v595
  %v726 = vunpack.c.l.b16 %v596
  %v727 = vunpack.c.h.b16 %v596
  %v728 = vunpack.c.l.b16 %v597
  %v729 = vunpack.c.h.b16 %v597
  %v730 = vunpack.c.l.b16 %v598
  %v731 = vunpack.c.h.b16 %v598
  %v732 = vunpack.c.l.b16 %v599
  %v733 = vunpack.c.h.b16 %v599
  %v734 = vunpack.c.l.b16 %v600
  %v735 = vunpack.c.h.b16 %v600
  %v736 = vunpack.c.l.b16 %v601
  %v737 = vunpack.c.h.b16 %v601
  %v738 = vunpack.c.l.b16 %v602
  %v739 = vunpack.c.h.b16 %v602
  %v740 = vunpack.c.l.b16 %v603
  %v741 = vunpack.c.h.b16 %v603
  %v742 = vunpack.c.l.b16 %v604
  %v743 = vunpack.c.h.b16 %v604
  %v744 = vpack.c.b16 %v684, %v680
  %v745 = vpack.c.b16 %v685, %v681
  %v746 = vpack.c.b16 %v686, %v682
  %v747 = vpack.c.b16 %v687, %v683
  %v748 = vpack.c.b16 %v692, %v688
  %v749 = vpack.c.b16 %v693, %v689
  %v750 = vpack.c.b16 %v694, %v690
  %v751 = vpack.c.b16 %v695, %v691
  %v752 = vpack.c.b16 %v700, %v696
  %v753 = vpack.c.b16 %v701, %v697
  %v754 = vpack.c.b16 %v702, %v698
  %v755 = vpack.c.b16 %v703, %v699
  %v756 = vpack.c.b16 %v708, %v704
  %v757 = vpack.c.b16 %v709, %v705
  %v758 = vpack.c.b16 %v710, %v706
  %v759 = vpack.c.b16 %v711, %v707
  %v760 = vpack.c.b16 %v716, %v712
  %v761 = vpack.c.b16 %v717, %v713
  %v762 = vpack.c.b16 %v718, %v714
  %v763 = vpack.c.b16 %v719, %v715
  %v764 = vpack.c.b16 %v724, %v720
  %v765 = vpack.c.b16 %v725, %v721
  %v766 = vpack.c.b16 %v726, %v722
  %v767 = vpack.c.b16 %v727, %v723
  %v768 = vpack.c.b16 %v732, %v728
  %v769 = vpack.c.b16 %v733, %v729
  %v770 = vpack.c.b16 %v734, %v730
  %v771 = vpack.c.b16 %v735, %v731
  %v772 = vpack.c.b16 %v740, %v736
  %v773 = vpack.c.b16 %v741, %v737
  %v774 = vpack.c.b16 %v742, %v738
  %v775 = vpack.c.b16 %v743, %v739
  %808 = vmatprep.subr.bf16.mxu0 %v773
  %809 = vmatpush1.bf16.msra.mxu0 %v772
  %810 = vmatprep.subr.bf16.mxu0 %v769
  %811 = vmatpush1.bf16.msra.mxu0 %v768
  %812 = vmatprep.subr.bf16.mxu0 %v765
  %813 = vmatpush1.bf16.msra.mxu0 %v764
  %814 = vmatprep.subr.bf16.mxu0 %v761
  %815 = vmatpush1.bf16.msra.mxu0 %v760
  %816 = vmatprep.subr.bf16.mxu0 %v757
  %817 = vmatpush1.bf16.msra.mxu0 %v756
  %818 = vmatprep.subr.bf16.mxu0 %v753
  %819 = vmatpush1.bf16.msra.mxu0 %v752
  %820 = vmatprep.subr.bf16.mxu0 %v749
  %821 = vmatpush1.bf16.msra.mxu0 %v748
  %822 = vmatprep.subr.bf16.mxu0 %v745
  %823 = vmatpush1.bf16.msra.mxu0 %v744
  %824 = vmatprep.subr.bf16.mxu0 0
  %825 = vmatpush2.bf16.msra.mxu0 0
  %826 = vmatprep.subr.bf16.mxu0 0
  %827 = vmatpush2.bf16.msra.mxu0 0
  %828 = vmatprep.subr.bf16.mxu0 0
  %829 = vmatpush2.bf16.msra.mxu0 0
  %830 = vmatprep.subr.bf16.mxu0 0
  %831 = vmatpush2.bf16.msra.mxu0 0
  %832 = vmatprep.subr.bf16.mxu0 0
  %833 = vmatpush2.bf16.msra.mxu0 0
  %834 = vmatprep.subr.bf16.mxu0 0
  %835 = vmatpush2.bf16.msra.mxu0 0
  %836 = vmatprep.subr.bf16.mxu0 0
  %837 = vmatpush2.bf16.msra.mxu0 0
  %838 = vmatprep.subr.bf16.mxu0 0
  %839 = vmatpush2.bf16.msra.mxu0 0
  %840 = vmatprep.mubr.bf16.mxu0 0
  %841 = vmatmul.mubr.bf16.gmra.mxu0 %v647
  %v842 = vpop.f32.mrf.mxu0
  %v843 = vadd.f32 0.0, %v842
  %v844 = vpop.f32.mrf.mxu0
  %v845 = vadd.f32 0.0, %v844
  %v846 = vpop.f32.mrf.mxu0
  %v847 = vpop.f32.mrf.mxu0
  %848 = vdwg.mxu0
  %849 = vmatprep.subr.bf16.mxu0 %v775
  %850 = vmatpush1.bf16.msra.mxu0 %v774
  %851 = vmatprep.subr.bf16.mxu0 %v771
  %852 = vmatpush1.bf16.msra.mxu0 %v770
  %853 = vmatprep.subr.bf16.mxu0 %v767
  %854 = vmatpush1.bf16.msra.mxu0 %v766
  %855 = vmatprep.subr.bf16.mxu0 %v763
  %856 = vmatpush1.bf16.msra.mxu0 %v762
  %857 = vmatprep.subr.bf16.mxu0 %v759
  %858 = vmatpush1.bf16.msra.mxu0 %v758
  %859 = vmatprep.subr.bf16.mxu0 %v755
  %860 = vmatpush1.bf16.msra.mxu0 %v754
  %861 = vmatprep.subr.bf16.mxu0 %v751
  %862 = vmatpush1.bf16.msra.mxu0 %v750
  %863 = vmatprep.subr.bf16.mxu0 %v747
  %864 = vmatpush1.bf16.msra.mxu0 %v746
  %865 = vmatprep.subr.bf16.mxu0 0
  %866 = vmatpush2.bf16.msra.mxu0 0
  %867 = vmatprep.subr.bf16.mxu0 0
  %868 = vmatpush2.bf16.msra.mxu0 0
  %869 = vmatprep.subr.bf16.mxu0 0
  %870 = vmatpush2.bf16.msra.mxu0 0
  %871 = vmatprep.subr.bf16.mxu0 0
  %872 = vmatpush2.bf16.msra.mxu0 0
  %873 = vmatprep.subr.bf16.mxu0 0
  %874 = vmatpush2.bf16.msra.mxu0 0
  %875 = vmatprep.subr.bf16.mxu0 0
  %876 = vmatpush2.bf16.msra.mxu0 0
  %877 = vmatprep.subr.bf16.mxu0 0
  %878 = vmatpush2.bf16.msra.mxu0 0
  %879 = vmatprep.subr.bf16.mxu0 0
  %880 = vmatpush2.bf16.msra.mxu0 0
  %881 = vmatprep.mubr.bf16.mxu0 0
  %882 = vmatmul.mubr.bf16.gmra.mxu0 %v647
  %v883 = vpop.f32.mrf.mxu0
  %v884 = vadd.f32 0.0, %v883
  %v885 = vpop.f32.mrf.mxu0
  %v886 = vadd.f32 0.0, %v885
  %v887 = vpop.f32.mrf.mxu0
  %v888 = vpop.f32.mrf.mxu0
  %889 = vdwg.mxu0
  %v890 = vadd.f32 %v643, %v843
  %v891 = vadd.f32 %v644, %v845
  %v892 = vadd.f32 %v645, %v884
  %v893 = vadd.f32 %v646, %v886
  %v894 = vxor.u32 %v890, 2147483648
  %v895 = vmul.f32 %v894, 1.442695
  %v896 = vpow.pop %v895
  %v897 = vadd.f32 %v896, 1.0
  %v898 = vrcp.pop %v897
  %v899 = vmul.f32 1.0, %v898
  %v900 = vxor.u32 %v891, 2147483648
  %v901 = vmul.f32 %v900, 1.442695
  %v902 = vpow.pop %v901
  %v903 = vadd.f32 %v902, 1.0
  %v904 = vrcp.pop %v903
  %v905 = vmul.f32 1.0, %v904
  %v906 = vtanh.pop %v892
  %v907 = vxor.u32 %v893, 2147483648
  %v908 = vmul.f32 %v907, 1.442695
  %v909 = vpow.pop %v908
  %v910 = vadd.f32 %v909, 1.0
  %v911 = vrcp.pop %v910
  %v912 = vmul.f32 1.0, %v911
  %v913 = vmul.f32 %v905, %v638
  %v914 = vmul.f32 %v899, %v906
  %v915 = vadd.f32 %v913, %v914
  %v916 = vtanh.pop %v915
  %v917 = vmul.f32 %v912, %v916
  %v918 = vld [vmem:[#allocation3 + $0xe0] sm:$0xff]
  %v919 = vld [vmem:[#allocation3 + $0xe8] sm:$0xff]
  %v920 = vld [vmem:[#allocation3 + $0xf0] sm:$0xff]
  %v921 = vld [vmem:[#allocation3 + $0xf8] sm:$0xff]
  %v922 = vpack.c.bf16 %v640, %v640
  %v955 = vunpack.c.l.b16 %v605
  %v956 = vunpack.c.h.b16 %v605
  %v957 = vunpack.c.l.b16 %v606
  %v958 = vunpack.c.h.b16 %v606
  %v959 = vunpack.c.l.b16 %v607
  %v960 = vunpack.c.h.b16 %v607
  %v961 = vunpack.c.l.b16 %v608
  %v962 = vunpack.c.h.b16 %v608
  %v963 = vunpack.c.l.b16 %v609
  %v964 = vunpack.c.h.b16 %v609
  %v965 = vunpack.c.l.b16 %v610
  %v966 = vunpack.c.h.b16 %v610
  %v967 = vunpack.c.l.b16 %v611
  %v968 = vunpack.c.h.b16 %v611
  %v969 = vunpack.c.l.b16 %v612
  %v970 = vunpack.c.h.b16 %v612
  %v971 = vunpack.c.l.b16 %v613
  %v972 = vunpack.c.h.b16 %v613
  %v973 = vunpack.c.l.b16 %v614
  %v974 = vunpack.c.h.b16 %v614
  %v975 = vunpack.c.l.b16 %v615
  %v976 = vunpack.c.h.b16 %v615
  %v977 = vunpack.c.l.b16 %v616
  %v978 = vunpack.c.h.b16 %v616
  %v979 = vunpack.c.l.b16 %v617
  %v980 = vunpack.c.h.b16 %v617
  %v981 = vunpack.c.l.b16 %v618
  %v982 = vunpack.c.h.b16 %v618
  %v983 = vunpack.c.l.b16 %v619
  %v984 = vunpack.c.h.b16 %v619
  %v985 = vunpack.c.l.b16 %v620
  %v986 = vunpack.c.h.b16 %v620
  %v987 = vunpack.c.l.b16 %v621
  %v988 = vunpack.c.h.b16 %v621
  %v989 = vunpack.c.l.b16 %v622
  %v990 = vunpack.c.h.b16 %v622
  %v991 = vunpack.c.l.b16 %v623
  %v992 = vunpack.c.h.b16 %v623
  %v993 = vunpack.c.l.b16 %v624
  %v994 = vunpack.c.h.b16 %v624
  %v995 = vunpack.c.l.b16 %v625
  %v996 = vunpack.c.h.b16 %v625
  %v997 = vunpack.c.l.b16 %v626
  %v998 = vunpack.c.h.b16 %v626
  %v999 = vunpack.c.l.b16 %v627
  %v1000 = vunpack.c.h.b16 %v627
  %v1001 = vunpack.c.l.b16 %v628
  %v1002 = vunpack.c.h.b16 %v628
  %v1003 = vunpack.c.l.b16 %v629
  %v1004 = vunpack.c.h.b16 %v629
  %v1005 = vunpack.c.l.b16 %v630
  %v1006 = vunpack.c.h.b16 %v630
  %v1007 = vunpack.c.l.b16 %v631
  %v1008 = vunpack.c.h.b16 %v631
  %v1009 = vunpack.c.l.b16 %v632
  %v1010 = vunpack.c.h.b16 %v632
  %v1011 = vunpack.c.l.b16 %v633
  %v1012 = vunpack.c.h.b16 %v633
  %v1013 = vunpack.c.l.b16 %v634
  %v1014 = vunpack.c.h.b16 %v634
  %v1015 = vunpack.c.l.b16 %v635
  %v1016 = vunpack.c.h.b16 %v635
  %v1017 = vunpack.c.l.b16 %v636
  %v1018 = vunpack.c.h.b16 %v636
  %v1019 = vpack.c.b16 %v959, %v955
  %v1020 = vpack.c.b16 %v960, %v956
  %v1021 = vpack.c.b16 %v961, %v957
  %v1022 = vpack.c.b16 %v962, %v958
  %v1023 = vpack.c.b16 %v967, %v963
  %v1024 = vpack.c.b16 %v968, %v964
  %v1025 = vpack.c.b16 %v969, %v965
  %v1026 = vpack.c.b16 %v970, %v966
  %v1027 = vpack.c.b16 %v975, %v971
  %v1028 = vpack.c.b16 %v976, %v972
  %v1029 = vpack.c.b16 %v977, %v973
  %v1030 = vpack.c.b16 %v978, %v974
  %v1031 = vpack.c.b16 %v983, %v979
  %v1032 = vpack.c.b16 %v984, %v980
  %v1033 = vpack.c.b16 %v985, %v981
  %v1034 = vpack.c.b16 %v986, %v982
  %v1035 = vpack.c.b16 %v991, %v987
  %v1036 = vpack.c.b16 %v992, %v988
  %v1037 = vpack.c.b16 %v993, %v989
  %v1038 = vpack.c.b16 %v994, %v990
  %v1039 = vpack.c.b16 %v999, %v995
  %v1040 = vpack.c.b16 %v1000, %v996
  %v1041 = vpack.c.b16 %v1001, %v997
  %v1042 = vpack.c.b16 %v1002, %v998
  %v1043 = vpack.c.b16 %v1007, %v1003
  %v1044 = vpack.c.b16 %v1008, %v1004
  %v1045 = vpack.c.b16 %v1009, %v1005
  %v1046 = vpack.c.b16 %v1010, %v1006
  %v1047 = vpack.c.b16 %v1015, %v1011
  %v1048 = vpack.c.b16 %v1016, %v1012
  %v1049 = vpack.c.b16 %v1017, %v1013
  %v1050 = vpack.c.b16 %v1018, %v1014
  %1083 = vmatprep.subr.bf16.mxu0 %v1048
  %1084 = vmatpush1.bf16.msra.mxu0 %v1047
  %1085 = vmatprep.subr.bf16.mxu0 %v1044
  %1086 = vmatpush1.bf16.msra.mxu0 %v1043
  %1087 = vmatprep.subr.bf16.mxu0 %v1040
  %1088 = vmatpush1.bf16.msra.mxu0 %v1039
  %1089 = vmatprep.subr.bf16.mxu0 %v1036
  %1090 = vmatpush1.bf16.msra.mxu0 %v1035
  %1091 = vmatprep.subr.bf16.mxu0 %v1032
  %1092 = vmatpush1.bf16.msra.mxu0 %v1031
  %1093 = vmatprep.subr.bf16.mxu0 %v1028
  %1094 = vmatpush1.bf16.msra.mxu0 %v1027
  %1095 = vmatprep.subr.bf16.mxu0 %v1024
  %1096 = vmatpush1.bf16.msra.mxu0 %v1023
  %1097 = vmatprep.subr.bf16.mxu0 %v1020
  %1098 = vmatpush1.bf16.msra.mxu0 %v1019
  %1099 = vmatprep.subr.bf16.mxu0 0
  %1100 = vmatpush2.bf16.msra.mxu0 0
  %1101 = vmatprep.subr.bf16.mxu0 0
  %1102 = vmatpush2.bf16.msra.mxu0 0
  %1103 = vmatprep.subr.bf16.mxu0 0
  %1104 = vmatpush2.bf16.msra.mxu0 0
  %1105 = vmatprep.subr.bf16.mxu0 0
  %1106 = vmatpush2.bf16.msra.mxu0 0
  %1107 = vmatprep.subr.bf16.mxu0 0
  %1108 = vmatpush2.bf16.msra.mxu0 0
  %1109 = vmatprep.subr.bf16.mxu0 0
  %1110 = vmatpush2.bf16.msra.mxu0 0
  %1111 = vmatprep.subr.bf16.mxu0 0
  %1112 = vmatpush2.bf16.msra.mxu0 0
  %1113 = vmatprep.subr.bf16.mxu0 0
  %1114 = vmatpush2.bf16.msra.mxu0 0
  %1115 = vmatprep.mubr.bf16.mxu0 0
  %1116 = vmatmul.mubr.bf16.gmra.mxu0 %v922
  %v1117 = vpop.f32.mrf.mxu0
  %v1118 = vadd.f32 0.0, %v1117
  %v1119 = vpop.f32.mrf.mxu0
  %v1120 = vadd.f32 0.0, %v1119
  %v1121 = vpop.f32.mrf.mxu0
  %v1122 = vpop.f32.mrf.mxu0
  %1123 = vdwg.mxu0
  %1124 = vmatprep.subr.bf16.mxu0 %v1050
  %1125 = vmatpush1.bf16.msra.mxu0 %v1049
  %1126 = vmatprep.subr.bf16.mxu0 %v1046
  %1127 = vmatpush1.bf16.msra.mxu0 %v1045
  %1128 = vmatprep.subr.bf16.mxu0 %v1042
  %1129 = vmatpush1.bf16.msra.mxu0 %v1041
  %1130 = vmatprep.subr.bf16.mxu0 %v1038
  %1131 = vmatpush1.bf16.msra.mxu0 %v1037
  %1132 = vmatprep.subr.bf16.mxu0 %v1034
  %1133 = vmatpush1.bf16.msra.mxu0 %v1033
  %1134 = vmatprep.subr.bf16.mxu0 %v1030
  %1135 = vmatpush1.bf16.msra.mxu0 %v1029
  %1136 = vmatprep.subr.bf16.mxu0 %v1026
  %1137 = vmatpush1.bf16.msra.mxu0 %v1025
  %1138 = vmatprep.subr.bf16.mxu0 %v1022
  %1139 = vmatpush1.bf16.msra.mxu0 %v1021
  %1140 = vmatprep.subr.bf16.mxu0 0
  %1141 = vmatpush2.bf16.msra.mxu0 0
  %1142 = vmatprep.subr.bf16.mxu0 0
  %1143 = vmatpush2.bf16.msra.mxu0 0
  %1144 = vmatprep.subr.bf16.mxu0 0
  %1145 = vmatpush2.bf16.msra.mxu0 0
  %1146 = vmatprep.subr.bf16.mxu0 0
  %1147 = vmatpush2.bf16.msra.mxu0 0
  %1148 = vmatprep.subr.bf16.mxu0 0
  %1149 = vmatpush2.bf16.msra.mxu0 0
  %1150 = vmatprep.subr.bf16.mxu0 0
  %1151 = vmatpush2.bf16.msra.mxu0 0
  %1152 = vmatprep.subr.bf16.mxu0 0
  %1153 = vmatpush2.bf16.msra.mxu0 0
  %1154 = vmatprep.subr.bf16.mxu0 0
  %1155 = vmatpush2.bf16.msra.mxu0 0
  %1156 = vmatprep.mubr.bf16.mxu0 0
  %1157 = vmatmul.mubr.bf16.gmra.mxu0 %v922
  %v1158 = vpop.f32.mrf.mxu0
  %v1159 = vadd.f32 0.0, %v1158
  %v1160 = vpop.f32.mrf.mxu0
  %v1161 = vadd.f32 0.0, %v1160
  %v1162 = vpop.f32.mrf.mxu0
  %v1163 = vpop.f32.mrf.mxu0
  %1164 = vdwg.mxu0
  %v1165 = vadd.f32 %v918, %v1118
  %v1166 = vadd.f32 %v919, %v1120
  %v1167 = vadd.f32 %v920, %v1159
  %v1168 = vadd.f32 %v921, %v1161
  %v1169 = vxor.u32 %v1165, 2147483648
  %v1170 = vmul.f32 %v1169, 1.442695
  %v1171 = vpow.pop %v1170
  %v1172 = vadd.f32 %v1171, 1.0
  %v1173 = vrcp.pop %v1172
  %v1174 = vmul.f32 1.0, %v1173
  %v1175 = vxor.u32 %v1166, 2147483648
  %v1176 = vmul.f32 %v1175, 1.442695
  %v1177 = vpow.pop %v1176
  %v1178 = vadd.f32 %v1177, 1.0
  %v1179 = vrcp.pop %v1178
  %v1180 = vmul.f32 1.0, %v1179
  %v1181 = vtanh.pop %v1167
  %v1182 = vxor.u32 %v1168, 2147483648
  %v1183 = vmul.f32 %v1182, 1.442695
  %v1184 = vpow.pop %v1183
  %v1185 = vadd.f32 %v1184, 1.0
  %v1186 = vrcp.pop %v1185
  %v1187 = vmul.f32 1.0, %v1186
  %v1188 = vmul.f32 %v1180, %v642
  %v1189 = vmul.f32 %v1174, %v1181
  %v1190 = vadd.f32 %v1188, %v1189
  %v1191 = vtanh.pop %v1190
  %v1192 = vmul.f32 %v1187, %v1191
  %1193 = vst [vmem:[%s8] sm:$0xff] %v917
  %1194 = vst [vmem:[%s64 + $0x38] sm:$0xff] %v1192
  %v1195 = vld [vmem:[#allocation2 + $0x20] sm:$0xff]
  %v1196 = vld [vmem:[#allocation2 + $0x28] sm:$0xff]
  %v1197 = vld [vmem:[#allocation2 + $0x30] sm:$0xff]
  %v1198 = vld [vmem:[#allocation2 + $0x38] sm:$0xff]
  %v1199 = vpack.c.bf16 %v917, %v917
  %1200 = vmatprep.subr.bf16.mxu0 %v773
  %1201 = vmatpush1.bf16.msra.mxu0 %v772
  %1202 = vmatprep.subr.bf16.mxu0 %v769
  %1203 = vmatpush1.bf16.msra.mxu0 %v768
  %1204 = vmatprep.subr.bf16.mxu0 %v765
  %1205 = vmatpush1.bf16.msra.mxu0 %v764
  %1206 = vmatprep.subr.bf16.mxu0 %v761
  %1207 = vmatpush1.bf16.msra.mxu0 %v760
  %1208 = vmatprep.subr.bf16.mxu0 %v757
  %1209 = vmatpush1.bf16.msra.mxu0 %v756
  %1210 = vmatprep.subr.bf16.mxu0 %v753
  %1211 = vmatpush1.bf16.msra.mxu0 %v752
  %1212 = vmatprep.subr.bf16.mxu0 %v749
  %1213 = vmatpush1.bf16.msra.mxu0 %v748
  %1214 = vmatprep.subr.bf16.mxu0 %v745
  %1215 = vmatpush1.bf16.msra.mxu0 %v744
  %1216 = vmatprep.subr.bf16.mxu0 0
  %1217 = vmatpush2.bf16.msra.mxu0 0
  %1218 = vmatprep.subr.bf16.mxu0 0
  %1219 = vmatpush2.bf16.msra.mxu0 0
  %1220 = vmatprep.subr.bf16.mxu0 0
  %1221 = vmatpush2.bf16.msra.mxu0 0
  %1222 = vmatprep.subr.bf16.mxu0 0
  %1223 = vmatpush2.bf16.msra.mxu0 0
  %1224 = vmatprep.subr.bf16.mxu0 0
  %1225 = vmatpush2.bf16.msra.mxu0 0
  %1226 = vmatprep.subr.bf16.mxu0 0
  %1227 = vmatpush2.bf16.msra.mxu0 0
  %1228 = vmatprep.subr.bf16.mxu0 0
  %1229 = vmatpush2.bf16.msra.mxu0 0
  %1230 = vmatprep.subr.bf16.mxu0 0
  %1231 = vmatpush2.bf16.msra.mxu0 0
  %1232 = vmatprep.mubr.bf16.mxu0 0
  %1233 = vmatmul.mubr.bf16.gmra.mxu0 %v1199
  %v1234 = vpop.f32.mrf.mxu0
  %v1235 = vadd.f32 0.0, %v1234
  %v1236 = vpop.f32.mrf.mxu0
  %v1237 = vadd.f32 0.0, %v1236
  %v1238 = vpop.f32.mrf.mxu0
  %v1239 = vpop.f32.mrf.mxu0
  %1240 = vdwg.mxu0
  %1241 = vmatprep.subr.bf16.mxu0 %v775
  %1242 = vmatpush1.bf16.msra.mxu0 %v774
  %1243 = vmatprep.subr.bf16.mxu0 %v771
  %1244 = vmatpush1.bf16.msra.mxu0 %v770
  %1245 = vmatprep.subr.bf16.mxu0 %v767
  %1246 = vmatpush1.bf16.msra.mxu0 %v766
  %1247 = vmatprep.subr.bf16.mxu0 %v763
  %1248 = vmatpush1.bf16.msra.mxu0 %v762
  %1249 = vmatprep.subr.bf16.mxu0 %v759
  %1250 = vmatpush1.bf16.msra.mxu0 %v758
  %1251 = vmatprep.subr.bf16.mxu0 %v755
  %1252 = vmatpush1.bf16.msra.mxu0 %v754
  %1253 = vmatprep.subr.bf16.mxu0 %v751
  %1254 = vmatpush1.bf16.msra.mxu0 %v750
  %1255 = vmatprep.subr.bf16.mxu0 %v747
  %1256 = vmatpush1.bf16.msra.mxu0 %v746
  %1257 = vmatprep.subr.bf16.mxu0 0
  %1258 = vmatpush2.bf16.msra.mxu0 0
  %1259 = vmatprep.subr.bf16.mxu0 0
  %1260 = vmatpush2.bf16.msra.mxu0 0
  %1261 = vmatprep.subr.bf16.mxu0 0
  %1262 = vmatpush2.bf16.msra.mxu0 0
  %1263 = vmatprep.subr.bf16.mxu0 0
  %1264 = vmatpush2.bf16.msra.mxu0 0
  %1265 = vmatprep.subr.bf16.mxu0 0
  %1266 = vmatpush2.bf16.msra.mxu0 0
  %1267 = vmatprep.subr.bf16.mxu0 0
  %1268 = vmatpush2.bf16.msra.mxu0 0
  %1269 = vmatprep.subr.bf16.mxu0 0
  %1270 = vmatpush2.bf16.msra.mxu0 0
  %1271 = vmatprep.subr.bf16.mxu0 0
  %1272 = vmatpush2.bf16.msra.mxu0 0
  %1273 = vmatprep.mubr.bf16.mxu0 0
  %1274 = vmatmul.mubr.bf16.gmra.mxu0 %v1199
  %v1275 = vpop.f32.mrf.mxu0
  %v1276 = vadd.f32 0.0, %v1275
  %v1277 = vpop.f32.mrf.mxu0
  %v1278 = vadd.f32 0.0, %v1277
  %v1279 = vpop.f32.mrf.mxu0
  %v1280 = vpop.f32.mrf.mxu0
  %1281 = vdwg.mxu0
  %v1282 = vadd.f32 %v1195, %v1235
  %v1283 = vadd.f32 %v1196, %v1237
  %v1284 = vadd.f32 %v1197, %v1276
  %v1285 = vadd.f32 %v1198, %v1278
  %v1286 = vxor.u32 %v1282, 2147483648
  %v1287 = vmul.f32 %v1286, 1.442695
  %v1288 = vpow.pop %v1287
  %v1289 = vadd.f32 %v1288, 1.0
  %v1290 = vrcp.pop %v1289
  %v1291 = vmul.f32 1.0, %v1290
  %v1292 = vxor.u32 %v1283, 2147483648
  %v1293 = vmul.f32 %v1292, 1.442695
  %v1294 = vpow.pop %v1293
  %v1295 = vadd.f32 %v1294, 1.0
  %v1296 = vrcp.pop %v1295
  %v1297 = vmul.f32 1.0, %v1296
  %v1298 = vtanh.pop %v1284
  %v1299 = vxor.u32 %v1285, 2147483648
  %v1300 = vmul.f32 %v1299, 1.442695
  %v1301 = vpow.pop %v1300
  %v1302 = vadd.f32 %v1301, 1.0
  %v1303 = vrcp.pop %v1302
  %v1304 = vmul.f32 1.0, %v1303
  %v1305 = vmul.f32 %v1297, %v915
  %v1306 = vmul.f32 %v1291, %v1298
  %v1307 = vadd.f32 %v1305, %v1306
  %v1308 = vtanh.pop %v1307
  %v1309 = vmul.f32 %v1304, %v1308
  %v1310 = vld [vmem:[#allocation3 + $0xc0] sm:$0xff]
  %v1311 = vld [vmem:[#allocation3 + $0xc8] sm:$0xff]
  %v1312 = vld [vmem:[#allocation3 + $0xd0] sm:$0xff]
  %v1313 = vld [vmem:[#allocation3 + $0xd8] sm:$0xff]
  %v1314 = vpack.c.bf16 %v1192, %v1192
  %1315 = vmatprep.subr.bf16.mxu0 %v1048
  %1316 = vmatpush1.bf16.msra.mxu0 %v1047
  %1317 = vmatprep.subr.bf16.mxu0 %v1044
  %1318 = vmatpush1.bf16.msra.mxu0 %v1043
  %1319 = vmatprep.subr.bf16.mxu0 %v1040
  %1320 = vmatpush1.bf16.msra.mxu0 %v1039
  %1321 = vmatprep.subr.bf16.mxu0 %v1036
  %1322 = vmatpush1.bf16.msra.mxu0 %v1035
  %1323 = vmatprep.subr.bf16.mxu0 %v1032
  %1324 = vmatpush1.bf16.msra.mxu0 %v1031
  %1325 = vmatprep.subr.bf16.mxu0 %v1028
  %1326 = vmatpush1.bf16.msra.mxu0 %v1027
  %1327 = vmatprep.subr.bf16.mxu0 %v1024
  %1328 = vmatpush1.bf16.msra.mxu0 %v1023
  %1329 = vmatprep.subr.bf16.mxu0 %v1020
  %1330 = vmatpush1.bf16.msra.mxu0 %v1019
  %1331 = vmatprep.subr.bf16.mxu0 0
  %1332 = vmatpush2.bf16.msra.mxu0 0
  %1333 = vmatprep.subr.bf16.mxu0 0
  %1334 = vmatpush2.bf16.msra.mxu0 0
  %1335 = vmatprep.subr.bf16.mxu0 0
  %1336 = vmatpush2.bf16.msra.mxu0 0
  %1337 = vmatprep.subr.bf16.mxu0 0
  %1338 = vmatpush2.bf16.msra.mxu0 0
  %1339 = vmatprep.subr.bf16.mxu0 0
  %1340 = vmatpush2.bf16.msra.mxu0 0
  %1341 = vmatprep.subr.bf16.mxu0 0
  %1342 = vmatpush2.bf16.msra.mxu0 0
  %1343 = vmatprep.subr.bf16.mxu0 0
  %1344 = vmatpush2.bf16.msra.mxu0 0
  %1345 = vmatprep.subr.bf16.mxu0 0
  %1346 = vmatpush2.bf16.msra.mxu0 0
  %1347 = vmatprep.mubr.bf16.mxu0 0
  %1348 = vmatmul.mubr.bf16.gmra.mxu0 %v1314
  %v1349 = vpop.f32.mrf.mxu0
  %v1350 = vadd.f32 0.0, %v1349
  %v1351 = vpop.f32.mrf.mxu0
  %v1352 = vadd.f32 0.0, %v1351
  %v1353 = vpop.f32.mrf.mxu0
  %v1354 = vpop.f32.mrf.mxu0
  %1355 = vdwg.mxu0
  %1356 = vmatprep.subr.bf16.mxu0 %v1050
  %1357 = vmatpush1.bf16.msra.mxu0 %v1049
  %1358 = vmatprep.subr.bf16.mxu0 %v1046
  %1359 = vmatpush1.bf16.msra.mxu0 %v1045
  %1360 = vmatprep.subr.bf16.mxu0 %v1042
  %1361 = vmatpush1.bf16.msra.mxu0 %v1041
  %1362 = vmatprep.subr.bf16.mxu0 %v1038
  %1363 = vmatpush1.bf16.msra.mxu0 %v1037
  %1364 = vmatprep.subr.bf16.mxu0 %v1034
  %1365 = vmatpush1.bf16.msra.mxu0 %v1033
  %1366 = vmatprep.subr.bf16.mxu0 %v1030
  %1367 = vmatpush1.bf16.msra.mxu0 %v1029
  %1368 = vmatprep.subr.bf16.mxu0 %v1026
  %1369 = vmatpush1.bf16.msra.mxu0 %v1025
  %1370 = vmatprep.subr.bf16.mxu0 %v1022
  %1371 = vmatpush1.bf16.msra.mxu0 %v1021
  %1372 = vmatprep.subr.bf16.mxu0 0
  %1373 = vmatpush2.bf16.msra.mxu0 0
  %1374 = vmatprep.subr.bf16.mxu0 0
  %1375 = vmatpush2.bf16.msra.mxu0 0
  %1376 = vmatprep.subr.bf16.mxu0 0
  %1377 = vmatpush2.bf16.msra.mxu0 0
  %1378 = vmatprep.subr.bf16.mxu0 0
  %1379 = vmatpush2.bf16.msra.mxu0 0
  %1380 = vmatprep.subr.bf16.mxu0 0
  %1381 = vmatpush2.bf16.msra.mxu0 0
  %1382 = vmatprep.subr.bf16.mxu0 0
  %1383 = vmatpush2.bf16.msra.mxu0 0
  %1384 = vmatprep.subr.bf16.mxu0 0
  %1385 = vmatpush2.bf16.msra.mxu0 0
  %1386 = vmatprep.subr.bf16.mxu0 0
  %1387 = vmatpush2.bf16.msra.mxu0 0
  %1388 = vmatprep.mubr.bf16.mxu0 0
  %1389 = vmatmul.mubr.bf16.gmra.mxu0 %v1314
  %v1390 = vpop.f32.mrf.mxu0
  %v1391 = vadd.f32 0.0, %v1390
  %v1392 = vpop.f32.mrf.mxu0
  %v1393 = vadd.f32 0.0, %v1392
  %v1394 = vpop.f32.mrf.mxu0
  %v1395 = vpop.f32.mrf.mxu0
  %1396 = vdwg.mxu0
  %v1397 = vadd.f32 %v1310, %v1350
  %v1398 = vadd.f32 %v1311, %v1352
  %v1399 = vadd.f32 %v1312, %v1391
  %v1400 = vadd.f32 %v1313, %v1393
  %v1401 = vxor.u32 %v1397, 2147483648
  %v1402 = vmul.f32 %v1401, 1.442695
  %v1403 = vpow.pop %v1402
  %v1404 = vadd.f32 %v1403, 1.0
  %v1405 = vrcp.pop %v1404
  %v1406 = vmul.f32 1.0, %v1405
  %v1407 = vxor.u32 %v1398, 2147483648
  %v1408 = vmul.f32 %v1407, 1.442695
  %v1409 = vpow.pop %v1408
  %v1410 = vadd.f32 %v1409, 1.0
  %v1411 = vrcp.pop %v1410
  %v1412 = vmul.f32 1.0, %v1411
  %v1413 = vtanh.pop %v1399
  %v1414 = vxor.u32 %v1400, 2147483648
  %v1415 = vmul.f32 %v1414, 1.442695
  %v1416 = vpow.pop %v1415
  %v1417 = vadd.f32 %v1416, 1.0
  %v1418 = vrcp.pop %v1417
  %v1419 = vmul.f32 1.0, %v1418
  %v1420 = vmul.f32 %v1412, %v1190
  %v1421 = vmul.f32 %v1406, %v1413
  %v1422 = vadd.f32 %v1420, %v1421
  %v1423 = vtanh.pop %v1422
  %v1424 = vmul.f32 %v1419, %v1423
  %1425 = vst [vmem:[%s8 + $0x8] sm:$0xff] %v1309
  %1426 = vst [vmem:[%s64 + $0x30] sm:$0xff] %v1424
  %v1427 = vld [vmem:[#allocation2 + $0x40] sm:$0xff]
  %v1428 = vld [vmem:[#allocation2 + $0x48] sm:$0xff]
  %v1429 = vld [vmem:[#allocation2 + $0x50] sm:$0xff]
  %v1430 = vld [vmem:[#allocation2 + $0x58] sm:$0xff]
  %v1431 = vpack.c.bf16 %v1309, %v1309
  %1432 = vmatprep.subr.bf16.mxu0 %v773
  %1433 = vmatpush1.bf16.msra.mxu0 %v772
  %1434 = vmatprep.subr.bf16.mxu0 %v769
  %1435 = vmatpush1.bf16.msra.mxu0 %v768
  %1436 = vmatprep.subr.bf16.mxu0 %v765
  %1437 = vmatpush1.bf16.msra.mxu0 %v764
  %1438 = vmatprep.subr.bf16.mxu0 %v761
  %1439 = vmatpush1.bf16.msra.mxu0 %v760
  %1440 = vmatprep.subr.bf16.mxu0 %v757
  %1441 = vmatpush1.bf16.msra.mxu0 %v756
  %1442 = vmatprep.subr.bf16.mxu0 %v753
  %1443 = vmatpush1.bf16.msra.mxu0 %v752
  %1444 = vmatprep.subr.bf16.mxu0 %v749
  %1445 = vmatpush1.bf16.msra.mxu0 %v748
  %1446 = vmatprep.subr.bf16.mxu0 %v745
  %1447 = vmatpush1.bf16.msra.mxu0 %v744
  %1448 = vmatprep.subr.bf16.mxu0 0
  %1449 = vmatpush2.bf16.msra.mxu0 0
  %1450 = vmatprep.subr.bf16.mxu0 0
  %1451 = vmatpush2.bf16.msra.mxu0 0
  %1452 = vmatprep.subr.bf16.mxu0 0
  %1453 = vmatpush2.bf16.msra.mxu0 0
  %1454 = vmatprep.subr.bf16.mxu0 0
  %1455 = vmatpush2.bf16.msra.mxu0 0
  %1456 = vmatprep.subr.bf16.mxu0 0
  %1457 = vmatpush2.bf16.msra.mxu0 0
  %1458 = vmatprep.subr.bf16.mxu0 0
  %1459 = vmatpush2.bf16.msra.mxu0 0
  %1460 = vmatprep.subr.bf16.mxu0 0
  %1461 = vmatpush2.bf16.msra.mxu0 0
  %1462 = vmatprep.subr.bf16.mxu0 0
  %1463 = vmatpush2.bf16.msra.mxu0 0
  %1464 = vmatprep.mubr.bf16.mxu0 0
  %1465 = vmatmul.mubr.bf16.gmra.mxu0 %v1431
  %v1466 = vpop.f32.mrf.mxu0
  %v1467 = vadd.f32 0.0, %v1466
  %v1468 = vpop.f32.mrf.mxu0
  %v1469 = vadd.f32 0.0, %v1468
  %v1470 = vpop.f32.mrf.mxu0
  %v1471 = vpop.f32.mrf.mxu0
  %1472 = vdwg.mxu0
  %1473 = vmatprep.subr.bf16.mxu0 %v775
  %1474 = vmatpush1.bf16.msra.mxu0 %v774
  %1475 = vmatprep.subr.bf16.mxu0 %v771
  %1476 = vmatpush1.bf16.msra.mxu0 %v770
  %1477 = vmatprep.subr.bf16.mxu0 %v767
  %1478 = vmatpush1.bf16.msra.mxu0 %v766
  %1479 = vmatprep.subr.bf16.mxu0 %v763
  %1480 = vmatpush1.bf16.msra.mxu0 %v762
  %1481 = vmatprep.subr.bf16.mxu0 %v759
  %1482 = vmatpush1.bf16.msra.mxu0 %v758
  %1483 = vmatprep.subr.bf16.mxu0 %v755
  %1484 = vmatpush1.bf16.msra.mxu0 %v754
  %1485 = vmatprep.subr.bf16.mxu0 %v751
  %1486 = vmatpush1.bf16.msra.mxu0 %v750
  %1487 = vmatprep.subr.bf16.mxu0 %v747
  %1488 = vmatpush1.bf16.msra.mxu0 %v746
  %1489 = vmatprep.subr.bf16.mxu0 0
  %1490 = vmatpush2.bf16.msra.mxu0 0
  %1491 = vmatprep.subr.bf16.mxu0 0
  %1492 = vmatpush2.bf16.msra.mxu0 0
  %1493 = vmatprep.subr.bf16.mxu0 0
  %1494 = vmatpush2.bf16.msra.mxu0 0
  %1495 = vmatprep.subr.bf16.mxu0 0
  %1496 = vmatpush2.bf16.msra.mxu0 0
  %1497 = vmatprep.subr.bf16.mxu0 0
  %1498 = vmatpush2.bf16.msra.mxu0 0
  %1499 = vmatprep.subr.bf16.mxu0 0
  %1500 = vmatpush2.bf16.msra.mxu0 0
  %1501 = vmatprep.subr.bf16.mxu0 0
  %1502 = vmatpush2.bf16.msra.mxu0 0
  %1503 = vmatprep.subr.bf16.mxu0 0
  %1504 = vmatpush2.bf16.msra.mxu0 0
  %1505 = vmatprep.mubr.bf16.mxu0 0
  %1506 = vmatmul.mubr.bf16.gmra.mxu0 %v1431
  %v1507 = vpop.f32.mrf.mxu0
  %v1508 = vadd.f32 0.0, %v1507
  %v1509 = vpop.f32.mrf.mxu0
  %v1510 = vadd.f32 0.0, %v1509
  %v1511 = vpop.f32.mrf.mxu0
  %v1512 = vpop.f32.mrf.mxu0
  %1513 = vdwg.mxu0
  %v1514 = vadd.f32 %v1427, %v1467
  %v1515 = vadd.f32 %v1428, %v1469
  %v1516 = vadd.f32 %v1429, %v1508
  %v1517 = vadd.f32 %v1430, %v1510
  %v1518 = vxor.u32 %v1514, 2147483648
  %v1519 = vmul.f32 %v1518, 1.442695
  %v1520 = vpow.pop %v1519
  %v1521 = vadd.f32 %v1520, 1.0
  %v1522 = vrcp.pop %v1521
  %v1523 = vmul.f32 1.0, %v1522
  %v1524 = vxor.u32 %v1515, 2147483648
  %v1525 = vmul.f32 %v1524, 1.442695
  %v1526 = vpow.pop %v1525
  %v1527 = vadd.f32 %v1526, 1.0
  %v1528 = vrcp.pop %v1527
  %v1529 = vmul.f32 1.0, %v1528
  %v1530 = vtanh.pop %v1516
  %v1531 = vxor.u32 %v1517, 2147483648
  %v1532 = vmul.f32 %v1531, 1.442695
  %v1533 = vpow.pop %v1532
  %v1534 = vadd.f32 %v1533, 1.0
  %v1535 = vrcp.pop %v1534
  %v1536 = vmul.f32 1.0, %v1535
  %v1537 = vmul.f32 %v1529, %v1307
  %v1538 = vmul.f32 %v1523, %v1530
  %v1539 = vadd.f32 %v1537, %v1538
  %v1540 = vtanh.pop %v1539
  %v1541 = vmul.f32 %v1536, %v1540
  %v1542 = vld [vmem:[#allocation3 + $0xa0] sm:$0xff]
  %v1543 = vld [vmem:[#allocation3 + $0xa8] sm:$0xff]
  %v1544 = vld [vmem:[#allocation3 + $0xb0] sm:$0xff]
  %v1545 = vld [vmem:[#allocation3 + $0xb8] sm:$0xff]
  %v1546 = vpack.c.bf16 %v1424, %v1424
  %1547 = vmatprep.subr.bf16.mxu0 %v1048
  %1548 = vmatpush1.bf16.msra.mxu0 %v1047
  %1549 = vmatprep.subr.bf16.mxu0 %v1044
  %1550 = vmatpush1.bf16.msra.mxu0 %v1043
  %1551 = vmatprep.subr.bf16.mxu0 %v1040
  %1552 = vmatpush1.bf16.msra.mxu0 %v1039
  %1553 = vmatprep.subr.bf16.mxu0 %v1036
  %1554 = vmatpush1.bf16.msra.mxu0 %v1035
  %1555 = vmatprep.subr.bf16.mxu0 %v1032
  %1556 = vmatpush1.bf16.msra.mxu0 %v1031
  %1557 = vmatprep.subr.bf16.mxu0 %v1028
  %1558 = vmatpush1.bf16.msra.mxu0 %v1027
  %1559 = vmatprep.subr.bf16.mxu0 %v1024
  %1560 = vmatpush1.bf16.msra.mxu0 %v1023
  %1561 = vmatprep.subr.bf16.mxu0 %v1020
  %1562 = vmatpush1.bf16.msra.mxu0 %v1019
  %1563 = vmatprep.subr.bf16.mxu0 0
  %1564 = vmatpush2.bf16.msra.mxu0 0
  %1565 = vmatprep.subr.bf16.mxu0 0
  %1566 = vmatpush2.bf16.msra.mxu0 0
  %1567 = vmatprep.subr.bf16.mxu0 0
  %1568 = vmatpush2.bf16.msra.mxu0 0
  %1569 = vmatprep.subr.bf16.mxu0 0
  %1570 = vmatpush2.bf16.msra.mxu0 0
  %1571 = vmatprep.subr.bf16.mxu0 0
  %1572 = vmatpush2.bf16.msra.mxu0 0
  %1573 = vmatprep.subr.bf16.mxu0 0
  %1574 = vmatpush2.bf16.msra.mxu0 0
  %1575 = vmatprep.subr.bf16.mxu0 0
  %1576 = vmatpush2.bf16.msra.mxu0 0
  %1577 = vmatprep.subr.bf16.mxu0 0
  %1578 = vmatpush2.bf16.msra.mxu0 0
  %1579 = vmatprep.mubr.bf16.mxu0 0
  %1580 = vmatmul.mubr.bf16.gmra.mxu0 %v1546
  %v1581 = vpop.f32.mrf.mxu0
  %v1582 = vadd.f32 0.0, %v1581
  %v1583 = vpop.f32.mrf.mxu0
  %v1584 = vadd.f32 0.0, %v1583
  %v1585 = vpop.f32.mrf.mxu0
  %v1586 = vpop.f32.mrf.mxu0
  %1587 = vdwg.mxu0
  %1588 = vmatprep.subr.bf16.mxu0 %v1050
  %1589 = vmatpush1.bf16.msra.mxu0 %v1049
  %1590 = vmatprep.subr.bf16.mxu0 %v1046
  %1591 = vmatpush1.bf16.msra.mxu0 %v1045
  %1592 = vmatprep.subr.bf16.mxu0 %v1042
  %1593 = vmatpush1.bf16.msra.mxu0 %v1041
  %1594 = vmatprep.subr.bf16.mxu0 %v1038
  %1595 = vmatpush1.bf16.msra.mxu0 %v1037
  %1596 = vmatprep.subr.bf16.mxu0 %v1034
  %1597 = vmatpush1.bf16.msra.mxu0 %v1033
  %1598 = vmatprep.subr.bf16.mxu0 %v1030
  %1599 = vmatpush1.bf16.msra.mxu0 %v1029
  %1600 = vmatprep.subr.bf16.mxu0 %v1026
  %1601 = vmatpush1.bf16.msra.mxu0 %v1025
  %1602 = vmatprep.subr.bf16.mxu0 %v1022
  %1603 = vmatpush1.bf16.msra.mxu0 %v1021
  %1604 = vmatprep.subr.bf16.mxu0 0
  %1605 = vmatpush2.bf16.msra.mxu0 0
  %1606 = vmatprep.subr.bf16.mxu0 0
  %1607 = vmatpush2.bf16.msra.mxu0 0
  %1608 = vmatprep.subr.bf16.mxu0 0
  %1609 = vmatpush2.bf16.msra.mxu0 0
  %1610 = vmatprep.subr.bf16.mxu0 0
  %1611 = vmatpush2.bf16.msra.mxu0 0
  %1612 = vmatprep.subr.bf16.mxu0 0
  %1613 = vmatpush2.bf16.msra.mxu0 0
  %1614 = vmatprep.subr.bf16.mxu0 0
  %1615 = vmatpush2.bf16.msra.mxu0 0
  %1616 = vmatprep.subr.bf16.mxu0 0
  %1617 = vmatpush2.bf16.msra.mxu0 0
  %1618 = vmatprep.subr.bf16.mxu0 0
  %1619 = vmatpush2.bf16.msra.mxu0 0
  %1620 = vmatprep.mubr.bf16.mxu0 0
  %1621 = vmatmul.mubr.bf16.gmra.mxu0 %v1546
  %v1622 = vpop.f32.mrf.mxu0
  %v1623 = vadd.f32 0.0, %v1622
  %v1624 = vpop.f32.mrf.mxu0
  %v1625 = vadd.f32 0.0, %v1624
  %v1626 = vpop.f32.mrf.mxu0
  %v1627 = vpop.f32.mrf.mxu0
  %1628 = vdwg.mxu0
  %v1629 = vadd.f32 %v1542, %v1582
  %v1630 = vadd.f32 %v1543, %v1584
  %v1631 = vadd.f32 %v1544, %v1623
  %v1632 = vadd.f32 %v1545, %v1625
  %v1633 = vxor.u32 %v1629, 2147483648
  %v1634 = vmul.f32 %v1633, 1.442695
  %v1635 = vpow.pop %v1634
  %v1636 = vadd.f32 %v1635, 1.0
  %v1637 = vrcp.pop %v1636
  %v1638 = vmul.f32 1.0, %v1637
  %v1639 = vxor.u32 %v1630, 2147483648
  %v1640 = vmul.f32 %v1639, 1.442695
  %v1641 = vpow.pop %v1640
  %v1642 = vadd.f32 %v1641, 1.0
  %v1643 = vrcp.pop %v1642
  %v1644 = vmul.f32 1.0, %v1643
  %v1645 = vtanh.pop %v1631
  %v1646 = vxor.u32 %v1632, 2147483648
  %v1647 = vmul.f32 %v1646, 1.442695
  %v1648 = vpow.pop %v1647
  %v1649 = vadd.f32 %v1648, 1.0
  %v1650 = vrcp.pop %v1649
  %v1651 = vmul.f32 1.0, %v1650
  %v1652 = vmul.f32 %v1644, %v1422
  %v1653 = vmul.f32 %v1638, %v1645
  %v1654 = vadd.f32 %v1652, %v1653
  %v1655 = vtanh.pop %v1654
  %v1656 = vmul.f32 %v1651, %v1655
  %1657 = vst [vmem:[%s8 + $0x10] sm:$0xff] %v1541
  %1658 = vst [vmem:[%s64 + $0x28] sm:$0xff] %v1656
  %v1659 = vld [vmem:[#allocation2 + $0x60] sm:$0xff]
  %v1660 = vld [vmem:[#allocation2 + $0x68] sm:$0xff]
  %v1661 = vld [vmem:[#allocation2 + $0x70] sm:$0xff]
  %v1662 = vld [vmem:[#allocation2 + $0x78] sm:$0xff]
  %v1663 = vpack.c.bf16 %v1541, %v1541
  %1664 = vmatprep.subr.bf16.mxu0 %v773
  %1665 = vmatpush1.bf16.msra.mxu0 %v772
  %1666 = vmatprep.subr.bf16.mxu0 %v769
  %1667 = vmatpush1.bf16.msra.mxu0 %v768
  %1668 = vmatprep.subr.bf16.mxu0 %v765
  %1669 = vmatpush1.bf16.msra.mxu0 %v764
  %1670 = vmatprep.subr.bf16.mxu0 %v761
  %1671 = vmatpush1.bf16.msra.mxu0 %v760
  %1672 = vmatprep.subr.bf16.mxu0 %v757
  %1673 = vmatpush1.bf16.msra.mxu0 %v756
  %1674 = vmatprep.subr.bf16.mxu0 %v753
  %1675 = vmatpush1.bf16.msra.mxu0 %v752
  %1676 = vmatprep.subr.bf16.mxu0 %v749
  %1677 = vmatpush1.bf16.msra.mxu0 %v748
  %1678 = vmatprep.subr.bf16.mxu0 %v745
  %1679 = vmatpush1.bf16.msra.mxu0 %v744
  %1680 = vmatprep.subr.bf16.mxu0 0
  %1681 = vmatpush2.bf16.msra.mxu0 0
  %1682 = vmatprep.subr.bf16.mxu0 0
  %1683 = vmatpush2.bf16.msra.mxu0 0
  %1684 = vmatprep.subr.bf16.mxu0 0
  %1685 = vmatpush2.bf16.msra.mxu0 0
  %1686 = vmatprep.subr.bf16.mxu0 0
  %1687 = vmatpush2.bf16.msra.mxu0 0
  %1688 = vmatprep.subr.bf16.mxu0 0
  %1689 = vmatpush2.bf16.msra.mxu0 0
  %1690 = vmatprep.subr.bf16.mxu0 0
  %1691 = vmatpush2.bf16.msra.mxu0 0
  %1692 = vmatprep.subr.bf16.mxu0 0
  %1693 = vmatpush2.bf16.msra.mxu0 0
  %1694 = vmatprep.subr.bf16.mxu0 0
  %1695 = vmatpush2.bf16.msra.mxu0 0
  %1696 = vmatprep.mubr.bf16.mxu0 0
  %1697 = vmatmul.mubr.bf16.gmra.mxu0 %v1663
  %v1698 = vpop.f32.mrf.mxu0
  %v1699 = vadd.f32 0.0, %v1698
  %v1700 = vpop.f32.mrf.mxu0
  %v1701 = vadd.f32 0.0, %v1700
  %v1702 = vpop.f32.mrf.mxu0
  %v1703 = vpop.f32.mrf.mxu0
  %1704 = vdwg.mxu0
  %1705 = vmatprep.subr.bf16.mxu0 %v775
  %1706 = vmatpush1.bf16.msra.mxu0 %v774
  %1707 = vmatprep.subr.bf16.mxu0 %v771
  %1708 = vmatpush1.bf16.msra.mxu0 %v770
  %1709 = vmatprep.subr.bf16.mxu0 %v767
  %1710 = vmatpush1.bf16.msra.mxu0 %v766
  %1711 = vmatprep.subr.bf16.mxu0 %v763
  %1712 = vmatpush1.bf16.msra.mxu0 %v762
  %1713 = vmatprep.subr.bf16.mxu0 %v759
  %1714 = vmatpush1.bf16.msra.mxu0 %v758
  %1715 = vmatprep.subr.bf16.mxu0 %v755
  %1716 = vmatpush1.bf16.msra.mxu0 %v754
  %1717 = vmatprep.subr.bf16.mxu0 %v751
  %1718 = vmatpush1.bf16.msra.mxu0 %v750
  %1719 = vmatprep.subr.bf16.mxu0 %v747
  %1720 = vmatpush1.bf16.msra.mxu0 %v746
  %1721 = vmatprep.subr.bf16.mxu0 0
  %1722 = vmatpush2.bf16.msra.mxu0 0
  %1723 = vmatprep.subr.bf16.mxu0 0
  %1724 = vmatpush2.bf16.msra.mxu0 0
  %1725 = vmatprep.subr.bf16.mxu0 0
  %1726 = vmatpush2.bf16.msra.mxu0 0
  %1727 = vmatprep.subr.bf16.mxu0 0
  %1728 = vmatpush2.bf16.msra.mxu0 0
  %1729 = vmatprep.subr.bf16.mxu0 0
  %1730 = vmatpush2.bf16.msra.mxu0 0
  %1731 = vmatprep.subr.bf16.mxu0 0
  %1732 = vmatpush2.bf16.msra.mxu0 0
  %1733 = vmatprep.subr.bf16.mxu0 0
  %1734 = vmatpush2.bf16.msra.mxu0 0
  %1735 = vmatprep.subr.bf16.mxu0 0
  %1736 = vmatpush2.bf16.msra.mxu0 0
  %1737 = vmatprep.mubr.bf16.mxu0 0
  %1738 = vmatmul.mubr.bf16.gmra.mxu0 %v1663
  %v1739 = vpop.f32.mrf.mxu0
  %v1740 = vadd.f32 0.0, %v1739
  %v1741 = vpop.f32.mrf.mxu0
  %v1742 = vadd.f32 0.0, %v1741
  %v1743 = vpop.f32.mrf.mxu0
  %v1744 = vpop.f32.mrf.mxu0
  %1745 = vdwg.mxu0
  %v1746 = vadd.f32 %v1659, %v1699
  %v1747 = vadd.f32 %v1660, %v1701
  %v1748 = vadd.f32 %v1661, %v1740
  %v1749 = vadd.f32 %v1662, %v1742
  %v1750 = vxor.u32 %v1746, 2147483648
  %v1751 = vmul.f32 %v1750, 1.442695
  %v1752 = vpow.pop %v1751
  %v1753 = vadd.f32 %v1752, 1.0
  %v1754 = vrcp.pop %v1753
  %v1755 = vmul.f32 1.0, %v1754
  %v1756 = vxor.u32 %v1747, 2147483648
  %v1757 = vmul.f32 %v1756, 1.442695
  %v1758 = vpow.pop %v1757
  %v1759 = vadd.f32 %v1758, 1.0
  %v1760 = vrcp.pop %v1759
  %v1761 = vmul.f32 1.0, %v1760
  %v1762 = vtanh.pop %v1748
  %v1763 = vxor.u32 %v1749, 2147483648
  %v1764 = vmul.f32 %v1763, 1.442695
  %v1765 = vpow.pop %v1764
  %v1766 = vadd.f32 %v1765, 1.0
  %v1767 = vrcp.pop %v1766
  %v1768 = vmul.f32 1.0, %v1767
  %v1769 = vmul.f32 %v1761, %v1539
  %v1770 = vmul.f32 %v1755, %v1762
  %v1771 = vadd.f32 %v1769, %v1770
  %v1772 = vtanh.pop %v1771
  %v1773 = vmul.f32 %v1768, %v1772
  %v1774 = vld [vmem:[#allocation3 + $0x80] sm:$0xff]
  %v1775 = vld [vmem:[#allocation3 + $0x88] sm:$0xff]
  %v1776 = vld [vmem:[#allocation3 + $0x90] sm:$0xff]
  %v1777 = vld [vmem:[#allocation3 + $0x98] sm:$0xff]
  %v1778 = vpack.c.bf16 %v1656, %v1656
  %1779 = vmatprep.subr.bf16.mxu0 %v1048
  %1780 = vmatpush1.bf16.msra.mxu0 %v1047
  %1781 = vmatprep.subr.bf16.mxu0 %v1044
  %1782 = vmatpush1.bf16.msra.mxu0 %v1043
  %1783 = vmatprep.subr.bf16.mxu0 %v1040
  %1784 = vmatpush1.bf16.msra.mxu0 %v1039
  %1785 = vmatprep.subr.bf16.mxu0 %v1036
  %1786 = vmatpush1.bf16.msra.mxu0 %v1035
  %1787 = vmatprep.subr.bf16.mxu0 %v1032
  %1788 = vmatpush1.bf16.msra.mxu0 %v1031
  %1789 = vmatprep.subr.bf16.mxu0 %v1028
  %1790 = vmatpush1.bf16.msra.mxu0 %v1027
  %1791 = vmatprep.subr.bf16.mxu0 %v1024
  %1792 = vmatpush1.bf16.msra.mxu0 %v1023
  %1793 = vmatprep.subr.bf16.mxu0 %v1020
  %1794 = vmatpush1.bf16.msra.mxu0 %v1019
  %1795 = vmatprep.subr.bf16.mxu0 0
  %1796 = vmatpush2.bf16.msra.mxu0 0
  %1797 = vmatprep.subr.bf16.mxu0 0
  %1798 = vmatpush2.bf16.msra.mxu0 0
  %1799 = vmatprep.subr.bf16.mxu0 0
  %1800 = vmatpush2.bf16.msra.mxu0 0
  %1801 = vmatprep.subr.bf16.mxu0 0
  %1802 = vmatpush2.bf16.msra.mxu0 0
  %1803 = vmatprep.subr.bf16.mxu0 0
  %1804 = vmatpush2.bf16.msra.mxu0 0
  %1805 = vmatprep.subr.bf16.mxu0 0
  %1806 = vmatpush2.bf16.msra.mxu0 0
  %1807 = vmatprep.subr.bf16.mxu0 0
  %1808 = vmatpush2.bf16.msra.mxu0 0
  %1809 = vmatprep.subr.bf16.mxu0 0
  %1810 = vmatpush2.bf16.msra.mxu0 0
  %1811 = vmatprep.mubr.bf16.mxu0 0
  %1812 = vmatmul.mubr.bf16.gmra.mxu0 %v1778
  %v1813 = vpop.f32.mrf.mxu0
  %v1814 = vadd.f32 0.0, %v1813
  %v1815 = vpop.f32.mrf.mxu0
  %v1816 = vadd.f32 0.0, %v1815
  %v1817 = vpop.f32.mrf.mxu0
  %v1818 = vpop.f32.mrf.mxu0
  %1819 = vdwg.mxu0
  %1820 = vmatprep.subr.bf16.mxu0 %v1050
  %1821 = vmatpush1.bf16.msra.mxu0 %v1049
  %1822 = vmatprep.subr.bf16.mxu0 %v1046
  %1823 = vmatpush1.bf16.msra.mxu0 %v1045
  %1824 = vmatprep.subr.bf16.mxu0 %v1042
  %1825 = vmatpush1.bf16.msra.mxu0 %v1041
  %1826 = vmatprep.subr.bf16.mxu0 %v1038
  %1827 = vmatpush1.bf16.msra.mxu0 %v1037
  %1828 = vmatprep.subr.bf16.mxu0 %v1034
  %1829 = vmatpush1.bf16.msra.mxu0 %v1033
  %1830 = vmatprep.subr.bf16.mxu0 %v1030
  %1831 = vmatpush1.bf16.msra.mxu0 %v1029
  %1832 = vmatprep.subr.bf16.mxu0 %v1026
  %1833 = vmatpush1.bf16.msra.mxu0 %v1025
  %1834 = vmatprep.subr.bf16.mxu0 %v1022
  %1835 = vmatpush1.bf16.msra.mxu0 %v1021
  %1836 = vmatprep.subr.bf16.mxu0 0
  %1837 = vmatpush2.bf16.msra.mxu0 0
  %1838 = vmatprep.subr.bf16.mxu0 0
  %1839 = vmatpush2.bf16.msra.mxu0 0
  %1840 = vmatprep.subr.bf16.mxu0 0
  %1841 = vmatpush2.bf16.msra.mxu0 0
  %1842 = vmatprep.subr.bf16.mxu0 0
  %1843 = vmatpush2.bf16.msra.mxu0 0
  %1844 = vmatprep.subr.bf16.mxu0 0
  %1845 = vmatpush2.bf16.msra.mxu0 0
  %1846 = vmatprep.subr.bf16.mxu0 0
  %1847 = vmatpush2.bf16.msra.mxu0 0
  %1848 = vmatprep.subr.bf16.mxu0 0
  %1849 = vmatpush2.bf16.msra.mxu0 0
  %1850 = vmatprep.subr.bf16.mxu0 0
  %1851 = vmatpush2.bf16.msra.mxu0 0
  %1852 = vmatprep.mubr.bf16.mxu0 0
  %1853 = vmatmul.mubr.bf16.gmra.mxu0 %v1778
  %v1854 = vpop.f32.mrf.mxu0
  %v1855 = vadd.f32 0.0, %v1854
  %v1856 = vpop.f32.mrf.mxu0
  %v1857 = vadd.f32 0.0, %v1856
  %v1858 = vpop.f32.mrf.mxu0
  %v1859 = vpop.f32.mrf.mxu0
  %1860 = vdwg.mxu0
  %v1861 = vadd.f32 %v1774, %v1814
  %v1862 = vadd.f32 %v1775, %v1816
  %v1863 = vadd.f32 %v1776, %v1855
  %v1864 = vadd.f32 %v1777, %v1857
  %v1865 = vxor.u32 %v1861, 2147483648
  %v1866 = vmul.f32 %v1865, 1.442695
  %v1867 = vpow.pop %v1866
  %v1868 = vadd.f32 %v1867, 1.0
  %v1869 = vrcp.pop %v1868
  %v1870 = vmul.f32 1.0, %v1869
  %v1871 = vxor.u32 %v1862, 2147483648
  %v1872 = vmul.f32 %v1871, 1.442695
  %v1873 = vpow.pop %v1872
  %v1874 = vadd.f32 %v1873, 1.0
  %v1875 = vrcp.pop %v1874
  %v1876 = vmul.f32 1.0, %v1875
  %v1877 = vtanh.pop %v1863
  %v1878 = vxor.u32 %v1864, 2147483648
  %v1879 = vmul.f32 %v1878, 1.442695
  %v1880 = vpow.pop %v1879
  %v1881 = vadd.f32 %v1880, 1.0
  %v1882 = vrcp.pop %v1881
  %v1883 = vmul.f32 1.0, %v1882
  %v1884 = vmul.f32 %v1876, %v1654
  %v1885 = vmul.f32 %v1870, %v1877
  %v1886 = vadd.f32 %v1884, %v1885
  %v1887 = vtanh.pop %v1886
  %v1888 = vmul.f32 %v1883, %v1887
  %1889 = vst [vmem:[%s8 + $0x18] sm:$0xff] %v1773
  %1890 = vst [vmem:[%s64 + $0x20] sm:$0xff] %v1888
  %v1891 = vld [vmem:[#allocation2 + $0x80] sm:$0xff]
  %v1892 = vld [vmem:[#allocation2 + $0x88] sm:$0xff]
  %v1893 = vld [vmem:[#allocation2 + $0x90] sm:$0xff]
  %v1894 = vld [vmem:[#allocation2 + $0x98] sm:$0xff]
  %v1895 = vpack.c.bf16 %v1773, %v1773
  %1896 = vmatprep.subr.bf16.mxu0 %v773
  %1897 = vmatpush1.bf16.msra.mxu0 %v772
  %1898 = vmatprep.subr.bf16.mxu0 %v769
  %1899 = vmatpush1.bf16.msra.mxu0 %v768
  %1900 = vmatprep.subr.bf16.mxu0 %v765
  %1901 = vmatpush1.bf16.msra.mxu0 %v764
  %1902 = vmatprep.subr.bf16.mxu0 %v761
  %1903 = vmatpush1.bf16.msra.mxu0 %v760
  %1904 = vmatprep.subr.bf16.mxu0 %v757
  %1905 = vmatpush1.bf16.msra.mxu0 %v756
  %1906 = vmatprep.subr.bf16.mxu0 %v753
  %1907 = vmatpush1.bf16.msra.mxu0 %v752
  %1908 = vmatprep.subr.bf16.mxu0 %v749
  %1909 = vmatpush1.bf16.msra.mxu0 %v748
  %1910 = vmatprep.subr.bf16.mxu0 %v745
  %1911 = vmatpush1.bf16.msra.mxu0 %v744
  %1912 = vmatprep.subr.bf16.mxu0 0
  %1913 = vmatpush2.bf16.msra.mxu0 0
  %1914 = vmatprep.subr.bf16.mxu0 0
  %1915 = vmatpush2.bf16.msra.mxu0 0
  %1916 = vmatprep.subr.bf16.mxu0 0
  %1917 = vmatpush2.bf16.msra.mxu0 0
  %1918 = vmatprep.subr.bf16.mxu0 0
  %1919 = vmatpush2.bf16.msra.mxu0 0
  %1920 = vmatprep.subr.bf16.mxu0 0
  %1921 = vmatpush2.bf16.msra.mxu0 0
  %1922 = vmatprep.subr.bf16.mxu0 0
  %1923 = vmatpush2.bf16.msra.mxu0 0
  %1924 = vmatprep.subr.bf16.mxu0 0
  %1925 = vmatpush2.bf16.msra.mxu0 0
  %1926 = vmatprep.subr.bf16.mxu0 0
  %1927 = vmatpush2.bf16.msra.mxu0 0
  %1928 = vmatprep.mubr.bf16.mxu0 0
  %1929 = vmatmul.mubr.bf16.gmra.mxu0 %v1895
  %v1930 = vpop.f32.mrf.mxu0
  %v1931 = vadd.f32 0.0, %v1930
  %v1932 = vpop.f32.mrf.mxu0
  %v1933 = vadd.f32 0.0, %v1932
  %v1934 = vpop.f32.mrf.mxu0
  %v1935 = vpop.f32.mrf.mxu0
  %1936 = vdwg.mxu0
  %1937 = vmatprep.subr.bf16.mxu0 %v775
  %1938 = vmatpush1.bf16.msra.mxu0 %v774
  %1939 = vmatprep.subr.bf16.mxu0 %v771
  %1940 = vmatpush1.bf16.msra.mxu0 %v770
  %1941 = vmatprep.subr.bf16.mxu0 %v767
  %1942 = vmatpush1.bf16.msra.mxu0 %v766
  %1943 = vmatprep.subr.bf16.mxu0 %v763
  %1944 = vmatpush1.bf16.msra.mxu0 %v762
  %1945 = vmatprep.subr.bf16.mxu0 %v759
  %1946 = vmatpush1.bf16.msra.mxu0 %v758
  %1947 = vmatprep.subr.bf16.mxu0 %v755
  %1948 = vmatpush1.bf16.msra.mxu0 %v754
  %1949 = vmatprep.subr.bf16.mxu0 %v751
  %1950 = vmatpush1.bf16.msra.mxu0 %v750
  %1951 = vmatprep.subr.bf16.mxu0 %v747
  %1952 = vmatpush1.bf16.msra.mxu0 %v746
  %1953 = vmatprep.subr.bf16.mxu0 0
  %1954 = vmatpush2.bf16.msra.mxu0 0
  %1955 = vmatprep.subr.bf16.mxu0 0
  %1956 = vmatpush2.bf16.msra.mxu0 0
  %1957 = vmatprep.subr.bf16.mxu0 0
  %1958 = vmatpush2.bf16.msra.mxu0 0
  %1959 = vmatprep.subr.bf16.mxu0 0
  %1960 = vmatpush2.bf16.msra.mxu0 0
  %1961 = vmatprep.subr.bf16.mxu0 0
  %1962 = vmatpush2.bf16.msra.mxu0 0
  %1963 = vmatprep.subr.bf16.mxu0 0
  %1964 = vmatpush2.bf16.msra.mxu0 0
  %1965 = vmatprep.subr.bf16.mxu0 0
  %1966 = vmatpush2.bf16.msra.mxu0 0
  %1967 = vmatprep.subr.bf16.mxu0 0
  %1968 = vmatpush2.bf16.msra.mxu0 0
  %1969 = vmatprep.mubr.bf16.mxu0 0
  %1970 = vmatmul.mubr.bf16.gmra.mxu0 %v1895
  %v1971 = vpop.f32.mrf.mxu0
  %v1972 = vadd.f32 0.0, %v1971
  %v1973 = vpop.f32.mrf.mxu0
  %v1974 = vadd.f32 0.0, %v1973
  %v1975 = vpop.f32.mrf.mxu0
  %v1976 = vpop.f32.mrf.mxu0
  %1977 = vdwg.mxu0
  %v1978 = vadd.f32 %v1891, %v1931
  %v1979 = vadd.f32 %v1892, %v1933
  %v1980 = vadd.f32 %v1893, %v1972
  %v1981 = vadd.f32 %v1894, %v1974
  %v1982 = vxor.u32 %v1978, 2147483648
  %v1983 = vmul.f32 %v1982, 1.442695
  %v1984 = vpow.pop %v1983
  %v1985 = vadd.f32 %v1984, 1.0
  %v1986 = vrcp.pop %v1985
  %v1987 = vmul.f32 1.0, %v1986
  %v1988 = vxor.u32 %v1979, 2147483648
  %v1989 = vmul.f32 %v1988, 1.442695
  %v1990 = vpow.pop %v1989
  %v1991 = vadd.f32 %v1990, 1.0
  %v1992 = vrcp.pop %v1991
  %v1993 = vmul.f32 1.0, %v1992
  %v1994 = vtanh.pop %v1980
  %v1995 = vxor.u32 %v1981, 2147483648
  %v1996 = vmul.f32 %v1995, 1.442695
  %v1997 = vpow.pop %v1996
  %v1998 = vadd.f32 %v1997, 1.0
  %v1999 = vrcp.pop %v1998
  %v2000 = vmul.f32 1.0, %v1999
  %v2001 = vmul.f32 %v1993, %v1771
  %v2002 = vmul.f32 %v1987, %v1994
  %v2003 = vadd.f32 %v2001, %v2002
  %v2004 = vtanh.pop %v2003
  %v2005 = vmul.f32 %v2000, %v2004
  %v2006 = vld [vmem:[#allocation3 + $0x60] sm:$0xff]
  %v2007 = vld [vmem:[#allocation3 + $0x68] sm:$0xff]
  %v2008 = vld [vmem:[#allocation3 + $0x70] sm:$0xff]
  %v2009 = vld [vmem:[#allocation3 + $0x78] sm:$0xff]
  %v2010 = vpack.c.bf16 %v1888, %v1888
  %2011 = vmatprep.subr.bf16.mxu0 %v1048
  %2012 = vmatpush1.bf16.msra.mxu0 %v1047
  %2013 = vmatprep.subr.bf16.mxu0 %v1044
  %2014 = vmatpush1.bf16.msra.mxu0 %v1043
  %2015 = vmatprep.subr.bf16.mxu0 %v1040
  %2016 = vmatpush1.bf16.msra.mxu0 %v1039
  %2017 = vmatprep.subr.bf16.mxu0 %v1036
  %2018 = vmatpush1.bf16.msra.mxu0 %v1035
  %2019 = vmatprep.subr.bf16.mxu0 %v1032
  %2020 = vmatpush1.bf16.msra.mxu0 %v1031
  %2021 = vmatprep.subr.bf16.mxu0 %v1028
  %2022 = vmatpush1.bf16.msra.mxu0 %v1027
  %2023 = vmatprep.subr.bf16.mxu0 %v1024
  %2024 = vmatpush1.bf16.msra.mxu0 %v1023
  %2025 = vmatprep.subr.bf16.mxu0 %v1020
  %2026 = vmatpush1.bf16.msra.mxu0 %v1019
  %2027 = vmatprep.subr.bf16.mxu0 0
  %2028 = vmatpush2.bf16.msra.mxu0 0
  %2029 = vmatprep.subr.bf16.mxu0 0
  %2030 = vmatpush2.bf16.msra.mxu0 0
  %2031 = vmatprep.subr.bf16.mxu0 0
  %2032 = vmatpush2.bf16.msra.mxu0 0
  %2033 = vmatprep.subr.bf16.mxu0 0
  %2034 = vmatpush2.bf16.msra.mxu0 0
  %2035 = vmatprep.subr.bf16.mxu0 0
  %2036 = vmatpush2.bf16.msra.mxu0 0
  %2037 = vmatprep.subr.bf16.mxu0 0
  %2038 = vmatpush2.bf16.msra.mxu0 0
  %2039 = vmatprep.subr.bf16.mxu0 0
  %2040 = vmatpush2.bf16.msra.mxu0 0
  %2041 = vmatprep.subr.bf16.mxu0 0
  %2042 = vmatpush2.bf16.msra.mxu0 0
  %2043 = vmatprep.mubr.bf16.mxu0 0
  %2044 = vmatmul.mubr.bf16.gmra.mxu0 %v2010
  %v2045 = vpop.f32.mrf.mxu0
  %v2046 = vadd.f32 0.0, %v2045
  %v2047 = vpop.f32.mrf.mxu0
  %v2048 = vadd.f32 0.0, %v2047
  %v2049 = vpop.f32.mrf.mxu0
  %v2050 = vpop.f32.mrf.mxu0
  %2051 = vdwg.mxu0
  %2052 = vmatprep.subr.bf16.mxu0 %v1050
  %2053 = vmatpush1.bf16.msra.mxu0 %v1049
  %2054 = vmatprep.subr.bf16.mxu0 %v1046
  %2055 = vmatpush1.bf16.msra.mxu0 %v1045
  %2056 = vmatprep.subr.bf16.mxu0 %v1042
  %2057 = vmatpush1.bf16.msra.mxu0 %v1041
  %2058 = vmatprep.subr.bf16.mxu0 %v1038
  %2059 = vmatpush1.bf16.msra.mxu0 %v1037
  %2060 = vmatprep.subr.bf16.mxu0 %v1034
  %2061 = vmatpush1.bf16.msra.mxu0 %v1033
  %2062 = vmatprep.subr.bf16.mxu0 %v1030
  %2063 = vmatpush1.bf16.msra.mxu0 %v1029
  %2064 = vmatprep.subr.bf16.mxu0 %v1026
  %2065 = vmatpush1.bf16.msra.mxu0 %v1025
  %2066 = vmatprep.subr.bf16.mxu0 %v1022
  %2067 = vmatpush1.bf16.msra.mxu0 %v1021
  %2068 = vmatprep.subr.bf16.mxu0 0
  %2069 = vmatpush2.bf16.msra.mxu0 0
  %2070 = vmatprep.subr.bf16.mxu0 0
  %2071 = vmatpush2.bf16.msra.mxu0 0
  %2072 = vmatprep.subr.bf16.mxu0 0
  %2073 = vmatpush2.bf16.msra.mxu0 0
  %2074 = vmatprep.subr.bf16.mxu0 0
  %2075 = vmatpush2.bf16.msra.mxu0 0
  %2076 = vmatprep.subr.bf16.mxu0 0
  %2077 = vmatpush2.bf16.msra.mxu0 0
  %2078 = vmatprep.subr.bf16.mxu0 0
  %2079 = vmatpush2.bf16.msra.mxu0 0
  %2080 = vmatprep.subr.bf16.mxu0 0
  %2081 = vmatpush2.bf16.msra.mxu0 0
  %2082 = vmatprep.subr.bf16.mxu0 0
  %2083 = vmatpush2.bf16.msra.mxu0 0
  %2084 = vmatprep.mubr.bf16.mxu0 0
  %2085 = vmatmul.mubr.bf16.gmra.mxu0 %v2010
  %v2086 = vpop.f32.mrf.mxu0
  %v2087 = vadd.f32 0.0, %v2086
  %v2088 = vpop.f32.mrf.mxu0
  %v2089 = vadd.f32 0.0, %v2088
  %v2090 = vpop.f32.mrf.mxu0
  %v2091 = vpop.f32.mrf.mxu0
  %2092 = vdwg.mxu0
  %v2093 = vadd.f32 %v2006, %v2046
  %v2094 = vadd.f32 %v2007, %v2048
  %v2095 = vadd.f32 %v2008, %v2087
  %v2096 = vadd.f32 %v2009, %v2089
  %v2097 = vxor.u32 %v2093, 2147483648
  %v2098 = vmul.f32 %v2097, 1.442695
  %v2099 = vpow.pop %v2098
  %v2100 = vadd.f32 %v2099, 1.0
  %v2101 = vrcp.pop %v2100
  %v2102 = vmul.f32 1.0, %v2101
  %v2103 = vxor.u32 %v2094, 2147483648
  %v2104 = vmul.f32 %v2103, 1.442695
  %v2105 = vpow.pop %v2104
  %v2106 = vadd.f32 %v2105, 1.0
  %v2107 = vrcp.pop %v2106
  %v2108 = vmul.f32 1.0, %v2107
  %v2109 = vtanh.pop %v2095
  %v2110 = vxor.u32 %v2096, 2147483648
  %v2111 = vmul.f32 %v2110, 1.442695
  %v2112 = vpow.pop %v2111
  %v2113 = vadd.f32 %v2112, 1.0
  %v2114 = vrcp.pop %v2113
  %v2115 = vmul.f32 1.0, %v2114
  %v2116 = vmul.f32 %v2108, %v1886
  %v2117 = vmul.f32 %v2102, %v2109
  %v2118 = vadd.f32 %v2116, %v2117
  %v2119 = vtanh.pop %v2118
  %v2120 = vmul.f32 %v2115, %v2119
  %2121 = vst [vmem:[%s8 + $0x20] sm:$0xff] %v2005
  %2122 = vst [vmem:[%s64 + $0x18] sm:$0xff] %v2120
  %v2123 = vld [vmem:[#allocation2 + $0xa0] sm:$0xff]
  %v2124 = vld [vmem:[#allocation2 + $0xa8] sm:$0xff]
  %v2125 = vld [vmem:[#allocation2 + $0xb0] sm:$0xff]
  %v2126 = vld [vmem:[#allocation2 + $0xb8] sm:$0xff]
  %v2127 = vpack.c.bf16 %v2005, %v2005
  %2128 = vmatprep.subr.bf16.mxu0 %v773
  %2129 = vmatpush1.bf16.msra.mxu0 %v772
  %2130 = vmatprep.subr.bf16.mxu0 %v769
  %2131 = vmatpush1.bf16.msra.mxu0 %v768
  %2132 = vmatprep.subr.bf16.mxu0 %v765
  %2133 = vmatpush1.bf16.msra.mxu0 %v764
  %2134 = vmatprep.subr.bf16.mxu0 %v761
  %2135 = vmatpush1.bf16.msra.mxu0 %v760
  %2136 = vmatprep.subr.bf16.mxu0 %v757
  %2137 = vmatpush1.bf16.msra.mxu0 %v756
  %2138 = vmatprep.subr.bf16.mxu0 %v753
  %2139 = vmatpush1.bf16.msra.mxu0 %v752
  %2140 = vmatprep.subr.bf16.mxu0 %v749
  %2141 = vmatpush1.bf16.msra.mxu0 %v748
  %2142 = vmatprep.subr.bf16.mxu0 %v745
  %2143 = vmatpush1.bf16.msra.mxu0 %v744
  %2144 = vmatprep.subr.bf16.mxu0 0
  %2145 = vmatpush2.bf16.msra.mxu0 0
  %2146 = vmatprep.subr.bf16.mxu0 0
  %2147 = vmatpush2.bf16.msra.mxu0 0
  %2148 = vmatprep.subr.bf16.mxu0 0
  %2149 = vmatpush2.bf16.msra.mxu0 0
  %2150 = vmatprep.subr.bf16.mxu0 0
  %2151 = vmatpush2.bf16.msra.mxu0 0
  %2152 = vmatprep.subr.bf16.mxu0 0
  %2153 = vmatpush2.bf16.msra.mxu0 0
  %2154 = vmatprep.subr.bf16.mxu0 0
  %2155 = vmatpush2.bf16.msra.mxu0 0
  %2156 = vmatprep.subr.bf16.mxu0 0
  %2157 = vmatpush2.bf16.msra.mxu0 0
  %2158 = vmatprep.subr.bf16.mxu0 0
  %2159 = vmatpush2.bf16.msra.mxu0 0
  %2160 = vmatprep.mubr.bf16.mxu0 0
  %2161 = vmatmul.mubr.bf16.gmra.mxu0 %v2127
  %v2162 = vpop.f32.mrf.mxu0
  %v2163 = vadd.f32 0.0, %v2162
  %v2164 = vpop.f32.mrf.mxu0
  %v2165 = vadd.f32 0.0, %v2164
  %v2166 = vpop.f32.mrf.mxu0
  %v2167 = vpop.f32.mrf.mxu0
  %2168 = vdwg.mxu0
  %2169 = vmatprep.subr.bf16.mxu0 %v775
  %2170 = vmatpush1.bf16.msra.mxu0 %v774
  %2171 = vmatprep.subr.bf16.mxu0 %v771
  %2172 = vmatpush1.bf16.msra.mxu0 %v770
  %2173 = vmatprep.subr.bf16.mxu0 %v767
  %2174 = vmatpush1.bf16.msra.mxu0 %v766
  %2175 = vmatprep.subr.bf16.mxu0 %v763
  %2176 = vmatpush1.bf16.msra.mxu0 %v762
  %2177 = vmatprep.subr.bf16.mxu0 %v759
  %2178 = vmatpush1.bf16.msra.mxu0 %v758
  %2179 = vmatprep.subr.bf16.mxu0 %v755
  %2180 = vmatpush1.bf16.msra.mxu0 %v754
  %2181 = vmatprep.subr.bf16.mxu0 %v751
  %2182 = vmatpush1.bf16.msra.mxu0 %v750
  %2183 = vmatprep.subr.bf16.mxu0 %v747
  %2184 = vmatpush1.bf16.msra.mxu0 %v746
  %2185 = vmatprep.subr.bf16.mxu0 0
  %2186 = vmatpush2.bf16.msra.mxu0 0
  %2187 = vmatprep.subr.bf16.mxu0 0
  %2188 = vmatpush2.bf16.msra.mxu0 0
  %2189 = vmatprep.subr.bf16.mxu0 0
  %2190 = vmatpush2.bf16.msra.mxu0 0
  %2191 = vmatprep.subr.bf16.mxu0 0
  %2192 = vmatpush2.bf16.msra.mxu0 0
  %2193 = vmatprep.subr.bf16.mxu0 0
  %2194 = vmatpush2.bf16.msra.mxu0 0
  %2195 = vmatprep.subr.bf16.mxu0 0
  %2196 = vmatpush2.bf16.msra.mxu0 0
  %2197 = vmatprep.subr.bf16.mxu0 0
  %2198 = vmatpush2.bf16.msra.mxu0 0
  %2199 = vmatprep.subr.bf16.mxu0 0
  %2200 = vmatpush2.bf16.msra.mxu0 0
  %2201 = vmatprep.mubr.bf16.mxu0 0
  %2202 = vmatmul.mubr.bf16.gmra.mxu0 %v2127
  %v2203 = vpop.f32.mrf.mxu0
  %v2204 = vadd.f32 0.0, %v2203
  %v2205 = vpop.f32.mrf.mxu0
  %v2206 = vadd.f32 0.0, %v2205
  %v2207 = vpop.f32.mrf.mxu0
  %v2208 = vpop.f32.mrf.mxu0
  %2209 = vdwg.mxu0
  %v2210 = vadd.f32 %v2123, %v2163
  %v2211 = vadd.f32 %v2124, %v2165
  %v2212 = vadd.f32 %v2125, %v2204
  %v2213 = vadd.f32 %v2126, %v2206
  %v2214 = vxor.u32 %v2210, 2147483648
  %v2215 = vmul.f32 %v2214, 1.442695
  %v2216 = vpow.pop %v2215
  %v2217 = vadd.f32 %v2216, 1.0
  %v2218 = vrcp.pop %v2217
  %v2219 = vmul.f32 1.0, %v2218
  %v2220 = vxor.u32 %v2211, 2147483648
  %v2221 = vmul.f32 %v2220, 1.442695
  %v2222 = vpow.pop %v2221
  %v2223 = vadd.f32 %v2222, 1.0
  %v2224 = vrcp.pop %v2223
  %v2225 = vmul.f32 1.0, %v2224
  %v2226 = vtanh.pop %v2212
  %v2227 = vxor.u32 %v2213, 2147483648
  %v2228 = vmul.f32 %v2227, 1.442695
  %v2229 = vpow.pop %v2228
  %v2230 = vadd.f32 %v2229, 1.0
  %v2231 = vrcp.pop %v2230
  %v2232 = vmul.f32 1.0, %v2231
  %v2233 = vmul.f32 %v2225, %v2003
  %v2234 = vmul.f32 %v2219, %v2226
  %v2235 = vadd.f32 %v2233, %v2234
  %v2236 = vtanh.pop %v2235
  %v2237 = vmul.f32 %v2232, %v2236
  %v2238 = vld [vmem:[#allocation3 + $0x40] sm:$0xff]
  %v2239 = vld [vmem:[#allocation3 + $0x48] sm:$0xff]
  %v2240 = vld [vmem:[#allocation3 + $0x50] sm:$0xff]
  %v2241 = vld [vmem:[#allocation3 + $0x58] sm:$0xff]
  %v2242 = vpack.c.bf16 %v2120, %v2120
  %2243 = vmatprep.subr.bf16.mxu0 %v1048
  %2244 = vmatpush1.bf16.msra.mxu0 %v1047
  %2245 = vmatprep.subr.bf16.mxu0 %v1044
  %2246 = vmatpush1.bf16.msra.mxu0 %v1043
  %2247 = vmatprep.subr.bf16.mxu0 %v1040
  %2248 = vmatpush1.bf16.msra.mxu0 %v1039
  %2249 = vmatprep.subr.bf16.mxu0 %v1036
  %2250 = vmatpush1.bf16.msra.mxu0 %v1035
  %2251 = vmatprep.subr.bf16.mxu0 %v1032
  %2252 = vmatpush1.bf16.msra.mxu0 %v1031
  %2253 = vmatprep.subr.bf16.mxu0 %v1028
  %2254 = vmatpush1.bf16.msra.mxu0 %v1027
  %2255 = vmatprep.subr.bf16.mxu0 %v1024
  %2256 = vmatpush1.bf16.msra.mxu0 %v1023
  %2257 = vmatprep.subr.bf16.mxu0 %v1020
  %2258 = vmatpush1.bf16.msra.mxu0 %v1019
  %2259 = vmatprep.subr.bf16.mxu0 0
  %2260 = vmatpush2.bf16.msra.mxu0 0
  %2261 = vmatprep.subr.bf16.mxu0 0
  %2262 = vmatpush2.bf16.msra.mxu0 0
  %2263 = vmatprep.subr.bf16.mxu0 0
  %2264 = vmatpush2.bf16.msra.mxu0 0
  %2265 = vmatprep.subr.bf16.mxu0 0
  %2266 = vmatpush2.bf16.msra.mxu0 0
  %2267 = vmatprep.subr.bf16.mxu0 0
  %2268 = vmatpush2.bf16.msra.mxu0 0
  %2269 = vmatprep.subr.bf16.mxu0 0
  %2270 = vmatpush2.bf16.msra.mxu0 0
  %2271 = vmatprep.subr.bf16.mxu0 0
  %2272 = vmatpush2.bf16.msra.mxu0 0
  %2273 = vmatprep.subr.bf16.mxu0 0
  %2274 = vmatpush2.bf16.msra.mxu0 0
  %2275 = vmatprep.mubr.bf16.mxu0 0
  %2276 = vmatmul.mubr.bf16.gmra.mxu0 %v2242
  %v2277 = vpop.f32.mrf.mxu0
  %v2278 = vadd.f32 0.0, %v2277
  %v2279 = vpop.f32.mrf.mxu0
  %v2280 = vadd.f32 0.0, %v2279
  %v2281 = vpop.f32.mrf.mxu0
  %v2282 = vpop.f32.mrf.mxu0
  %2283 = vdwg.mxu0
  %2284 = vmatprep.subr.bf16.mxu0 %v1050
  %2285 = vmatpush1.bf16.msra.mxu0 %v1049
  %2286 = vmatprep.subr.bf16.mxu0 %v1046
  %2287 = vmatpush1.bf16.msra.mxu0 %v1045
  %2288 = vmatprep.subr.bf16.mxu0 %v1042
  %2289 = vmatpush1.bf16.msra.mxu0 %v1041
  %2290 = vmatprep.subr.bf16.mxu0 %v1038
  %2291 = vmatpush1.bf16.msra.mxu0 %v1037
  %2292 = vmatprep.subr.bf16.mxu0 %v1034
  %2293 = vmatpush1.bf16.msra.mxu0 %v1033
  %2294 = vmatprep.subr.bf16.mxu0 %v1030
  %2295 = vmatpush1.bf16.msra.mxu0 %v1029
  %2296 = vmatprep.subr.bf16.mxu0 %v1026
  %2297 = vmatpush1.bf16.msra.mxu0 %v1025
  %2298 = vmatprep.subr.bf16.mxu0 %v1022
  %2299 = vmatpush1.bf16.msra.mxu0 %v1021
  %2300 = vmatprep.subr.bf16.mxu0 0
  %2301 = vmatpush2.bf16.msra.mxu0 0
  %2302 = vmatprep.subr.bf16.mxu0 0
  %2303 = vmatpush2.bf16.msra.mxu0 0
  %2304 = vmatprep.subr.bf16.mxu0 0
  %2305 = vmatpush2.bf16.msra.mxu0 0
  %2306 = vmatprep.subr.bf16.mxu0 0
  %2307 = vmatpush2.bf16.msra.mxu0 0
  %2308 = vmatprep.subr.bf16.mxu0 0
  %2309 = vmatpush2.bf16.msra.mxu0 0
  %2310 = vmatprep.subr.bf16.mxu0 0
  %2311 = vmatpush2.bf16.msra.mxu0 0
  %2312 = vmatprep.subr.bf16.mxu0 0
  %2313 = vmatpush2.bf16.msra.mxu0 0
  %2314 = vmatprep.subr.bf16.mxu0 0
  %2315 = vmatpush2.bf16.msra.mxu0 0
  %2316 = vmatprep.mubr.bf16.mxu0 0
  %2317 = vmatmul.mubr.bf16.gmra.mxu0 %v2242
  %v2318 = vpop.f32.mrf.mxu0
  %v2319 = vadd.f32 0.0, %v2318
  %v2320 = vpop.f32.mrf.mxu0
  %v2321 = vadd.f32 0.0, %v2320
  %v2322 = vpop.f32.mrf.mxu0
  %v2323 = vpop.f32.mrf.mxu0
  %2324 = vdwg.mxu0
  %v2325 = vadd.f32 %v2238, %v2278
  %v2326 = vadd.f32 %v2239, %v2280
  %v2327 = vadd.f32 %v2240, %v2319
  %v2328 = vadd.f32 %v2241, %v2321
  %v2329 = vxor.u32 %v2325, 2147483648
  %v2330 = vmul.f32 %v2329, 1.442695
  %v2331 = vpow.pop %v2330
  %v2332 = vadd.f32 %v2331, 1.0
  %v2333 = vrcp.pop %v2332
  %v2334 = vmul.f32 1.0, %v2333
  %v2335 = vxor.u32 %v2326, 2147483648
  %v2336 = vmul.f32 %v2335, 1.442695
  %v2337 = vpow.pop %v2336
  %v2338 = vadd.f32 %v2337, 1.0
  %v2339 = vrcp.pop %v2338
  %v2340 = vmul.f32 1.0, %v2339
  %v2341 = vtanh.pop %v2327
  %v2342 = vxor.u32 %v2328, 2147483648
  %v2343 = vmul.f32 %v2342, 1.442695
  %v2344 = vpow.pop %v2343
  %v2345 = vadd.f32 %v2344, 1.0
  %v2346 = vrcp.pop %v2345
  %v2347 = vmul.f32 1.0, %v2346
  %v2348 = vmul.f32 %v2340, %v2118
  %v2349 = vmul.f32 %v2334, %v2341
  %v2350 = vadd.f32 %v2348, %v2349
  %v2351 = vtanh.pop %v2350
  %v2352 = vmul.f32 %v2347, %v2351
  %2353 = vst [vmem:[%s8 + $0x28] sm:$0xff] %v2237
  %2354 = vst [vmem:[%s64 + $0x10] sm:$0xff] %v2352
  %v2355 = vld [vmem:[#allocation2 + $0xc0] sm:$0xff]
  %v2356 = vld [vmem:[#allocation2 + $0xc8] sm:$0xff]
  %v2357 = vld [vmem:[#allocation2 + $0xd0] sm:$0xff]
  %v2358 = vld [vmem:[#allocation2 + $0xd8] sm:$0xff]
  %v2359 = vpack.c.bf16 %v2237, %v2237
  %2360 = vmatprep.subr.bf16.mxu0 %v773
  %2361 = vmatpush1.bf16.msra.mxu0 %v772
  %2362 = vmatprep.subr.bf16.mxu0 %v769
  %2363 = vmatpush1.bf16.msra.mxu0 %v768
  %2364 = vmatprep.subr.bf16.mxu0 %v765
  %2365 = vmatpush1.bf16.msra.mxu0 %v764
  %2366 = vmatprep.subr.bf16.mxu0 %v761
  %2367 = vmatpush1.bf16.msra.mxu0 %v760
  %2368 = vmatprep.subr.bf16.mxu0 %v757
  %2369 = vmatpush1.bf16.msra.mxu0 %v756
  %2370 = vmatprep.subr.bf16.mxu0 %v753
  %2371 = vmatpush1.bf16.msra.mxu0 %v752
  %2372 = vmatprep.subr.bf16.mxu0 %v749
  %2373 = vmatpush1.bf16.msra.mxu0 %v748
  %2374 = vmatprep.subr.bf16.mxu0 %v745
  %2375 = vmatpush1.bf16.msra.mxu0 %v744
  %2376 = vmatprep.subr.bf16.mxu0 0
  %2377 = vmatpush2.bf16.msra.mxu0 0
  %2378 = vmatprep.subr.bf16.mxu0 0
  %2379 = vmatpush2.bf16.msra.mxu0 0
  %2380 = vmatprep.subr.bf16.mxu0 0
  %2381 = vmatpush2.bf16.msra.mxu0 0
  %2382 = vmatprep.subr.bf16.mxu0 0
  %2383 = vmatpush2.bf16.msra.mxu0 0
  %2384 = vmatprep.subr.bf16.mxu0 0
  %2385 = vmatpush2.bf16.msra.mxu0 0
  %2386 = vmatprep.subr.bf16.mxu0 0
  %2387 = vmatpush2.bf16.msra.mxu0 0
  %2388 = vmatprep.subr.bf16.mxu0 0
  %2389 = vmatpush2.bf16.msra.mxu0 0
  %2390 = vmatprep.subr.bf16.mxu0 0
  %2391 = vmatpush2.bf16.msra.mxu0 0
  %2392 = vmatprep.mubr.bf16.mxu0 0
  %2393 = vmatmul.mubr.bf16.gmra.mxu0 %v2359
  %v2394 = vpop.f32.mrf.mxu0
  %v2395 = vadd.f32 0.0, %v2394
  %v2396 = vpop.f32.mrf.mxu0
  %v2397 = vadd.f32 0.0, %v2396
  %v2398 = vpop.f32.mrf.mxu0
  %v2399 = vpop.f32.mrf.mxu0
  %2400 = vdwg.mxu0
  %2401 = vmatprep.subr.bf16.mxu0 %v775
  %2402 = vmatpush1.bf16.msra.mxu0 %v774
  %2403 = vmatprep.subr.bf16.mxu0 %v771
  %2404 = vmatpush1.bf16.msra.mxu0 %v770
  %2405 = vmatprep.subr.bf16.mxu0 %v767
  %2406 = vmatpush1.bf16.msra.mxu0 %v766
  %2407 = vmatprep.subr.bf16.mxu0 %v763
  %2408 = vmatpush1.bf16.msra.mxu0 %v762
  %2409 = vmatprep.subr.bf16.mxu0 %v759
  %2410 = vmatpush1.bf16.msra.mxu0 %v758
  %2411 = vmatprep.subr.bf16.mxu0 %v755
  %2412 = vmatpush1.bf16.msra.mxu0 %v754
  %2413 = vmatprep.subr.bf16.mxu0 %v751
  %2414 = vmatpush1.bf16.msra.mxu0 %v750
  %2415 = vmatprep.subr.bf16.mxu0 %v747
  %2416 = vmatpush1.bf16.msra.mxu0 %v746
  %2417 = vmatprep.subr.bf16.mxu0 0
  %2418 = vmatpush2.bf16.msra.mxu0 0
  %2419 = vmatprep.subr.bf16.mxu0 0
  %2420 = vmatpush2.bf16.msra.mxu0 0
  %2421 = vmatprep.subr.bf16.mxu0 0
  %2422 = vmatpush2.bf16.msra.mxu0 0
  %2423 = vmatprep.subr.bf16.mxu0 0
  %2424 = vmatpush2.bf16.msra.mxu0 0
  %2425 = vmatprep.subr.bf16.mxu0 0
  %2426 = vmatpush2.bf16.msra.mxu0 0
  %2427 = vmatprep.subr.bf16.mxu0 0
  %2428 = vmatpush2.bf16.msra.mxu0 0
  %2429 = vmatprep.subr.bf16.mxu0 0
  %2430 = vmatpush2.bf16.msra.mxu0 0
  %2431 = vmatprep.subr.bf16.mxu0 0
  %2432 = vmatpush2.bf16.msra.mxu0 0
  %2433 = vmatprep.mubr.bf16.mxu0 0
  %2434 = vmatmul.mubr.bf16.gmra.mxu0 %v2359
  %v2435 = vpop.f32.mrf.mxu0
  %v2436 = vadd.f32 0.0, %v2435
  %v2437 = vpop.f32.mrf.mxu0
  %v2438 = vadd.f32 0.0, %v2437
  %v2439 = vpop.f32.mrf.mxu0
  %v2440 = vpop.f32.mrf.mxu0
  %2441 = vdwg.mxu0
  %v2442 = vadd.f32 %v2355, %v2395
  %v2443 = vadd.f32 %v2356, %v2397
  %v2444 = vadd.f32 %v2357, %v2436
  %v2445 = vadd.f32 %v2358, %v2438
  %v2446 = vxor.u32 %v2442, 2147483648
  %v2447 = vmul.f32 %v2446, 1.442695
  %v2448 = vpow.pop %v2447
  %v2449 = vadd.f32 %v2448, 1.0
  %v2450 = vrcp.pop %v2449
  %v2451 = vmul.f32 1.0, %v2450
  %v2452 = vxor.u32 %v2443, 2147483648
  %v2453 = vmul.f32 %v2452, 1.442695
  %v2454 = vpow.pop %v2453
  %v2455 = vadd.f32 %v2454, 1.0
  %v2456 = vrcp.pop %v2455
  %v2457 = vmul.f32 1.0, %v2456
  %v2458 = vtanh.pop %v2444
  %v2459 = vxor.u32 %v2445, 2147483648
  %v2460 = vmul.f32 %v2459, 1.442695
  %v2461 = vpow.pop %v2460
  %v2462 = vadd.f32 %v2461, 1.0
  %v2463 = vrcp.pop %v2462
  %v2464 = vmul.f32 1.0, %v2463
  %v2465 = vmul.f32 %v2457, %v2235
  %v2466 = vmul.f32 %v2451, %v2458
  %v2467 = vadd.f32 %v2465, %v2466
  %v2468 = vtanh.pop %v2467
  %v2469 = vmul.f32 %v2464, %v2468
  %v2470 = vld [vmem:[#allocation3 + $0x20] sm:$0xff]
  %v2471 = vld [vmem:[#allocation3 + $0x28] sm:$0xff]
  %v2472 = vld [vmem:[#allocation3 + $0x30] sm:$0xff]
  %v2473 = vld [vmem:[#allocation3 + $0x38] sm:$0xff]
  %v2474 = vpack.c.bf16 %v2352, %v2352
  %2475 = vmatprep.subr.bf16.mxu0 %v1048
  %2476 = vmatpush1.bf16.msra.mxu0 %v1047
  %2477 = vmatprep.subr.bf16.mxu0 %v1044
  %2478 = vmatpush1.bf16.msra.mxu0 %v1043
  %2479 = vmatprep.subr.bf16.mxu0 %v1040
  %2480 = vmatpush1.bf16.msra.mxu0 %v1039
  %2481 = vmatprep.subr.bf16.mxu0 %v1036
  %2482 = vmatpush1.bf16.msra.mxu0 %v1035
  %2483 = vmatprep.subr.bf16.mxu0 %v1032
  %2484 = vmatpush1.bf16.msra.mxu0 %v1031
  %2485 = vmatprep.subr.bf16.mxu0 %v1028
  %2486 = vmatpush1.bf16.msra.mxu0 %v1027
  %2487 = vmatprep.subr.bf16.mxu0 %v1024
  %2488 = vmatpush1.bf16.msra.mxu0 %v1023
  %2489 = vmatprep.subr.bf16.mxu0 %v1020
  %2490 = vmatpush1.bf16.msra.mxu0 %v1019
  %2491 = vmatprep.subr.bf16.mxu0 0
  %2492 = vmatpush2.bf16.msra.mxu0 0
  %2493 = vmatprep.subr.bf16.mxu0 0
  %2494 = vmatpush2.bf16.msra.mxu0 0
  %2495 = vmatprep.subr.bf16.mxu0 0
  %2496 = vmatpush2.bf16.msra.mxu0 0
  %2497 = vmatprep.subr.bf16.mxu0 0
  %2498 = vmatpush2.bf16.msra.mxu0 0
  %2499 = vmatprep.subr.bf16.mxu0 0
  %2500 = vmatpush2.bf16.msra.mxu0 0
  %2501 = vmatprep.subr.bf16.mxu0 0
  %2502 = vmatpush2.bf16.msra.mxu0 0
  %2503 = vmatprep.subr.bf16.mxu0 0
  %2504 = vmatpush2.bf16.msra.mxu0 0
  %2505 = vmatprep.subr.bf16.mxu0 0
  %2506 = vmatpush2.bf16.msra.mxu0 0
  %2507 = vmatprep.mubr.bf16.mxu0 0
  %2508 = vmatmul.mubr.bf16.gmra.mxu0 %v2474
  %v2509 = vpop.f32.mrf.mxu0
  %v2510 = vadd.f32 0.0, %v2509
  %v2511 = vpop.f32.mrf.mxu0
  %v2512 = vadd.f32 0.0, %v2511
  %v2513 = vpop.f32.mrf.mxu0
  %v2514 = vpop.f32.mrf.mxu0
  %2515 = vdwg.mxu0
  %2516 = vmatprep.subr.bf16.mxu0 %v1050
  %2517 = vmatpush1.bf16.msra.mxu0 %v1049
  %2518 = vmatprep.subr.bf16.mxu0 %v1046
  %2519 = vmatpush1.bf16.msra.mxu0 %v1045
  %2520 = vmatprep.subr.bf16.mxu0 %v1042
  %2521 = vmatpush1.bf16.msra.mxu0 %v1041
  %2522 = vmatprep.subr.bf16.mxu0 %v1038
  %2523 = vmatpush1.bf16.msra.mxu0 %v1037
  %2524 = vmatprep.subr.bf16.mxu0 %v1034
  %2525 = vmatpush1.bf16.msra.mxu0 %v1033
  %2526 = vmatprep.subr.bf16.mxu0 %v1030
  %2527 = vmatpush1.bf16.msra.mxu0 %v1029
  %2528 = vmatprep.subr.bf16.mxu0 %v1026
  %2529 = vmatpush1.bf16.msra.mxu0 %v1025
  %2530 = vmatprep.subr.bf16.mxu0 %v1022
  %2531 = vmatpush1.bf16.msra.mxu0 %v1021
  %2532 = vmatprep.subr.bf16.mxu0 0
  %2533 = vmatpush2.bf16.msra.mxu0 0
  %2534 = vmatprep.subr.bf16.mxu0 0
  %2535 = vmatpush2.bf16.msra.mxu0 0
  %2536 = vmatprep.subr.bf16.mxu0 0
  %2537 = vmatpush2.bf16.msra.mxu0 0
  %2538 = vmatprep.subr.bf16.mxu0 0
  %2539 = vmatpush2.bf16.msra.mxu0 0
  %2540 = vmatprep.subr.bf16.mxu0 0
  %2541 = vmatpush2.bf16.msra.mxu0 0
  %2542 = vmatprep.subr.bf16.mxu0 0
  %2543 = vmatpush2.bf16.msra.mxu0 0
  %2544 = vmatprep.subr.bf16.mxu0 0
  %2545 = vmatpush2.bf16.msra.mxu0 0
  %2546 = vmatprep.subr.bf16.mxu0 0
  %2547 = vmatpush2.bf16.msra.mxu0 0
  %2548 = vmatprep.mubr.bf16.mxu0 0
  %2549 = vmatmul.mubr.bf16.gmra.mxu0 %v2474
  %v2550 = vpop.f32.mrf.mxu0
  %v2551 = vadd.f32 0.0, %v2550
  %v2552 = vpop.f32.mrf.mxu0
  %v2553 = vadd.f32 0.0, %v2552
  %v2554 = vpop.f32.mrf.mxu0
  %v2555 = vpop.f32.mrf.mxu0
  %2556 = vdwg.mxu0
  %v2557 = vadd.f32 %v2470, %v2510
  %v2558 = vadd.f32 %v2471, %v2512
  %v2559 = vadd.f32 %v2472, %v2551
  %v2560 = vadd.f32 %v2473, %v2553
  %v2561 = vxor.u32 %v2557, 2147483648
  %v2562 = vmul.f32 %v2561, 1.442695
  %v2563 = vpow.pop %v2562
  %v2564 = vadd.f32 %v2563, 1.0
  %v2565 = vrcp.pop %v2564
  %v2566 = vmul.f32 1.0, %v2565
  %v2567 = vxor.u32 %v2558, 2147483648
  %v2568 = vmul.f32 %v2567, 1.442695
  %v2569 = vpow.pop %v2568
  %v2570 = vadd.f32 %v2569, 1.0
  %v2571 = vrcp.pop %v2570
  %v2572 = vmul.f32 1.0, %v2571
  %v2573 = vtanh.pop %v2559
  %v2574 = vxor.u32 %v2560, 2147483648
  %v2575 = vmul.f32 %v2574, 1.442695
  %v2576 = vpow.pop %v2575
  %v2577 = vadd.f32 %v2576, 1.0
  %v2578 = vrcp.pop %v2577
  %v2579 = vmul.f32 1.0, %v2578
  %v2580 = vmul.f32 %v2572, %v2350
  %v2581 = vmul.f32 %v2566, %v2573
  %v2582 = vadd.f32 %v2580, %v2581
  %v2583 = vtanh.pop %v2582
  %v2584 = vmul.f32 %v2579, %v2583
  %2585 = vst [vmem:[%s8 + $0x30] sm:$0xff] %v2469
  %2586 = vst [vmem:[%s64 + $0x8] sm:$0xff] %v2584
  %v2587 = vld [vmem:[#allocation2 + $0xe0] sm:$0xff]
  %v2588 = vld [vmem:[#allocation2 + $0xe8] sm:$0xff]
  %v2589 = vld [vmem:[#allocation2 + $0xf0] sm:$0xff]
  %v2590 = vld [vmem:[#allocation2 + $0xf8] sm:$0xff]
  %v2591 = vpack.c.bf16 %v2469, %v2469
  %2592 = vmatprep.subr.bf16.mxu0 %v773
  %2593 = vmatpush1.bf16.msra.mxu0 %v772
  %2594 = vmatprep.subr.bf16.mxu0 %v769
  %2595 = vmatpush1.bf16.msra.mxu0 %v768
  %2596 = vmatprep.subr.bf16.mxu0 %v765
  %2597 = vmatpush1.bf16.msra.mxu0 %v764
  %2598 = vmatprep.subr.bf16.mxu0 %v761
  %2599 = vmatpush1.bf16.msra.mxu0 %v760
  %2600 = vmatprep.subr.bf16.mxu0 %v757
  %2601 = vmatpush1.bf16.msra.mxu0 %v756
  %2602 = vmatprep.subr.bf16.mxu0 %v753
  %2603 = vmatpush1.bf16.msra.mxu0 %v752
  %2604 = vmatprep.subr.bf16.mxu0 %v749
  %2605 = vmatpush1.bf16.msra.mxu0 %v748
  %2606 = vmatprep.subr.bf16.mxu0 %v745
  %2607 = vmatpush1.bf16.msra.mxu0 %v744
  %2608 = vmatprep.subr.bf16.mxu0 0
  %2609 = vmatpush2.bf16.msra.mxu0 0
  %2610 = vmatprep.subr.bf16.mxu0 0
  %2611 = vmatpush2.bf16.msra.mxu0 0
  %2612 = vmatprep.subr.bf16.mxu0 0
  %2613 = vmatpush2.bf16.msra.mxu0 0
  %2614 = vmatprep.subr.bf16.mxu0 0
  %2615 = vmatpush2.bf16.msra.mxu0 0
  %2616 = vmatprep.subr.bf16.mxu0 0
  %2617 = vmatpush2.bf16.msra.mxu0 0
  %2618 = vmatprep.subr.bf16.mxu0 0
  %2619 = vmatpush2.bf16.msra.mxu0 0
  %2620 = vmatprep.subr.bf16.mxu0 0
  %2621 = vmatpush2.bf16.msra.mxu0 0
  %2622 = vmatprep.subr.bf16.mxu0 0
  %2623 = vmatpush2.bf16.msra.mxu0 0
  %2624 = vmatprep.mubr.bf16.mxu0 0
  %2625 = vmatmul.mubr.bf16.gmra.mxu0 %v2591
  %v2626 = vpop.f32.mrf.mxu0
  %v2627 = vadd.f32 0.0, %v2626
  %v2628 = vpop.f32.mrf.mxu0
  %v2629 = vadd.f32 0.0, %v2628
  %v2630 = vpop.f32.mrf.mxu0
  %v2631 = vpop.f32.mrf.mxu0
  %2632 = vdwg.mxu0
  %2633 = vmatprep.subr.bf16.mxu0 %v775
  %2634 = vmatpush1.bf16.msra.mxu0 %v774
  %2635 = vmatprep.subr.bf16.mxu0 %v771
  %2636 = vmatpush1.bf16.msra.mxu0 %v770
  %2637 = vmatprep.subr.bf16.mxu0 %v767
  %2638 = vmatpush1.bf16.msra.mxu0 %v766
  %2639 = vmatprep.subr.bf16.mxu0 %v763
  %2640 = vmatpush1.bf16.msra.mxu0 %v762
  %2641 = vmatprep.subr.bf16.mxu0 %v759
  %2642 = vmatpush1.bf16.msra.mxu0 %v758
  %2643 = vmatprep.subr.bf16.mxu0 %v755
  %2644 = vmatpush1.bf16.msra.mxu0 %v754
  %2645 = vmatprep.subr.bf16.mxu0 %v751
  %2646 = vmatpush1.bf16.msra.mxu0 %v750
  %2647 = vmatprep.subr.bf16.mxu0 %v747
  %2648 = vmatpush1.bf16.msra.mxu0 %v746
  %2649 = vmatprep.subr.bf16.mxu0 0
  %2650 = vmatpush2.bf16.msra.mxu0 0
  %2651 = vmatprep.subr.bf16.mxu0 0
  %2652 = vmatpush2.bf16.msra.mxu0 0
  %2653 = vmatprep.subr.bf16.mxu0 0
  %2654 = vmatpush2.bf16.msra.mxu0 0
  %2655 = vmatprep.subr.bf16.mxu0 0
  %2656 = vmatpush2.bf16.msra.mxu0 0
  %2657 = vmatprep.subr.bf16.mxu0 0
  %2658 = vmatpush2.bf16.msra.mxu0 0
  %2659 = vmatprep.subr.bf16.mxu0 0
  %2660 = vmatpush2.bf16.msra.mxu0 0
  %2661 = vmatprep.subr.bf16.mxu0 0
  %2662 = vmatpush2.bf16.msra.mxu0 0
  %2663 = vmatprep.subr.bf16.mxu0 0
  %2664 = vmatpush2.bf16.msra.mxu0 0
  %2665 = vmatprep.mubr.bf16.mxu0 0
  %2666 = vmatmul.mubr.bf16.gmra.mxu0 %v2591
  %v2667 = vpop.f32.mrf.mxu0
  %v2668 = vadd.f32 0.0, %v2667
  %v2669 = vpop.f32.mrf.mxu0
  %v2670 = vadd.f32 0.0, %v2669
  %v2671 = vpop.f32.mrf.mxu0
  %v2672 = vpop.f32.mrf.mxu0
  %2673 = vdwg.mxu0
  %v2674 = vadd.f32 %v2587, %v2627
  %v2675 = vadd.f32 %v2588, %v2629
  %v2676 = vadd.f32 %v2589, %v2668
  %v2677 = vadd.f32 %v2590, %v2670
  %v2678 = vxor.u32 %v2674, 2147483648
  %v2679 = vmul.f32 %v2678, 1.442695
  %v2680 = vpow.pop %v2679
  %v2681 = vadd.f32 %v2680, 1.0
  %v2682 = vrcp.pop %v2681
  %v2683 = vmul.f32 1.0, %v2682
  %v2684 = vxor.u32 %v2675, 2147483648
  %v2685 = vmul.f32 %v2684, 1.442695
  %v2686 = vpow.pop %v2685
  %v2687 = vadd.f32 %v2686, 1.0
  %v2688 = vrcp.pop %v2687
  %v2689 = vmul.f32 1.0, %v2688
  %v2690 = vtanh.pop %v2676
  %v2691 = vxor.u32 %v2677, 2147483648
  %v2692 = vmul.f32 %v2691, 1.442695
  %v2693 = vpow.pop %v2692
  %v2694 = vadd.f32 %v2693, 1.0
  %v2695 = vrcp.pop %v2694
  %v2696 = vmul.f32 1.0, %v2695
  %v2697 = vmul.f32 %v2689, %v2467
  %v2698 = vmul.f32 %v2683, %v2690
  %v2699 = vadd.f32 %v2697, %v2698
  %v2700 = vtanh.pop %v2699
  %v2701 = vmul.f32 %v2696, %v2700
  %v2702 = vld [vmem:[#allocation3] sm:$0xff]
  %v2703 = vld [vmem:[#allocation3 + $0x8] sm:$0xff]
  %v2704 = vld [vmem:[#allocation3 + $0x10] sm:$0xff]
  %v2705 = vld [vmem:[#allocation3 + $0x18] sm:$0xff]
  %v2706 = vpack.c.bf16 %v2584, %v2584
  %2707 = vmatprep.subr.bf16.mxu0 %v1048
  %2708 = vmatpush1.bf16.msra.mxu0 %v1047
  %2709 = vmatprep.subr.bf16.mxu0 %v1044
  %2710 = vmatpush1.bf16.msra.mxu0 %v1043
  %2711 = vmatprep.subr.bf16.mxu0 %v1040
  %2712 = vmatpush1.bf16.msra.mxu0 %v1039
  %2713 = vmatprep.subr.bf16.mxu0 %v1036
  %2714 = vmatpush1.bf16.msra.mxu0 %v1035
  %2715 = vmatprep.subr.bf16.mxu0 %v1032
  %2716 = vmatpush1.bf16.msra.mxu0 %v1031
  %2717 = vmatprep.subr.bf16.mxu0 %v1028
  %2718 = vmatpush1.bf16.msra.mxu0 %v1027
  %2719 = vmatprep.subr.bf16.mxu0 %v1024
  %2720 = vmatpush1.bf16.msra.mxu0 %v1023
  %2721 = vmatprep.subr.bf16.mxu0 %v1020
  %2722 = vmatpush1.bf16.msra.mxu0 %v1019
  %2723 = vmatprep.subr.bf16.mxu0 0
  %2724 = vmatpush2.bf16.msra.mxu0 0
  %2725 = vmatprep.subr.bf16.mxu0 0
  %2726 = vmatpush2.bf16.msra.mxu0 0
  %2727 = vmatprep.subr.bf16.mxu0 0
  %2728 = vmatpush2.bf16.msra.mxu0 0
  %2729 = vmatprep.subr.bf16.mxu0 0
  %2730 = vmatpush2.bf16.msra.mxu0 0
  %2731 = vmatprep.subr.bf16.mxu0 0
  %2732 = vmatpush2.bf16.msra.mxu0 0
  %2733 = vmatprep.subr.bf16.mxu0 0
  %2734 = vmatpush2.bf16.msra.mxu0 0
  %2735 = vmatprep.subr.bf16.mxu0 0
  %2736 = vmatpush2.bf16.msra.mxu0 0
  %2737 = vmatprep.subr.bf16.mxu0 0
  %2738 = vmatpush2.bf16.msra.mxu0 0
  %2739 = vmatprep.mubr.bf16.mxu0 0
  %2740 = vmatmul.mubr.bf16.gmra.mxu0 %v2706
  %v2741 = vpop.f32.mrf.mxu0
  %v2742 = vadd.f32 0.0, %v2741
  %v2743 = vpop.f32.mrf.mxu0
  %v2744 = vadd.f32 0.0, %v2743
  %v2745 = vpop.f32.mrf.mxu0
  %v2746 = vpop.f32.mrf.mxu0
  %2747 = vdwg.mxu0
  %2748 = vmatprep.subr.bf16.mxu0 %v1050
  %2749 = vmatpush1.bf16.msra.mxu0 %v1049
  %2750 = vmatprep.subr.bf16.mxu0 %v1046
  %2751 = vmatpush1.bf16.msra.mxu0 %v1045
  %2752 = vmatprep.subr.bf16.mxu0 %v1042
  %2753 = vmatpush1.bf16.msra.mxu0 %v1041
  %2754 = vmatprep.subr.bf16.mxu0 %v1038
  %2755 = vmatpush1.bf16.msra.mxu0 %v1037
  %2756 = vmatprep.subr.bf16.mxu0 %v1034
  %2757 = vmatpush1.bf16.msra.mxu0 %v1033
  %2758 = vmatprep.subr.bf16.mxu0 %v1030
  %2759 = vmatpush1.bf16.msra.mxu0 %v1029
  %2760 = vmatprep.subr.bf16.mxu0 %v1026
  %2761 = vmatpush1.bf16.msra.mxu0 %v1025
  %2762 = vmatprep.subr.bf16.mxu0 %v1022
  %2763 = vmatpush1.bf16.msra.mxu0 %v1021
  %2764 = vmatprep.subr.bf16.mxu0 0
  %2765 = vmatpush2.bf16.msra.mxu0 0
  %2766 = vmatprep.subr.bf16.mxu0 0
  %2767 = vmatpush2.bf16.msra.mxu0 0
  %2768 = vmatprep.subr.bf16.mxu0 0
  %2769 = vmatpush2.bf16.msra.mxu0 0
  %2770 = vmatprep.subr.bf16.mxu0 0
  %2771 = vmatpush2.bf16.msra.mxu0 0
  %2772 = vmatprep.subr.bf16.mxu0 0
  %2773 = vmatpush2.bf16.msra.mxu0 0
  %2774 = vmatprep.subr.bf16.mxu0 0
  %2775 = vmatpush2.bf16.msra.mxu0 0
  %2776 = vmatprep.subr.bf16.mxu0 0
  %2777 = vmatpush2.bf16.msra.mxu0 0
  %2778 = vmatprep.subr.bf16.mxu0 0
  %2779 = vmatpush2.bf16.msra.mxu0 0
  %2780 = vmatprep.mubr.bf16.mxu0 0
  %2781 = vmatmul.mubr.bf16.gmra.mxu0 %v2706
  %v2782 = vpop.f32.mrf.mxu0
  %v2783 = vadd.f32 0.0, %v2782
  %v2784 = vpop.f32.mrf.mxu0
  %v2785 = vadd.f32 0.0, %v2784
  %v2786 = vpop.f32.mrf.mxu0
  %v2787 = vpop.f32.mrf.mxu0
  %2788 = vdwg.mxu0
  %v2789 = vadd.f32 %v2702, %v2742
  %v2790 = vadd.f32 %v2703, %v2744
  %v2791 = vadd.f32 %v2704, %v2783
  %v2792 = vadd.f32 %v2705, %v2785
  %v2793 = vxor.u32 %v2789, 2147483648
  %v2794 = vmul.f32 %v2793, 1.442695
  %v2795 = vpow.pop %v2794
  %v2796 = vadd.f32 %v2795, 1.0
  %v2797 = vrcp.pop %v2796
  %v2798 = vmul.f32 1.0, %v2797
  %v2799 = vxor.u32 %v2790, 2147483648
  %v2800 = vmul.f32 %v2799, 1.442695
  %v2801 = vpow.pop %v2800
  %v2802 = vadd.f32 %v2801, 1.0
  %v2803 = vrcp.pop %v2802
  %v2804 = vmul.f32 1.0, %v2803
  %v2805 = vtanh.pop %v2791
  %v2806 = vxor.u32 %v2792, 2147483648
  %v2807 = vmul.f32 %v2806, 1.442695
  %v2808 = vpow.pop %v2807
  %v2809 = vadd.f32 %v2808, 1.0
  %v2810 = vrcp.pop %v2809
  %v2811 = vmul.f32 1.0, %v2810
  %v2812 = vmul.f32 %v2804, %v2582
  %v2813 = vmul.f32 %v2798, %v2805
  %v2814 = vadd.f32 %v2812, %v2813
  %v2815 = vtanh.pop %v2814
  %v2816 = vmul.f32 %v2811, %v2815
  %2817 = vst [vmem:[%s8 + $0x38] sm:$0xff] %v2701
  %2818 = vst [vmem:[%s64] sm:$0xff] %v2816
  %2819 = vst [vmem:[#allocation4] sm:$0xff] %v2701
  %2820 = vst [vmem:[#allocation5] sm:$0xff] %v2699
  %2821 = vst [vmem:[%s639] sm:$0xff] %v2816
  %2822 = vst [vmem:[%s641] sm:$0xff] %v2814
  %s2823 = ssub.s32 0, 0
  %s2824 = smul.u32 8, %s2823
  %p2825 = scmp.lt.s32.totalorder %s2824, 7
  %s2826 = scalar_select %p2825, %s2824, 7
  %s2827 = smul.addr %s2826, 8
  %s2828 = scalar_lea.vmem %s9, %s2827
  // Predicated region
  $region38: #{bilstm_forward.1} parent=0 // pred_check
    _
  $region39: #{bilstm_forward.1} parent=0 // pred_check_branch
    %2830 = sbr.rel (0) target = $region41
  $region40: #{bilstm_forward.1} parent=0 // pred_region
    _
  $region41: #{bilstm_forward.1} parent=0 // pred_fallthru
    _
  // Predicated region
  $region42: #{bilstm_forward.1} parent=0 // pred_check
    _
  $region43: #{bilstm_forward.1} parent=0 // pred_check_branch
    %2832 = sbr.rel (0) target = $region45
  $region44: #{bilstm_forward.1} parent=0 // pred_region
    %s2833 = ssub.s32 0, 0
    %s2834 = smul.u32 8, %s2833
  $region45: #{bilstm_forward.1} parent=0 // pred_fallthru
    _
  // Predicated region
  $region46: #{bilstm_forward.1} parent=0 // pred_check
    _
  $region47: #{bilstm_forward.1} parent=0 // pred_check_branch
    %2836 = sbr.rel (0) target = $region49
  $region48: #{bilstm_forward.1} parent=0 // pred_region
    _
  $region49: #{bilstm_forward.1} parent=0 // pred_fallthru
    _
  // Predicated region
  $region50: #{bilstm_forward.1} parent=0 // pred_check
    _
  $region51: #{bilstm_forward.1} parent=0 // pred_check_branch
    %2838 = sbr.rel (0) target = $region53
  $region52: #{bilstm_forward.1} parent=0 // pred_region
    %s2839 = ssub.s32 0, 0
    %s2840 = smul.u32 8, %s2839
    %p2841 = scmp.lt.s32.totalorder %s2840, 7
    %s2842 = scalar_select %p2841, %s2840, 7
    %s2843 = smul.addr %s2842, 8
    %s2844 = scalar_lea.vmem %s9, %s2843
  $region53: #{bilstm_forward.1} parent=0 // pred_fallthru
    _

</llo_original>
